<compile_context>
chip_gen: v5e
topology: v5e:2x2
jax: 0.10.0
libtpu: 0.0.40
codegen_flags: <defaults>
</compile_context>

<pallas_src>
import jax
import jax.numpy as jnp
from jax.experimental import pallas as pl
from jax.experimental.pallas import tpu as pltpu

# ----------------------------------------------------------------------------
# Static network dimensions (input is (N, 4, 16, 16) NCHW, like the PyTorch module)
# ----------------------------------------------------------------------------
CIN, H0, W0 = 4, 16, 16
C1, K1, P1 = 10, 5, 2            # conv1: 10 out-channels, 5x5, pad 2
C2, K2 = 20, 2                   # conv2: 20 out-channels, 2x2, no pad
HID, NCLS = 50, 10               # fc1 / out

HP, WP = H0 + 2 * P1, W0 + 2 * P1        # 20, 20   conv1 input (pre-padded)
H1, W1 = HP - K1 + 1, WP - K1 + 1        # 16, 16   conv1 output
HA, WA = H1 + 1, W1 + 1                  # 17, 17   pool(k2,p1,s1) output
H2, W2 = HA - K2 + 1, WA - K2 + 1        # 16, 16   conv2 output
HB, WB = H2 + 1, W2 + 1                  # 17, 17   pool(k2,p1,s1) output
HF, WF = HB // 2, WB // 2                # 8, 8     pool(k2,s2) output

MXU_DTYPE = jnp.bfloat16                 # matmul operand dtype (f32 accumulate)


# ----------------------------------------------------------------------------
# In-kernel helpers (operate on channel-flattened (H, W*C) values)
# ----------------------------------------------------------------------------
def _pool2x2_s1_p1(x, c):
    """F.max_pool2d(kernel=2, stride=1, padding=1) on one (H, W*c) image."""
    h, wc = x.shape
    neg_col = jnp.full((h, c), -jnp.inf, x.dtype)
    xw = jnp.concatenate([neg_col, x, neg_col], axis=1)            # (h, wc+2c)
    neg_row = jnp.full((1, wc + 2 * c), -jnp.inf, x.dtype)
    xp = jnp.concatenate([neg_row, xw, neg_row], axis=0)           # (h+2, wc+2c)
    oh, owc = h + 1, wc + c
    return jnp.maximum(
        jnp.maximum(xp[0:oh, 0:owc], xp[0:oh, c:c + owc]),
        jnp.maximum(xp[1:oh + 1, 0:owc], xp[1:oh + 1, c:c + owc]))


def _resnet_kernel(x_ref, w1_ref, b1_ref, w2_ref, b2_ref, wd_ref,
                   g_ref, bf1_ref, wo_ref, bo_ref, out_ref):
    f32 = jnp.float32
    x = x_ref[0]                                                   # (20, 80) f32

    # conv1 (5x5, pad pre-applied): banded matmul per kernel row -> (16, 160)
    acc = jnp.zeros((H1, W1 * C1), f32)
    for kh in range(K1):
        lhs = x[kh:kh + H1, :].astype(MXU_DTYPE)
        acc = acc + jnp.dot(lhs, w1_ref[kh], preferred_element_type=f32)
    c1 = acc + b1_ref[...]

    # max_pool2d(k=2, p=1, s=1) + ReLU -> (17, 170)
    a1 = jnp.maximum(_pool2x2_s1_p1(c1, C1), 0.0)

    # conv2 (2x2, no pad) -> (16, 320)
    acc = jnp.zeros((H2, W2 * C2), f32)
    for kh in range(K2):
        lhs = a1[kh:kh + H2, :].astype(MXU_DTYPE)
        acc = acc + jnp.dot(lhs, w2_ref[kh], preferred_element_type=f32)
    c2 = acc + b2_ref[...]

    # downsample (1x1 conv, no bias) on a1 -> (17, 340)
    ds = jnp.dot(a1.astype(MXU_DTYPE), wd_ref[...], preferred_element_type=f32)

    # max_pool2d(k=2, p=1, s=1) + residual add -> (17, 340)
    p2 = _pool2x2_s1_p1(c2, C2) + ds

    # max_pool2d(k=2, s=2) + ReLU: pooled values stay embedded in a (16, 320)
    # grid (odd rows / odd column-blocks hold junk; the folded fc1 weights have
    # exact zeros there so they never contribute).
    vm = jnp.maximum(p2[0:2 * HF, :], p2[1:2 * HF + 1, :])         # (16, 340)
    hm = jnp.maximum(vm[:, 0:2 * WF * C2], vm[:, C2:(2 * WF + 1) * C2])  # (16, 320)
    a2 = jnp.maximum(hm, 0.0)

    # pool-select + NCHW flatten + fc1 (+ReLU) as one lane-dense matmul.
    rows = jnp.concatenate([a2[2 * i:2 * i + 1, :] for i in range(HF)],
                           axis=1)                                 # (1, 2560)
    h1 = jnp.dot(rows.astype(MXU_DTYPE), g_ref[...], preferred_element_type=f32)
    h1 = jnp.maximum(h1 + bf1_ref[...], 0.0)                       # (1, 50)

    # output layer + softmax (exact division: keeps sum(probs) == 1 to f32 eps)
    logits = jnp.dot(h1.astype(MXU_DTYPE), wo_ref[...],
                     preferred_element_type=f32) + bo_ref[...]     # (1, 10)
    z = logits - jnp.max(logits, axis=-1, keepdims=True)
    e = jnp.exp(z)
    out_ref[0] = (e / jnp.sum(e, axis=-1, keepdims=True)).astype(out_ref.dtype)


# ----------------------------------------------------------------------------
# XLA-side weight folding (runs once inside the jitted wrapper, all tiny)
# ----------------------------------------------------------------------------
def _banded_conv_mats(w_oihw, wp):
    """Fold the W-axis taps of a conv into per-kh banded matrices.

    Returns M of shape (KH, wp*Ci, ow*Co) with
        M[kh, (ow+kw)*Ci + ci, ow*Co + co] = w[co, ci, kh, kw]
    so that, in the channel-flattened (H, W*C) layout,
        out_row[oh] = sum_kh  in_row[oh + kh] @ M[kh].
    """
    co, ci, n_kh, n_kw = w_oihw.shape
    ow = wp - n_kw + 1
    eye = jnp.eye(ow, dtype=w_oihw.dtype)
    mats = []
    for kh in range(n_kh):
        m = jnp.zeros((wp * ci, ow * co), w_oihw.dtype)
        for kw in range(n_kw):
            blk = jnp.kron(eye, w_oihw[:, :, kh, kw].T)            # (ow*ci, ow*co)
            m = m.at[kw * ci:kw * ci + ow * ci, :].add(blk)
        mats.append(m)
    return jnp.stack(mats, axis=0)


def _fold_fc1(w_fc1):
    """Fold stride-2 pool selection + PyTorch NCHW flatten into the fc1 weight.

    Row layout matches the in-kernel concat of the HF even rows of the
    (2*HF, 2*WF*C2) pooled grid: row = oh*(2*WF*C2) + w*C2 + c, zeros at odd w.
    """
    wr = w_fc1.reshape(C2, HF, WF, HID)                            # [c, oh, ow, j]
    g = jnp.zeros((HF, 2 * WF, C2, HID), w_fc1.dtype)              # [oh, w, c, j]
    g = g.at[:, 0:2 * WF:2, :, :].set(jnp.transpose(wr, (1, 2, 0, 3)))
    return g.reshape(HF * 2 * WF * C2, HID)                        # (2560, 50)


# ----------------------------------------------------------------------------
# Forward pass: one pallas_call over the batch
# ----------------------------------------------------------------------------
def resnet_forward(x_nchw, params):
    n = x_nchw.shape[0]

    # Input layout: NCHW -> NHWC -> pre-pad for conv1 -> channel-flattened rows.
    x_nhwc = jnp.transpose(x_nchw, (0, 2, 3, 1)).astype(jnp.float32)
    x_pad = jnp.pad(x_nhwc, ((0, 0), (P1, P1), (P1, P1), (0, 0)))
    x0 = x_pad.reshape(n, HP, WP * CIN)                            # (n, 20, 80)

    # Weight packing (banded conv matrices, tiled biases, folded fc1 weight).
    w1b = _banded_conv_mats(params["w_conv1"], WP).astype(MXU_DTYPE)   # (5, 80, 160)
    b1t = jnp.tile(params["b_conv1"], W1).reshape(1, W1 * C1).astype(jnp.float32)
    w2b = _banded_conv_mats(params["w_conv2"], WA).astype(MXU_DTYPE)   # (2, 170, 320)
    b2t = jnp.tile(params["b_conv2"], W2).reshape(1, W2 * C2).astype(jnp.float32)
    wdb = _banded_conv_mats(params["w_down"], WA)[0].astype(MXU_DTYPE)  # (170, 340)
    gf = _fold_fc1(params["w_fc1"]).astype(MXU_DTYPE)                  # (2560, 50)
    bf1 = params["b_fc1"].reshape(1, HID).astype(jnp.float32)
    wo = params["w_out"].astype(MXU_DTYPE)                             # (50, 10)
    bo = params["b_out"].reshape(1, NCLS).astype(jnp.float32)

    def _full(shape):
        if len(shape) == 2:
            return pl.BlockSpec(shape, lambda i: (0, 0))
        return pl.BlockSpec(shape, lambda i: (0, 0, 0))

    out = pl.pallas_call(
        _resnet_kernel,
        out_shape=jax.ShapeDtypeStruct((n, 1, NCLS), jnp.float32),
        grid=(n,),
        in_specs=[
            pl.BlockSpec((1, HP, WP * CIN), lambda i: (i, 0, 0)),   # per-image input
            _full(w1b.shape), _full(b1t.shape),
            _full(w2b.shape), _full(b2t.shape),
            _full(wdb.shape),
            _full(gf.shape), _full(bf1.shape),
            _full(wo.shape), _full(bo.shape),
        ],
        out_specs=pl.BlockSpec((1, 1, NCLS), lambda i: (i, 0, 0)),
        compiler_params=pltpu.CompilerParams(
            dimension_semantics=("parallel",)),        # batch across TCs on v7x
    )(x0, w1b, b1t, w2b, b2t, wdb, gf, bf1, wo, bo)
    return out.reshape(n, NCLS)


# ----------------------------------------------------------------------------
# Pure-JAX reference (mirrors the PyTorch module) for validation
# ----------------------------------------------------------------------------
def _reference_forward(x_nchw, params):
    def conv(x, w, b, pad):
        y = jax.lax.conv_general_dilated(
            x, jnp.transpose(w, (2, 3, 1, 0)), (1, 1),
            [(pad, pad), (pad, pad)],
            dimension_numbers=("NHWC", "HWIO", "NHWC"))
        return y if b is None else y + b

    def maxpool(x, k, stride, pad):
        return jax.lax.reduce_window(
            x, -jnp.inf, jax.lax.max, (1, k, k, 1), (1, stride, stride, 1),
            ((0, 0), (pad, pad), (pad, pad), (0, 0)))

    x = jnp.transpose(x_nchw, (0, 2, 3, 1))
    a1 = jax.nn.relu(maxpool(conv(x, params["w_conv1"], params["b_conv1"], P1), 2, 1, 1))
    c2 = conv(a1, params["w_conv2"], params["b_conv2"], 0)
    p2 = maxpool(c2, 2, 1, 1) + conv(a1, params["w_down"], None, 0)
    a2 = jax.nn.relu(maxpool(p2, 2, 2, 0))
    flat = jnp.transpose(a2, (0, 3, 1, 2)).reshape(a2.shape[0], -1)  # NCHW flatten
    h = jax.nn.relu(flat @ params["w_fc1"] + params["b_fc1"])
    return jax.nn.softmax(h @ params["w_out"] + params["b_out"], axis=-1)


# ----------------------------------------------------------------------------
# Deterministic example inputs + run
# ----------------------------------------------------------------------------
if __name__ == "__main__":
    key = jax.random.PRNGKey(0)
    kx, k1, kb1, k2, kb2, k3, k4, kb4, k5, kb5 = jax.random.split(key, 10)

    x = jax.random.normal(kx, (2, CIN, H0, W0), jnp.float32)   # NCHW, like PyTorch

    params = {
        # PyTorch OIHW conv weights (LazyConv2d infers Cin from its input)
        "w_conv1": 0.10 * jax.random.normal(k1, (C1, CIN, K1, K1), jnp.float32),
        "b_conv1": 0.10 * jax.random.normal(kb1, (C1,), jnp.float32),
        "w_conv2": 0.10 * jax.random.normal(k2, (C2, C1, K2, K2), jnp.float32),
        "b_conv2": 0.10 * jax.random.normal(kb2, (C2,), jnp.float32),
        "w_down":  0.10 * jax.random.normal(k3, (C2, C1, 1, 1), jnp.float32),  # bias=False
        # Linear weights stored as (in, out); LazyLinear in_features = 20*8*8 = 1280
        "w_fc1":   0.05 * jax.random.normal(k4, (C2 * HF * WF, HID), jnp.float32),
        "b_fc1":   0.05 * jax.random.normal(kb4, (HID,), jnp.float32),
        "w_out":   0.05 * jax.random.normal(k5, (HID, NCLS), jnp.float32),
        "b_out":   0.05 * jax.random.normal(kb5, (NCLS,), jnp.float32),
    }

    fwd = jax.jit(resnet_forward)
    probs = jax.block_until_ready(fwd(x, params))

    assert probs.shape == (2, NCLS)
    assert bool(jnp.all(jnp.isfinite(probs)))
    assert bool(jnp.allclose(jnp.sum(probs, axis=1), 1.0, atol=1e-5))

    # Cross-check against the pure-JAX reference (loose tol: bf16 MXU operands).
    ref = _reference_forward(x, params)
    assert bool(jnp.allclose(probs, ref, atol=5e-2)), \
        f"max |diff| = {float(jnp.max(jnp.abs(probs - ref)))}"

    print("KERNEL_OK")
</pallas_src>

<mosaic_0001>
module attributes {stable_mosaic.version = 11 : i64} {
  func.func @_resnet_kernel(%arg0: i32, %arg1: memref<1x20x80xf32, #tpu.memory_space<vmem>>, %arg2: memref<5x80x160xbf16, #tpu.memory_space<vmem>>, %arg3: memref<1x160xf32, #tpu.memory_space<vmem>>, %arg4: memref<2x170x320xbf16, #tpu.memory_space<vmem>>, %arg5: memref<1x320xf32, #tpu.memory_space<vmem>>, %arg6: memref<170x340xbf16, #tpu.memory_space<vmem>>, %arg7: memref<2560x50xbf16, #tpu.memory_space<vmem>>, %arg8: memref<1x50xf32, #tpu.memory_space<vmem>>, %arg9: memref<50x10xbf16, #tpu.memory_space<vmem>>, %arg10: memref<1x10xf32, #tpu.memory_space<vmem>>, %arg11: memref<1x1x10xf32, #tpu.memory_space<vmem>>) attributes {dimension_semantics = [#tpu.dimension_semantics<parallel>], iteration_bounds = array<i64: 2>, scalar_prefetch = 0 : i64, scratch_operands = 0 : i64, tpu.core_type = #tpu.core_type<tc>, window_params = [{transform_indices = @transform_0, window_bounds = array<i64: 1, 20, 80>}, {pipeline_mode = #tpu.pipeline_mode<synchronous>, transform_indices = @transform_1, window_bounds = array<i64: 5, 80, 160>}, {pipeline_mode = #tpu.pipeline_mode<synchronous>, transform_indices = @transform_2, window_bounds = array<i64: 1, 160>}, {pipeline_mode = #tpu.pipeline_mode<synchronous>, transform_indices = @transform_3, window_bounds = array<i64: 2, 170, 320>}, {pipeline_mode = #tpu.pipeline_mode<synchronous>, transform_indices = @transform_4, window_bounds = array<i64: 1, 320>}, {pipeline_mode = #tpu.pipeline_mode<synchronous>, transform_indices = @transform_5, window_bounds = array<i64: 170, 340>}, {pipeline_mode = #tpu.pipeline_mode<synchronous>, transform_indices = @transform_6, window_bounds = array<i64: 2560, 50>}, {pipeline_mode = #tpu.pipeline_mode<synchronous>, transform_indices = @transform_7, window_bounds = array<i64: 1, 50>}, {pipeline_mode = #tpu.pipeline_mode<synchronous>, transform_indices = @transform_8, window_bounds = array<i64: 50, 10>}, {pipeline_mode = #tpu.pipeline_mode<synchronous>, transform_indices = @transform_9, window_bounds = array<i64: 1, 10>}, {transform_indices = @transform_10, window_bounds = array<i64: 1, 1, 10>}]} {
    %c0 = arith.constant 0 : index
    %c0_0 = arith.constant 0 : index
    %c0_1 = arith.constant 0 : index
    %0 = vector.load %arg1[%c0, %c0_0, %c0_1] : memref<1x20x80xf32, #tpu.memory_space<vmem>>, vector<1x20x80xf32>
    %1 = vector.shape_cast %0 : vector<1x20x80xf32> to vector<20x80xf32>
    %cst = arith.constant 0.000000e+00 : f32
    %2 = vector.broadcast %cst : f32 to vector<16x160xf32>
    %3 = vector.extract_strided_slice %1 {offsets = [0, 0], sizes = [16, 80], strides = [1, 1]} : vector<20x80xf32> to vector<16x80xf32>
    %4 = arith.truncf %3 : vector<16x80xf32> to vector<16x80xbf16>
    %c0_2 = arith.constant 0 : index
    %c0_3 = arith.constant 0 : index
    %c0_4 = arith.constant 0 : index
    %5 = vector.load %arg2[%c0_2, %c0_3, %c0_4] : memref<5x80x160xbf16, #tpu.memory_space<vmem>>, vector<1x80x160xbf16>
    %6 = vector.shape_cast %5 : vector<1x80x160xbf16> to vector<80x160xbf16>
    %cst_5 = arith.constant dense<0.000000e+00> : vector<16x160xf32>
    %7 = tpu.matmul %4, %6, %cst_5 {dimension_numbers = #tpu.dot_dimension_numbers<[1], [0], [0], [1], [0, 0, 1, 1], [], []>} : vector<16x80xbf16>, vector<80x160xbf16>, vector<16x160xf32> -> vector<16x160xf32>
    %8 = arith.addf %2, %7 : vector<16x160xf32>
    %9 = vector.extract_strided_slice %1 {offsets = [1, 0], sizes = [16, 80], strides = [1, 1]} : vector<20x80xf32> to vector<16x80xf32>
    %10 = arith.truncf %9 : vector<16x80xf32> to vector<16x80xbf16>
    %c1 = arith.constant 1 : index
    %c0_6 = arith.constant 0 : index
    %c0_7 = arith.constant 0 : index
    %11 = vector.load %arg2[%c1, %c0_6, %c0_7] : memref<5x80x160xbf16, #tpu.memory_space<vmem>>, vector<1x80x160xbf16>
    %12 = vector.shape_cast %11 : vector<1x80x160xbf16> to vector<80x160xbf16>
    %cst_8 = arith.constant dense<0.000000e+00> : vector<16x160xf32>
    %13 = tpu.matmul %10, %12, %cst_8 {dimension_numbers = #tpu.dot_dimension_numbers<[1], [0], [0], [1], [0, 0, 1, 1], [], []>} : vector<16x80xbf16>, vector<80x160xbf16>, vector<16x160xf32> -> vector<16x160xf32>
    %14 = arith.addf %8, %13 : vector<16x160xf32>
    %15 = vector.extract_strided_slice %1 {offsets = [2, 0], sizes = [16, 80], strides = [1, 1]} : vector<20x80xf32> to vector<16x80xf32>
    %16 = arith.truncf %15 : vector<16x80xf32> to vector<16x80xbf16>
    %c2 = arith.constant 2 : index
    %c0_9 = arith.constant 0 : index
    %c0_10 = arith.constant 0 : index
    %17 = vector.load %arg2[%c2, %c0_9, %c0_10] : memref<5x80x160xbf16, #tpu.memory_space<vmem>>, vector<1x80x160xbf16>
    %18 = vector.shape_cast %17 : vector<1x80x160xbf16> to vector<80x160xbf16>
    %cst_11 = arith.constant dense<0.000000e+00> : vector<16x160xf32>
    %19 = tpu.matmul %16, %18, %cst_11 {dimension_numbers = #tpu.dot_dimension_numbers<[1], [0], [0], [1], [0, 0, 1, 1], [], []>} : vector<16x80xbf16>, vector<80x160xbf16>, vector<16x160xf32> -> vector<16x160xf32>
    %20 = arith.addf %14, %19 : vector<16x160xf32>
    %21 = vector.extract_strided_slice %1 {offsets = [3, 0], sizes = [16, 80], strides = [1, 1]} : vector<20x80xf32> to vector<16x80xf32>
    %22 = arith.truncf %21 : vector<16x80xf32> to vector<16x80xbf16>
    %c3 = arith.constant 3 : index
    %c0_12 = arith.constant 0 : index
    %c0_13 = arith.constant 0 : index
    %23 = vector.load %arg2[%c3, %c0_12, %c0_13] : memref<5x80x160xbf16, #tpu.memory_space<vmem>>, vector<1x80x160xbf16>
    %24 = vector.shape_cast %23 : vector<1x80x160xbf16> to vector<80x160xbf16>
    %cst_14 = arith.constant dense<0.000000e+00> : vector<16x160xf32>
    %25 = tpu.matmul %22, %24, %cst_14 {dimension_numbers = #tpu.dot_dimension_numbers<[1], [0], [0], [1], [0, 0, 1, 1], [], []>} : vector<16x80xbf16>, vector<80x160xbf16>, vector<16x160xf32> -> vector<16x160xf32>
    %26 = arith.addf %20, %25 : vector<16x160xf32>
    %27 = vector.extract_strided_slice %1 {offsets = [4, 0], sizes = [16, 80], strides = [1, 1]} : vector<20x80xf32> to vector<16x80xf32>
    %28 = arith.truncf %27 : vector<16x80xf32> to vector<16x80xbf16>
    %c4 = arith.constant 4 : index
    %c0_15 = arith.constant 0 : index
    %c0_16 = arith.constant 0 : index
    %29 = vector.load %arg2[%c4, %c0_15, %c0_16] : memref<5x80x160xbf16, #tpu.memory_space<vmem>>, vector<1x80x160xbf16>
    %30 = vector.shape_cast %29 : vector<1x80x160xbf16> to vector<80x160xbf16>
    %cst_17 = arith.constant dense<0.000000e+00> : vector<16x160xf32>
    %31 = tpu.matmul %28, %30, %cst_17 {dimension_numbers = #tpu.dot_dimension_numbers<[1], [0], [0], [1], [0, 0, 1, 1], [], []>} : vector<16x80xbf16>, vector<80x160xbf16>, vector<16x160xf32> -> vector<16x160xf32>
    %32 = arith.addf %26, %31 : vector<16x160xf32>
    %c0_18 = arith.constant 0 : index
    %c0_19 = arith.constant 0 : index
    %33 = vector.load %arg3[%c0_18, %c0_19] : memref<1x160xf32, #tpu.memory_space<vmem>>, vector<1x160xf32>
    %34 = vector.broadcast %33 : vector<1x160xf32> to vector<16x160xf32>
    %35 = arith.addf %32, %34 : vector<16x160xf32>
    %cst_20 = arith.constant 0xFF800000 : f32
    %36 = vector.broadcast %cst_20 : f32 to vector<16x10xf32>
    %37 = tpu.concatenate %36, %35, %36 in 1 : vector<16x10xf32>, vector<16x160xf32>, vector<16x10xf32> -> vector<16x180xf32>
    %cst_21 = arith.constant 0xFF800000 : f32
    %38 = vector.broadcast %cst_21 : f32 to vector<1x180xf32>
    %39 = tpu.concatenate %38, %37, %38 in 0 : vector<1x180xf32>, vector<16x180xf32>, vector<1x180xf32> -> vector<18x180xf32>
    %40 = vector.extract_strided_slice %39 {offsets = [0, 0], sizes = [17, 170], strides = [1, 1]} : vector<18x180xf32> to vector<17x170xf32>
    %41 = vector.extract_strided_slice %39 {offsets = [0, 10], sizes = [17, 170], strides = [1, 1]} : vector<18x180xf32> to vector<17x170xf32>
    %42 = arith.maximumf %40, %41 : vector<17x170xf32>
    %43 = vector.extract_strided_slice %39 {offsets = [1, 0], sizes = [17, 170], strides = [1, 1]} : vector<18x180xf32> to vector<17x170xf32>
    %44 = vector.extract_strided_slice %39 {offsets = [1, 10], sizes = [17, 170], strides = [1, 1]} : vector<18x180xf32> to vector<17x170xf32>
    %45 = arith.maximumf %43, %44 : vector<17x170xf32>
    %46 = arith.maximumf %42, %45 : vector<17x170xf32>
    %cst_22 = arith.constant 0.000000e+00 : f32
    %47 = vector.broadcast %cst_22 : f32 to vector<17x170xf32>
    %48 = arith.maximumf %46, %47 : vector<17x170xf32>
    %cst_23 = arith.constant 0.000000e+00 : f32
    %49 = vector.broadcast %cst_23 : f32 to vector<16x320xf32>
    %50 = vector.extract_strided_slice %48 {offsets = [0, 0], sizes = [16, 170], strides = [1, 1]} : vector<17x170xf32> to vector<16x170xf32>
    %51 = arith.truncf %50 : vector<16x170xf32> to vector<16x170xbf16>
    %c0_24 = arith.constant 0 : index
    %c0_25 = arith.constant 0 : index
    %c0_26 = arith.constant 0 : index
    %52 = vector.load %arg4[%c0_24, %c0_25, %c0_26] : memref<2x170x320xbf16, #tpu.memory_space<vmem>>, vector<1x170x320xbf16>
    %53 = vector.shape_cast %52 : vector<1x170x320xbf16> to vector<170x320xbf16>
    %cst_27 = arith.constant dense<0.000000e+00> : vector<16x320xf32>
    %54 = tpu.matmul %51, %53, %cst_27 {dimension_numbers = #tpu.dot_dimension_numbers<[1], [0], [0], [1], [0, 0, 1, 1], [], []>} : vector<16x170xbf16>, vector<170x320xbf16>, vector<16x320xf32> -> vector<16x320xf32>
    %55 = arith.addf %49, %54 : vector<16x320xf32>
    %56 = vector.extract_strided_slice %48 {offsets = [1, 0], sizes = [16, 170], strides = [1, 1]} : vector<17x170xf32> to vector<16x170xf32>
    %57 = arith.truncf %56 : vector<16x170xf32> to vector<16x170xbf16>
    %c1_28 = arith.constant 1 : index
    %c0_29 = arith.constant 0 : index
    %c0_30 = arith.constant 0 : index
    %58 = vector.load %arg4[%c1_28, %c0_29, %c0_30] : memref<2x170x320xbf16, #tpu.memory_space<vmem>>, vector<1x170x320xbf16>
    %59 = vector.shape_cast %58 : vector<1x170x320xbf16> to vector<170x320xbf16>
    %cst_31 = arith.constant dense<0.000000e+00> : vector<16x320xf32>
    %60 = tpu.matmul %57, %59, %cst_31 {dimension_numbers = #tpu.dot_dimension_numbers<[1], [0], [0], [1], [0, 0, 1, 1], [], []>} : vector<16x170xbf16>, vector<170x320xbf16>, vector<16x320xf32> -> vector<16x320xf32>
    %61 = arith.addf %55, %60 : vector<16x320xf32>
    %c0_32 = arith.constant 0 : index
    %c0_33 = arith.constant 0 : index
    %62 = vector.load %arg5[%c0_32, %c0_33] : memref<1x320xf32, #tpu.memory_space<vmem>>, vector<1x320xf32>
    %63 = vector.broadcast %62 : vector<1x320xf32> to vector<16x320xf32>
    %64 = arith.addf %61, %63 : vector<16x320xf32>
    %65 = arith.truncf %48 : vector<17x170xf32> to vector<17x170xbf16>
    %c0_34 = arith.constant 0 : index
    %c0_35 = arith.constant 0 : index
    %66 = vector.load %arg6[%c0_34, %c0_35] : memref<170x340xbf16, #tpu.memory_space<vmem>>, vector<170x340xbf16>
    %cst_36 = arith.constant dense<0.000000e+00> : vector<17x340xf32>
    %67 = tpu.matmul %65, %66, %cst_36 {dimension_numbers = #tpu.dot_dimension_numbers<[1], [0], [0], [1], [0, 0, 1, 1], [], []>} : vector<17x170xbf16>, vector<170x340xbf16>, vector<17x340xf32> -> vector<17x340xf32>
    %cst_37 = arith.constant 0xFF800000 : f32
    %68 = vector.broadcast %cst_37 : f32 to vector<16x20xf32>
    %69 = tpu.concatenate %68, %64, %68 in 1 : vector<16x20xf32>, vector<16x320xf32>, vector<16x20xf32> -> vector<16x360xf32>
    %cst_38 = arith.constant 0xFF800000 : f32
    %70 = vector.broadcast %cst_38 : f32 to vector<1x360xf32>
    %71 = tpu.concatenate %70, %69, %70 in 0 : vector<1x360xf32>, vector<16x360xf32>, vector<1x360xf32> -> vector<18x360xf32>
    %72 = vector.extract_strided_slice %71 {offsets = [0, 0], sizes = [17, 340], strides = [1, 1]} : vector<18x360xf32> to vector<17x340xf32>
    %73 = vector.extract_strided_slice %71 {offsets = [0, 20], sizes = [17, 340], strides = [1, 1]} : vector<18x360xf32> to vector<17x340xf32>
    %74 = arith.maximumf %72, %73 : vector<17x340xf32>
    %75 = vector.extract_strided_slice %71 {offsets = [1, 0], sizes = [17, 340], strides = [1, 1]} : vector<18x360xf32> to vector<17x340xf32>
    %76 = vector.extract_strided_slice %71 {offsets = [1, 20], sizes = [17, 340], strides = [1, 1]} : vector<18x360xf32> to vector<17x340xf32>
    %77 = arith.maximumf %75, %76 : vector<17x340xf32>
    %78 = arith.maximumf %74, %77 : vector<17x340xf32>
    %79 = arith.addf %78, %67 : vector<17x340xf32>
    %80 = vector.extract_strided_slice %79 {offsets = [0, 0], sizes = [16, 340], strides = [1, 1]} : vector<17x340xf32> to vector<16x340xf32>
    %81 = vector.extract_strided_slice %79 {offsets = [1, 0], sizes = [16, 340], strides = [1, 1]} : vector<17x340xf32> to vector<16x340xf32>
    %82 = arith.maximumf %80, %81 : vector<16x340xf32>
    %83 = vector.extract_strided_slice %82 {offsets = [0, 0], sizes = [16, 320], strides = [1, 1]} : vector<16x340xf32> to vector<16x320xf32>
    %84 = vector.extract_strided_slice %82 {offsets = [0, 20], sizes = [16, 320], strides = [1, 1]} : vector<16x340xf32> to vector<16x320xf32>
    %85 = arith.maximumf %83, %84 : vector<16x320xf32>
    %cst_39 = arith.constant 0.000000e+00 : f32
    %86 = vector.broadcast %cst_39 : f32 to vector<16x320xf32>
    %87 = arith.maximumf %85, %86 : vector<16x320xf32>
    %88 = vector.extract_strided_slice %87 {offsets = [0, 0], sizes = [1, 320], strides = [1, 1]} : vector<16x320xf32> to vector<1x320xf32>
    %89 = vector.extract_strided_slice %87 {offsets = [2, 0], sizes = [1, 320], strides = [1, 1]} : vector<16x320xf32> to vector<1x320xf32>
    %90 = vector.extract_strided_slice %87 {offsets = [4, 0], sizes = [1, 320], strides = [1, 1]} : vector<16x320xf32> to vector<1x320xf32>
    %91 = vector.extract_strided_slice %87 {offsets = [6, 0], sizes = [1, 320], strides = [1, 1]} : vector<16x320xf32> to vector<1x320xf32>
    %92 = vector.extract_strided_slice %87 {offsets = [8, 0], sizes = [1, 320], strides = [1, 1]} : vector<16x320xf32> to vector<1x320xf32>
    %93 = vector.extract_strided_slice %87 {offsets = [10, 0], sizes = [1, 320], strides = [1, 1]} : vector<16x320xf32> to vector<1x320xf32>
    %94 = vector.extract_strided_slice %87 {offsets = [12, 0], sizes = [1, 320], strides = [1, 1]} : vector<16x320xf32> to vector<1x320xf32>
    %95 = vector.extract_strided_slice %87 {offsets = [14, 0], sizes = [1, 320], strides = [1, 1]} : vector<16x320xf32> to vector<1x320xf32>
    %96 = tpu.concatenate %88, %89, %90, %91, %92, %93, %94, %95 in 1 : vector<1x320xf32>, vector<1x320xf32>, vector<1x320xf32>, vector<1x320xf32>, vector<1x320xf32>, vector<1x320xf32>, vector<1x320xf32>, vector<1x320xf32> -> vector<1x2560xf32>
    %97 = arith.truncf %96 : vector<1x2560xf32> to vector<1x2560xbf16>
    %c0_40 = arith.constant 0 : index
    %c0_41 = arith.constant 0 : index
    %98 = vector.load %arg7[%c0_40, %c0_41] : memref<2560x50xbf16, #tpu.memory_space<vmem>>, vector<2560x50xbf16>
    %cst_42 = arith.constant dense<0.000000e+00> : vector<1x50xf32>
    %99 = tpu.matmul %97, %98, %cst_42 {dimension_numbers = #tpu.dot_dimension_numbers<[1], [0], [0], [1], [0, 0, 1, 1], [], []>} : vector<1x2560xbf16>, vector<2560x50xbf16>, vector<1x50xf32> -> vector<1x50xf32>
    %c0_43 = arith.constant 0 : index
    %c0_44 = arith.constant 0 : index
    %100 = vector.load %arg8[%c0_43, %c0_44] : memref<1x50xf32, #tpu.memory_space<vmem>>, vector<1x50xf32>
    %101 = arith.addf %99, %100 : vector<1x50xf32>
    %cst_45 = arith.constant 0.000000e+00 : f32
    %102 = vector.broadcast %cst_45 : f32 to vector<1x50xf32>
    %103 = arith.maximumf %101, %102 : vector<1x50xf32>
    %104 = arith.truncf %103 : vector<1x50xf32> to vector<1x50xbf16>
    %c0_46 = arith.constant 0 : index
    %c0_47 = arith.constant 0 : index
    %105 = vector.load %arg9[%c0_46, %c0_47] : memref<50x10xbf16, #tpu.memory_space<vmem>>, vector<50x10xbf16>
    %cst_48 = arith.constant dense<0.000000e+00> : vector<1x10xf32>
    %106 = tpu.matmul %104, %105, %cst_48 {dimension_numbers = #tpu.dot_dimension_numbers<[1], [0], [0], [1], [0, 0, 1, 1], [], []>} : vector<1x50xbf16>, vector<50x10xbf16>, vector<1x10xf32> -> vector<1x10xf32>
    %c0_49 = arith.constant 0 : index
    %c0_50 = arith.constant 0 : index
    %107 = vector.load %arg10[%c0_49, %c0_50] : memref<1x10xf32, #tpu.memory_space<vmem>>, vector<1x10xf32>
    %108 = arith.addf %106, %107 : vector<1x10xf32>
    %cst_51 = arith.constant dense<0xFF800000> : vector<1xf32>
    %109 = vector.multi_reduction <maximumf>, %108, %cst_51 [1] : vector<1x10xf32> to vector<1xf32>
    %110 = vector.shape_cast %109 : vector<1xf32> to vector<1x1xf32>
    %111 = vector.broadcast %110 : vector<1x1xf32> to vector<1x10xf32>
    %112 = arith.subf %108, %111 : vector<1x10xf32>
    %113 = math.exp %112 : vector<1x10xf32>
    %cst_52 = arith.constant dense<0.000000e+00> : vector<1xf32>
    %114 = vector.multi_reduction <add>, %113, %cst_52 [1] : vector<1x10xf32> to vector<1xf32>
    %115 = vector.shape_cast %114 : vector<1xf32> to vector<1x1xf32>
    %116 = vector.broadcast %115 : vector<1x1xf32> to vector<1x10xf32>
    %117 = arith.divf %113, %116 : vector<1x10xf32>
    %c0_53 = arith.constant 0 : index
    %c0_54 = arith.constant 0 : index
    %c0_55 = arith.constant 0 : index
    %118 = vector.load %arg11[%c0_53, %c0_54, %c0_55] : memref<1x1x10xf32, #tpu.memory_space<vmem>>, vector<1x1x10xf32>
    %119 = vector.shape_cast %118 : vector<1x1x10xf32> to vector<1x10xf32>
    %120 = vector.shape_cast %117 : vector<1x10xf32> to vector<1x1x10xf32>
    tpu.vector_store %arg11[%c0_53, %c0_54, %c0_55], %120 {strides = array<i32>} : memref<1x1x10xf32, #tpu.memory_space<vmem>>, vector<1x1x10xf32>,
    return
  }
  func.func @transform_0(%arg0: i32) -> (i32, i32, i32) {
    %c0_i32 = arith.constant 0 : i32
    %c0_i32_0 = arith.constant 0 : i32
    %c0_i32_1 = arith.constant 0 : i32
    return %arg0, %c0_i32, %c0_i32_0 : i32, i32, i32
  }
  func.func @transform_1(%arg0: i32) -> (i32, i32, i32) {
    %c0_i32 = arith.constant 0 : i32
    %c0_i32_0 = arith.constant 0 : i32
    %c0_i32_1 = arith.constant 0 : i32
    %c0_i32_2 = arith.constant 0 : i32
    return %c0_i32, %c0_i32_0, %c0_i32_1 : i32, i32, i32
  }
  func.func @transform_2(%arg0: i32) -> (i32, i32) {
    %c0_i32 = arith.constant 0 : i32
    %c0_i32_0 = arith.constant 0 : i32
    %c0_i32_1 = arith.constant 0 : i32
    return %c0_i32, %c0_i32_0 : i32, i32
  }
  func.func @transform_3(%arg0: i32) -> (i32, i32, i32) {
    %c0_i32 = arith.constant 0 : i32
    %c0_i32_0 = arith.constant 0 : i32
    %c0_i32_1 = arith.constant 0 : i32
    %c0_i32_2 = arith.constant 0 : i32
    return %c0_i32, %c0_i32_0, %c0_i32_1 : i32, i32, i32
  }
  func.func @transform_4(%arg0: i32) -> (i32, i32) {
    %c0_i32 = arith.constant 0 : i32
    %c0_i32_0 = arith.constant 0 : i32
    %c0_i32_1 = arith.constant 0 : i32
    return %c0_i32, %c0_i32_0 : i32, i32
  }
  func.func @transform_5(%arg0: i32) -> (i32, i32) {
    %c0_i32 = arith.constant 0 : i32
    %c0_i32_0 = arith.constant 0 : i32
    %c0_i32_1 = arith.constant 0 : i32
    return %c0_i32, %c0_i32_0 : i32, i32
  }
  func.func @transform_6(%arg0: i32) -> (i32, i32) {
    %c0_i32 = arith.constant 0 : i32
    %c0_i32_0 = arith.constant 0 : i32
    %c0_i32_1 = arith.constant 0 : i32
    return %c0_i32, %c0_i32_0 : i32, i32
  }
  func.func @transform_7(%arg0: i32) -> (i32, i32) {
    %c0_i32 = arith.constant 0 : i32
    %c0_i32_0 = arith.constant 0 : i32
    %c0_i32_1 = arith.constant 0 : i32
    return %c0_i32, %c0_i32_0 : i32, i32
  }
  func.func @transform_8(%arg0: i32) -> (i32, i32) {
    %c0_i32 = arith.constant 0 : i32
    %c0_i32_0 = arith.constant 0 : i32
    %c0_i32_1 = arith.constant 0 : i32
    return %c0_i32, %c0_i32_0 : i32, i32
  }
  func.func @transform_9(%arg0: i32) -> (i32, i32) {
    %c0_i32 = arith.constant 0 : i32
    %c0_i32_0 = arith.constant 0 : i32
    %c0_i32_1 = arith.constant 0 : i32
    return %c0_i32, %c0_i32_0 : i32, i32
  }
  func.func @transform_10(%arg0: i32) -> (i32, i32, i32) {
    %c0_i32 = arith.constant 0 : i32
    %c0_i32_0 = arith.constant 0 : i32
    %c0_i32_1 = arith.constant 0 : i32
    return %arg0, %c0_i32, %c0_i32_0 : i32, i32, i32
  }
}

</mosaic_0001>

<llo_original>
// kernel: tile.13
$region0: #{tile.13}
  #allocation0 [shape = 's32[1]{0}', space=sflag, size = 0x4, scoped, tag = 'scoped memory for tile.13']
  %s0 = inlined_call_operand.vmem [shape: f32[10], index: 0, kind: input, shape index: {}]
  %s1 = inlined_call_operand.vmem [shape: f32[16,10], index: 1, kind: output, shape index: {}]
  // Predicated region
  $region2: #{tile.13} parent=0 // pred_check
    _
  $region3: #{tile.13} parent=0 // pred_check_branch
    %3 = sbr.rel (0) target = $region5
  $region4: #{tile.13} parent=0 // pred_region
    _
  $region5: #{tile.13} parent=0 // pred_fallthru
    _
  %v4 = vld [vmem:[%s0] ss:$0 sm:$0xff]
  %5 = vst [vmem:[%s1] sm:$0xff] %v4
  %s6 = scalar_lea.vmem %s1, 8
  %7 = vst [vmem:[%s6] sm:$0xff] %v4

// kernel: tile.14
$region0: #{tile.14}
  %s0 = inlined_call_operand.vmem [shape: f32[16,10], index: 0, kind: input, shape index: {}]
  %s1 = inlined_call_operand.vmem [shape: f32[1,160], index: 1, kind: output, shape index: {}]
  $region1: #{tile.14} parent=0
    #allocation0 [shape = 'u8[8192]{0}', space=vmem, size = 0x2000, scoped, tag = 'scoped mem for output reshape']
    %v2 = vld [vmem:[%s0] sm:$0x1]
    %vm3 = vcmask 80896
    %4 = vst.msk [vmem:[#allocation0] sm:$0x1] %vm3, %v2
    %s5 = scalar_lea.vmem %s0, 12
    %v6 = vld [vmem:[%s5] sm:$0x1]
    %s7 = scalar_lea.vmem %s0, 12
    %v8 = vld [vmem:[%s7] sm:$0x1]
    %vm9 = vcmask 64512
    %v10 = vsel %vm9, %v8, %v6
    %11 = vrot.lane.b32.xlu0 %v10, 120
    %v12 = vpop.permute.xlu0 %11
    %vm13 = vcmask 15360
    %s14 = scalar_lea.vmem [#allocation0], 8
    %15 = vst.msk [vmem:[%s14] sm:$0x1] %vm13, %v12
    %vm16 = vcmask 1048512
    %17 = vst.msk [vmem:[#allocation0] sm:$0x1] %vm16, %v12
    %s18 = scalar_lea.vmem %s0, 11
    %v19 = vld [vmem:[%s18] sm:$0x1]
    %20 = vrot.lane.b32.xlu0 %v19, 110
    %v21 = vpop.permute.xlu0 %20
    %vm22 = vcmask 982896
    %23 = vst.msk [vmem:[#allocation0] sm:$0x1] %vm22, %v21
    %s24 = scalar_lea.vmem %s0, 10
    %v25 = vld [vmem:[%s24] sm:$0x1]
    %26 = vrot.lane.b32.xlu0 %v25, 100
    %v27 = vpop.permute.xlu0 %26
    %vm28 = vcmask 900896
    %29 = vst.msk [vmem:[#allocation0] sm:$0x1] %vm28, %v27
    %s30 = scalar_lea.vmem %s0, 9
    %v31 = vld [vmem:[%s30] sm:$0x1]
    %32 = vrot.lane.b32.xlu0 %v31, 90
    %v33 = vpop.permute.xlu0 %32
    %vm34 = vcmask 818896
    %35 = vst.msk [vmem:[#allocation0] sm:$0x1] %vm34, %v33
    %s36 = scalar_lea.vmem %s0, 8
    %v37 = vld [vmem:[%s36] sm:$0x1]
    %38 = vrot.lane.b32.xlu0 %v37, 80
    %v39 = vpop.permute.xlu0 %38
    %vm40 = vcmask 736896
    %41 = vst.msk [vmem:[#allocation0] sm:$0x1] %vm40, %v39
    %s42 = scalar_lea.vmem %s0, 7
    %v43 = vld [vmem:[%s42] sm:$0x1]
    %44 = vrot.lane.b32.xlu0 %v43, 70
    %v45 = vpop.permute.xlu0 %44
    %vm46 = vcmask 654896
    %47 = vst.msk [vmem:[#allocation0] sm:$0x1] %vm46, %v45
    %s48 = scalar_lea.vmem %s0, 6
    %v49 = vld [vmem:[%s48] sm:$0x1]
    %50 = vrot.lane.b32.xlu0 %v49, 60
    %v51 = vpop.permute.xlu0 %50
    %vm52 = vcmask 572896
    %53 = vst.msk [vmem:[#allocation0] sm:$0x1] %vm52, %v51
    %s54 = scalar_lea.vmem %s0, 5
    %v55 = vld [vmem:[%s54] sm:$0x1]
    %56 = vrot.lane.b32.xlu0 %v55, 50
    %v57 = vpop.permute.xlu0 %56
    %vm58 = vcmask 490896
    %59 = vst.msk [vmem:[#allocation0] sm:$0x1] %vm58, %v57
    %s60 = scalar_lea.vmem %s0, 4
    %v61 = vld [vmem:[%s60] sm:$0x1]
    %62 = vrot.lane.b32.xlu0 %v61, 40
    %v63 = vpop.permute.xlu0 %62
    %vm64 = vcmask 408896
    %65 = vst.msk [vmem:[#allocation0] sm:$0x1] %vm64, %v63
    %s66 = scalar_lea.vmem %s0, 3
    %v67 = vld [vmem:[%s66] sm:$0x1]
    %68 = vrot.lane.b32.xlu0 %v67, 30
    %v69 = vpop.permute.xlu0 %68
    %vm70 = vcmask 326896
    %71 = vst.msk [vmem:[#allocation0] sm:$0x1] %vm70, %v69
    %s72 = scalar_lea.vmem %s0, 15
    %v73 = vld [vmem:[%s72] sm:$0x1]
    %74 = vrot.lane.b32.xlu0 %v73, 22
    %v75 = vpop.permute.xlu0 %74
    %vm76 = vcmask 261296
    %s77 = scalar_lea.vmem [#allocation0], 8
    %78 = vst.msk [vmem:[%s77] sm:$0x1] %vm76, %v75
    %s79 = scalar_lea.vmem %s0, 2
    %v80 = vld [vmem:[%s79] sm:$0x1]
    %81 = vrot.lane.b32.xlu0 %v80, 20
    %v82 = vpop.permute.xlu0 %81
    %vm83 = vcmask 244896
    %84 = vst.msk [vmem:[#allocation0] sm:$0x1] %vm83, %v82
    %s85 = scalar_lea.vmem %s0, 14
    %v86 = vld [vmem:[%s85] sm:$0x1]
    %87 = vrot.lane.b32.xlu0 %v86, 12
    %v88 = vpop.permute.xlu0 %87
    %vm89 = vcmask 179296
    %s90 = scalar_lea.vmem [#allocation0], 8
    %91 = vst.msk [vmem:[%s90] sm:$0x1] %vm89, %v88
    %s92 = scalar_lea.vmem %s0, 1
    %v93 = vld [vmem:[%s92] sm:$0x1]
    %94 = vrot.lane.b32.xlu0 %v93, 10
    %v95 = vpop.permute.xlu0 %94
    %vm96 = vcmask 162896
    %97 = vst.msk [vmem:[#allocation0] sm:$0x1] %vm96, %v95
    %s98 = scalar_lea.vmem %s0, 13
    %v99 = vld [vmem:[%s98] sm:$0x1]
    %100 = vrot.lane.b32.xlu0 %v99, 2
    %v101 = vpop.permute.xlu0 %100
    %vm102 = vcmask 97296
    %s103 = scalar_lea.vmem [#allocation0], 8
    %104 = vst.msk [vmem:[%s103] sm:$0x1] %vm102, %v101
    %s106 = ssub.s32 2, 1
    %v107 = vld [vmem:[#allocation0] sm:%s106]
    %s109 = ssub.s32 2, 1
    %110 = vst [vmem:[%s1] sm:%s109] %v107
    %s111 = scalar_lea.vmem [#allocation0], 8
    %v112 = vld [vmem:[%s111] sm:%s106]
    %s114 = ssub.s32 2, 1
    %s115 = scalar_lea.vmem %s1, 1
    %116 = vst [vmem:[%s115] sm:%s114] %v112

// kernel: tile.18
$region0: #{tile.18}
  #allocation0 [shape = 's32[1]{0}', space=sflag, size = 0x4, scoped, tag = 'scoped memory for tile.18']
  %s0 = inlined_call_operand.vmem [shape: f32[20], index: 0, kind: input, shape index: {}]
  %s1 = inlined_call_operand.vmem [shape: f32[16,20], index: 1, kind: output, shape index: {}]
  // Predicated region
  $region2: #{tile.18} parent=0 // pred_check
    _
  $region3: #{tile.18} parent=0 // pred_check_branch
    %3 = sbr.rel (0) target = $region5
  $region4: #{tile.18} parent=0 // pred_region
    _
  $region5: #{tile.18} parent=0 // pred_fallthru
    _
  %v4 = vld [vmem:[%s0] ss:$0 sm:$0xff]
  %5 = vst [vmem:[%s1] sm:$0xff] %v4
  %s6 = scalar_lea.vmem %s1, 8
  %7 = vst [vmem:[%s6] sm:$0xff] %v4

// kernel: tile.19
$region0: #{tile.19}
  %s0 = inlined_call_operand.vmem [shape: f32[16,20], index: 0, kind: input, shape index: {}]
  %s1 = inlined_call_operand.vmem [shape: f32[1,320], index: 1, kind: output, shape index: {}]
  $region1: #{tile.19} parent=0
    #allocation0 [shape = 'u8[12288]{0}', space=vmem, size = 0x3000, scoped, tag = 'scoped mem for output reshape']
    %v2 = vld [vmem:[%s0] sm:$0x1]
    %vm3 = vcmask 162816
    %4 = vst.msk [vmem:[#allocation0] sm:$0x1] %vm3, %v2
    %s5 = scalar_lea.vmem %s0, 6
    %v6 = vld [vmem:[%s5] sm:$0x1]
    %s7 = scalar_lea.vmem %s0, 6
    %v8 = vld [vmem:[%s7] sm:$0x1]
    %vm9 = vcmask 64512
    %v10 = vsel %vm9, %v8, %v6
    %11 = vrot.lane.b32.xlu0 %v10, 120
    %v12 = vpop.permute.xlu0 %11
    %vm13 = vcmask 97280
    %s14 = scalar_lea.vmem [#allocation0], 8
    %15 = vst.msk [vmem:[%s14] sm:$0x1] %vm13, %v12
    %vm16 = vcmask 1048512
    %17 = vst.msk [vmem:[#allocation0] sm:$0x1] %vm16, %v12
    %s18 = scalar_lea.vmem %s0, 12
    %v19 = vld [vmem:[%s18] sm:$0x1]
    %s20 = scalar_lea.vmem %s0, 12
    %v21 = vld [vmem:[%s20] sm:$0x1]
    %vm22 = vcmask 130048
    %v23 = vsel %vm22, %v21, %v19
    %24 = vrot.lane.b32.xlu0 %v23, 112
    %v25 = vpop.permute.xlu0 %24
    %vm26 = vcmask 31744
    %s27 = scalar_lea.vmem [#allocation0], 16
    %28 = vst.msk [vmem:[%s27] sm:$0x1] %vm26, %v25
    %vm29 = vcmask 1048448
    %s30 = scalar_lea.vmem [#allocation0], 8
    %31 = vst.msk [vmem:[%s30] sm:$0x1] %vm29, %v25
    %s32 = scalar_lea.vmem %s0, 5
    %v33 = vld [vmem:[%s32] sm:$0x1]
    %34 = vrot.lane.b32.xlu0 %v33, 100
    %v35 = vpop.permute.xlu0 %34
    %vm36 = vcmask 982816
    %37 = vst.msk [vmem:[#allocation0] sm:$0x1] %vm36, %v35
    %s38 = scalar_lea.vmem %s0, 11
    %v39 = vld [vmem:[%s38] sm:$0x1]
    %40 = vrot.lane.b32.xlu0 %v39, 92
    %v41 = vpop.permute.xlu0 %40
    %vm42 = vcmask 917216
    %s43 = scalar_lea.vmem [#allocation0], 8
    %44 = vst.msk [vmem:[%s43] sm:$0x1] %vm42, %v41
    %s45 = scalar_lea.vmem %s0, 4
    %v46 = vld [vmem:[%s45] sm:$0x1]
    %47 = vrot.lane.b32.xlu0 %v46, 80
    %v48 = vpop.permute.xlu0 %47
    %vm49 = vcmask 818816
    %50 = vst.msk [vmem:[#allocation0] sm:$0x1] %vm49, %v48
    %s51 = scalar_lea.vmem %s0, 10
    %v52 = vld [vmem:[%s51] sm:$0x1]
    %53 = vrot.lane.b32.xlu0 %v52, 72
    %v54 = vpop.permute.xlu0 %53
    %vm55 = vcmask 753216
    %s56 = scalar_lea.vmem [#allocation0], 8
    %57 = vst.msk [vmem:[%s56] sm:$0x1] %vm55, %v54
    %s58 = scalar_lea.vmem %s0, 3
    %v59 = vld [vmem:[%s58] sm:$0x1]
    %60 = vrot.lane.b32.xlu0 %v59, 60
    %v61 = vpop.permute.xlu0 %60
    %vm62 = vcmask 654816
    %63 = vst.msk [vmem:[#allocation0] sm:$0x1] %vm62, %v61
    %s64 = scalar_lea.vmem %s0, 9
    %v65 = vld [vmem:[%s64] sm:$0x1]
    %66 = vrot.lane.b32.xlu0 %v65, 52
    %v67 = vpop.permute.xlu0 %66
    %vm68 = vcmask 589216
    %s69 = scalar_lea.vmem [#allocation0], 8
    %70 = vst.msk [vmem:[%s69] sm:$0x1] %vm68, %v67
    %s71 = scalar_lea.vmem %s0, 15
    %v72 = vld [vmem:[%s71] sm:$0x1]
    %73 = vrot.lane.b32.xlu0 %v72, 44
    %v74 = vpop.permute.xlu0 %73
    %vm75 = vcmask 523616
    %s76 = scalar_lea.vmem [#allocation0], 16
    %77 = vst.msk [vmem:[%s76] sm:$0x1] %vm75, %v74
    %s78 = scalar_lea.vmem %s0, 2
    %v79 = vld [vmem:[%s78] sm:$0x1]
    %80 = vrot.lane.b32.xlu0 %v79, 40
    %v81 = vpop.permute.xlu0 %80
    %vm82 = vcmask 490816
    %83 = vst.msk [vmem:[#allocation0] sm:$0x1] %vm82, %v81
    %s84 = scalar_lea.vmem %s0, 8
    %v85 = vld [vmem:[%s84] sm:$0x1]
    %86 = vrot.lane.b32.xlu0 %v85, 32
    %v87 = vpop.permute.xlu0 %86
    %vm88 = vcmask 425216
    %s89 = scalar_lea.vmem [#allocation0], 8
    %90 = vst.msk [vmem:[%s89] sm:$0x1] %vm88, %v87
    %s91 = scalar_lea.vmem %s0, 14
    %v92 = vld [vmem:[%s91] sm:$0x1]
    %93 = vrot.lane.b32.xlu0 %v92, 24
    %v94 = vpop.permute.xlu0 %93
    %vm95 = vcmask 359616
    %s96 = scalar_lea.vmem [#allocation0], 16
    %97 = vst.msk [vmem:[%s96] sm:$0x1] %vm95, %v94
    %s98 = scalar_lea.vmem %s0, 1
    %v99 = vld [vmem:[%s98] sm:$0x1]
    %100 = vrot.lane.b32.xlu0 %v99, 20
    %v101 = vpop.permute.xlu0 %100
    %vm102 = vcmask 326816
    %103 = vst.msk [vmem:[#allocation0] sm:$0x1] %vm102, %v101
    %s104 = scalar_lea.vmem %s0, 7
    %v105 = vld [vmem:[%s104] sm:$0x1]
    %106 = vrot.lane.b32.xlu0 %v105, 12
    %v107 = vpop.permute.xlu0 %106
    %vm108 = vcmask 261216
    %s109 = scalar_lea.vmem [#allocation0], 8
    %110 = vst.msk [vmem:[%s109] sm:$0x1] %vm108, %v107
    %s111 = scalar_lea.vmem %s0, 13
    %v112 = vld [vmem:[%s111] sm:$0x1]
    %113 = vrot.lane.b32.xlu0 %v112, 4
    %v114 = vpop.permute.xlu0 %113
    %vm115 = vcmask 195616
    %s116 = scalar_lea.vmem [#allocation0], 16
    %117 = vst.msk [vmem:[%s116] sm:$0x1] %vm115, %v114
    %s119 = ssub.s32 2, 1
    %v120 = vld [vmem:[#allocation0] sm:%s119]
    %s122 = ssub.s32 2, 1
    %123 = vst [vmem:[%s1] sm:%s122] %v120
    %s124 = scalar_lea.vmem [#allocation0], 8
    %v125 = vld [vmem:[%s124] sm:%s119]
    %s127 = ssub.s32 2, 1
    %s128 = scalar_lea.vmem %s1, 1
    %129 = vst [vmem:[%s128] sm:%s127] %v125
    %s130 = scalar_lea.vmem [#allocation0], 16
    %v131 = vld [vmem:[%s130] sm:%s119]
    %s133 = ssub.s32 2, 1
    %s134 = scalar_lea.vmem %s1, 2
    %135 = vst [vmem:[%s134] sm:%s133] %v131

// kernel: resnet_forward.1
$region0: #{resnet_forward.1}
  #allocation0 [shape = 'u32[]', space=smem, size = 0x4, offset = 0x4, fixed_abs, tag = 'smem constant byte address 0x4 - core index']
  #allocation1 [shape = 'u32[72,128]{1,0:T(1,128)}', space=vmem, size = 0x9000, scoped, tag = 'internal scratch']
  %s0 = inlined_call_operand.vmem [shape: f32[2,20,80], index: 0, kind: input, shape index: {}]
  %s1 = inlined_call_operand.vmem [shape: bf16[5,80,160], index: 1, kind: input, shape index: {}]
  %s2 = inlined_call_operand.vmem [shape: f32[1,160], index: 2, kind: input, shape index: {}]
  %s3 = inlined_call_operand.vmem [shape: bf16[2,170,320], index: 3, kind: input, shape index: {}]
  %s4 = inlined_call_operand.vmem [shape: f32[1,320], index: 4, kind: input, shape index: {}]
  %s5 = inlined_call_operand.vmem [shape: bf16[170,340], index: 5, kind: input, shape index: {}]
  %s6 = inlined_call_operand.vmem [shape: bf16[2560,50], index: 6, kind: input, shape index: {}]
  %s7 = inlined_call_operand.vmem [shape: f32[1,50], index: 7, kind: input, shape index: {}]
  %s8 = inlined_call_operand.vmem [shape: bf16[50,10], index: 8, kind: input, shape index: {}]
  %s9 = inlined_call_operand.vmem [shape: f32[1,10], index: 9, kind: input, shape index: {}]
  %s10 = inlined_call_operand.hbm [shape: f32[2,1,10], index: 10, kind: output, shape index: {}]
  %s11 = sld [smem:[#allocation0]]
  $region73: #{resnet_forward.1} parent=0
    _
  %s13 = ssub.s32 1, %s11
  %s14 = scalar_select 0, %s13, %s11
  $region1: #{resnet_forward.1} parent=0
    #allocation2 [shape = 'u8[1024]{0}', space=vmem, size = 0x400, scoped, tag = 'output window, operand 0']
    #allocation3 [shape = 's32[2]{0}', space=sflag, size = 0x8, scoped, tag = 'scoped memory for resnet_forward.1']
    %15 = vsyncpa [#allocation3], 0
    %s16 = scalar_lea.sflag [#allocation3], 1
    %17 = vsyncpa %s16, 0
    loop: start=0, step=1, limit=4
    $region2: #{resnet_forward.1} parent=1 // loop_pre_header
      _
    $region3: #{resnet_forward.1} parent=1 // loop_header
      %s19 = sphi 0, %s23
      %p20 = scmp.ge.s32.totalorder %s19, 4
      %s29 = sphi 0, %s31
      %s32 = sphi 0, %s29
      %s33 = sphi 0, %s32
      %s49 = sphi 0, %s33
      %s53 = sphi 0, %s53
      %s55 = sphi 0, %s53
      %s56 = sphi 0, %s55
      %s70 = sphi 0, %s56
      %s74 = sphi 0, %s74
      %s76 = sphi 0, %s74
      %s77 = sphi 0, %s76
      %s91 = sphi 0, %s77
      %s95 = sphi 0, %s95
      %s97 = sphi 0, %s95
      %s98 = sphi 0, %s97
      %s112 = sphi 0, %s98
      %s116 = sphi 0, %s116
      %s118 = sphi 0, %s116
      %s119 = sphi 0, %s118
      %s133 = sphi 0, %s119
      %s137 = sphi 0, %s137
      %s139 = sphi 0, %s137
      %s140 = sphi 0, %s139
      %s154 = sphi 0, %s140
      %s158 = sphi 0, %s158
      %s160 = sphi 0, %s158
      %s161 = sphi 0, %s160
      %s175 = sphi 0, %s161
      %s179 = sphi 0, %s179
      %s181 = sphi 0, %s179
      %s182 = sphi 0, %s181
      %s196 = sphi 0, %s182
      %s200 = sphi 0, %s200
      %s202 = sphi 0, %s200
      %s203 = sphi 0, %s202
      %s217 = sphi 0, %s203
      %s221 = sphi 0, %s221
      %s223 = sphi 0, %s221
      %s224 = sphi 0, %s223
      %s238 = sphi 0, %s224
      %s244 = sphi 0, %s246
      %s247 = sphi 0, %s244
      %s248 = sphi 0, %s247
      %s264 = sphi 0, %s248
    $region4: #{resnet_forward.1} parent=1 // loop_header_branch
      %22 = sbr.rel (%p20) target = $region8
    $region5: #{resnet_forward.1} parent=1 // loop_body
      %s24 = ssub.s32 %s19, 1
      %s25 = ssub.s32 %s19, 2
      %s26 = sadd.s32 %s19, 1
      %s27 = ssub.s32 %s19, %s26
      %p28 = scmp.eq.s32.totalorder %s27, 0
      %s30 = sadd.s32 %s29, 1
      %s31 = scalar_select %p28, %s29, %s30
      %p34 = pneg %p28
      %p35 = scmp.eq.s32.totalorder %s19, 1
      %p36 = por %p34, %p35
      %p37 = scmp.ne.s32.totalorder %s29, %s32
      %p38 = scmp.eq.s32.totalorder %s19, 0
      %p39 = por %p37, %p38
      %p40 = scmp.ne.s32.totalorder %s29, %s32
      %p41 = scmp.eq.s32.totalorder %s24, 1
      %p42 = por %p40, %p41
      %p43 = scmp.ne.s32.totalorder %s32, %s33
      %p44 = scmp.eq.s32.totalorder %s24, 0
      %p45 = por %p43, %p44
      %p46 = scmp.ne.s32.totalorder %s32, %s33
      %p47 = scmp.eq.s32.totalorder %s25, 1
      %p48 = por %p46, %p47
      %p50 = scmp.ne.s32.totalorder %s33, %s49
      %p51 = scmp.eq.s32.totalorder %s25, 0
      %p52 = por %p50, %p51
      %s54 = sadd.s32 %s53, 1
      %p57 = scmp.eq.s32.totalorder %s19, 1
      %p58 = scmp.ne.s32.totalorder %s53, %s55
      %p59 = scmp.eq.s32.totalorder %s19, 0
      %p60 = por %p58, %p59
      %p61 = scmp.ne.s32.totalorder %s53, %s55
      %p62 = scmp.eq.s32.totalorder %s24, 1
      %p63 = por %p61, %p62
      %p64 = scmp.ne.s32.totalorder %s55, %s56
      %p65 = scmp.eq.s32.totalorder %s24, 0
      %p66 = por %p64, %p65
      %p67 = scmp.ne.s32.totalorder %s55, %s56
      %p68 = scmp.eq.s32.totalorder %s25, 1
      %p69 = por %p67, %p68
      %p71 = scmp.ne.s32.totalorder %s56, %s70
      %p72 = scmp.eq.s32.totalorder %s25, 0
      %p73 = por %p71, %p72
      %s75 = sadd.s32 %s74, 1
      %p78 = scmp.eq.s32.totalorder %s19, 1
      %p79 = scmp.ne.s32.totalorder %s74, %s76
      %p80 = scmp.eq.s32.totalorder %s19, 0
      %p81 = por %p79, %p80
      %p82 = scmp.ne.s32.totalorder %s74, %s76
      %p83 = scmp.eq.s32.totalorder %s24, 1
      %p84 = por %p82, %p83
      %p85 = scmp.ne.s32.totalorder %s76, %s77
      %p86 = scmp.eq.s32.totalorder %s24, 0
      %p87 = por %p85, %p86
      %p88 = scmp.ne.s32.totalorder %s76, %s77
      %p89 = scmp.eq.s32.totalorder %s25, 1
      %p90 = por %p88, %p89
      %p92 = scmp.ne.s32.totalorder %s77, %s91
      %p93 = scmp.eq.s32.totalorder %s25, 0
      %p94 = por %p92, %p93
      %s96 = sadd.s32 %s95, 1
      %p99 = scmp.eq.s32.totalorder %s19, 1
      %p100 = scmp.ne.s32.totalorder %s95, %s97
      %p101 = scmp.eq.s32.totalorder %s19, 0
      %p102 = por %p100, %p101
      %p103 = scmp.ne.s32.totalorder %s95, %s97
      %p104 = scmp.eq.s32.totalorder %s24, 1
      %p105 = por %p103, %p104
      %p106 = scmp.ne.s32.totalorder %s97, %s98
      %p107 = scmp.eq.s32.totalorder %s24, 0
      %p108 = por %p106, %p107
      %p109 = scmp.ne.s32.totalorder %s97, %s98
      %p110 = scmp.eq.s32.totalorder %s25, 1
      %p111 = por %p109, %p110
      %p113 = scmp.ne.s32.totalorder %s98, %s112
      %p114 = scmp.eq.s32.totalorder %s25, 0
      %p115 = por %p113, %p114
      %s117 = sadd.s32 %s116, 1
      %p120 = scmp.eq.s32.totalorder %s19, 1
      %p121 = scmp.ne.s32.totalorder %s116, %s118
      %p122 = scmp.eq.s32.totalorder %s19, 0
      %p123 = por %p121, %p122
      %p124 = scmp.ne.s32.totalorder %s116, %s118
      %p125 = scmp.eq.s32.totalorder %s24, 1
      %p126 = por %p124, %p125
      %p127 = scmp.ne.s32.totalorder %s118, %s119
      %p128 = scmp.eq.s32.totalorder %s24, 0
      %p129 = por %p127, %p128
      %p130 = scmp.ne.s32.totalorder %s118, %s119
      %p131 = scmp.eq.s32.totalorder %s25, 1
      %p132 = por %p130, %p131
      %p134 = scmp.ne.s32.totalorder %s119, %s133
      %p135 = scmp.eq.s32.totalorder %s25, 0
      %p136 = por %p134, %p135
      %s138 = sadd.s32 %s137, 1
      %p141 = scmp.eq.s32.totalorder %s19, 1
      %p142 = scmp.ne.s32.totalorder %s137, %s139
      %p143 = scmp.eq.s32.totalorder %s19, 0
      %p144 = por %p142, %p143
      %p145 = scmp.ne.s32.totalorder %s137, %s139
      %p146 = scmp.eq.s32.totalorder %s24, 1
      %p147 = por %p145, %p146
      %p148 = scmp.ne.s32.totalorder %s139, %s140
      %p149 = scmp.eq.s32.totalorder %s24, 0
      %p150 = por %p148, %p149
      %p151 = scmp.ne.s32.totalorder %s139, %s140
      %p152 = scmp.eq.s32.totalorder %s25, 1
      %p153 = por %p151, %p152
      %p155 = scmp.ne.s32.totalorder %s140, %s154
      %p156 = scmp.eq.s32.totalorder %s25, 0
      %p157 = por %p155, %p156
      %s159 = sadd.s32 %s158, 1
      %p162 = scmp.eq.s32.totalorder %s19, 1
      %p163 = scmp.ne.s32.totalorder %s158, %s160
      %p164 = scmp.eq.s32.totalorder %s19, 0
      %p165 = por %p163, %p164
      %p166 = scmp.ne.s32.totalorder %s158, %s160
      %p167 = scmp.eq.s32.totalorder %s24, 1
      %p168 = por %p166, %p167
      %p169 = scmp.ne.s32.totalorder %s160, %s161
      %p170 = scmp.eq.s32.totalorder %s24, 0
      %p171 = por %p169, %p170
      %p172 = scmp.ne.s32.totalorder %s160, %s161
      %p173 = scmp.eq.s32.totalorder %s25, 1
      %p174 = por %p172, %p173
      %p176 = scmp.ne.s32.totalorder %s161, %s175
      %p177 = scmp.eq.s32.totalorder %s25, 0
      %p178 = por %p176, %p177
      %s180 = sadd.s32 %s179, 1
      %p183 = scmp.eq.s32.totalorder %s19, 1
      %p184 = scmp.ne.s32.totalorder %s179, %s181
      %p185 = scmp.eq.s32.totalorder %s19, 0
      %p186 = por %p184, %p185
      %p187 = scmp.ne.s32.totalorder %s179, %s181
      %p188 = scmp.eq.s32.totalorder %s24, 1
      %p189 = por %p187, %p188
      %p190 = scmp.ne.s32.totalorder %s181, %s182
      %p191 = scmp.eq.s32.totalorder %s24, 0
      %p192 = por %p190, %p191
      %p193 = scmp.ne.s32.totalorder %s181, %s182
      %p194 = scmp.eq.s32.totalorder %s25, 1
      %p195 = por %p193, %p194
      %p197 = scmp.ne.s32.totalorder %s182, %s196
      %p198 = scmp.eq.s32.totalorder %s25, 0
      %p199 = por %p197, %p198
      %s201 = sadd.s32 %s200, 1
      %p204 = scmp.eq.s32.totalorder %s19, 1
      %p205 = scmp.ne.s32.totalorder %s200, %s202
      %p206 = scmp.eq.s32.totalorder %s19, 0
      %p207 = por %p205, %p206
      %p208 = scmp.ne.s32.totalorder %s200, %s202
      %p209 = scmp.eq.s32.totalorder %s24, 1
      %p210 = por %p208, %p209
      %p211 = scmp.ne.s32.totalorder %s202, %s203
      %p212 = scmp.eq.s32.totalorder %s24, 0
      %p213 = por %p211, %p212
      %p214 = scmp.ne.s32.totalorder %s202, %s203
      %p215 = scmp.eq.s32.totalorder %s25, 1
      %p216 = por %p214, %p215
      %p218 = scmp.ne.s32.totalorder %s203, %s217
      %p219 = scmp.eq.s32.totalorder %s25, 0
      %p220 = por %p218, %p219
      %s222 = sadd.s32 %s221, 1
      %p225 = scmp.eq.s32.totalorder %s19, 1
      %p226 = scmp.ne.s32.totalorder %s221, %s223
      %p227 = scmp.eq.s32.totalorder %s19, 0
      %p228 = por %p226, %p227
      %p229 = scmp.ne.s32.totalorder %s221, %s223
      %p230 = scmp.eq.s32.totalorder %s24, 1
      %p231 = por %p229, %p230
      %p232 = scmp.ne.s32.totalorder %s223, %s224
      %p233 = scmp.eq.s32.totalorder %s24, 0
      %p234 = por %p232, %p233
      %p235 = scmp.ne.s32.totalorder %s223, %s224
      %p236 = scmp.eq.s32.totalorder %s25, 1
      %p237 = por %p235, %p236
      %p239 = scmp.ne.s32.totalorder %s224, %s238
      %p240 = scmp.eq.s32.totalorder %s25, 0
      %p241 = por %p239, %p240
      %s242 = ssub.s32 %s19, %s26
      %p243 = scmp.eq.s32.totalorder %s242, 0
      %s245 = sadd.s32 %s244, 1
      %s246 = scalar_select %p243, %s244, %s245
      %p249 = pneg %p243
      %p250 = scmp.eq.s32.totalorder %s19, 1
      %p251 = por %p249, %p250
      %p252 = scmp.ne.s32.totalorder %s244, %s247
      %p253 = scmp.eq.s32.totalorder %s19, 0
      %p254 = por %p252, %p253
      %p255 = scmp.ne.s32.totalorder %s244, %s247
      %p256 = scmp.eq.s32.totalorder %s24, 1
      %p257 = por %p255, %p256
      %p258 = scmp.ne.s32.totalorder %s247, %s248
      %p259 = scmp.eq.s32.totalorder %s24, 0
      %p260 = por %p258, %p259
      %p261 = scmp.ne.s32.totalorder %s247, %s248
      %p262 = scmp.eq.s32.totalorder %s25, 1
      %p263 = por %p261, %p262
      %p265 = scmp.ne.s32.totalorder %s248, %s264
      %p266 = scmp.eq.s32.totalorder %s25, 0
      %p267 = por %p265, %p266
      %p268 = scmp.le.s32.totalorder 1, %s19
      %p269 = scmp.lt.s32.totalorder %s19, 3
      %p270 = pnand %p268, %p269
      %p271 = pneg %p270
      // Predicated region
      $region9: #{resnet_forward.1} parent=5 // pred_check
        _
      $region10: #{resnet_forward.1} parent=5 // pred_check_branch
        %273 = sbr.rel (%p270) target = $region12
      $region11: #{resnet_forward.1} parent=5 // pred_region
        %s274 = ssub.s32 %s19, 1
        // Predicated region
        $region13: #{resnet_forward.1} parent=11 // pred_check
          %p275 = pneg %p66
        $region14: #{resnet_forward.1} parent=11 // pred_check_branch
          %277 = sbr.rel (%p275) target = $region16
        $region15: #{resnet_forward.1} parent=11 // pred_region
          _
        $region16: #{resnet_forward.1} parent=11 // pred_fallthru
          _
        // Predicated region
        $region17: #{resnet_forward.1} parent=11 // pred_check
          %p278 = pneg %p87
        $region18: #{resnet_forward.1} parent=11 // pred_check_branch
          %280 = sbr.rel (%p278) target = $region20
        $region19: #{resnet_forward.1} parent=11 // pred_region
          _
        $region20: #{resnet_forward.1} parent=11 // pred_fallthru
          _
        // Predicated region
        $region21: #{resnet_forward.1} parent=11 // pred_check
          %p281 = pneg %p108
        $region22: #{resnet_forward.1} parent=11 // pred_check_branch
          %283 = sbr.rel (%p281) target = $region24
        $region23: #{resnet_forward.1} parent=11 // pred_region
          _
        $region24: #{resnet_forward.1} parent=11 // pred_fallthru
          _
        // Predicated region
        $region25: #{resnet_forward.1} parent=11 // pred_check
          %p284 = pneg %p129
        $region26: #{resnet_forward.1} parent=11 // pred_check_branch
          %286 = sbr.rel (%p284) target = $region28
        $region27: #{resnet_forward.1} parent=11 // pred_region
          _
        $region28: #{resnet_forward.1} parent=11 // pred_fallthru
          _
        // Predicated region
        $region29: #{resnet_forward.1} parent=11 // pred_check
          %p287 = pneg %p150
        $region30: #{resnet_forward.1} parent=11 // pred_check_branch
          %289 = sbr.rel (%p287) target = $region32
        $region31: #{resnet_forward.1} parent=11 // pred_region
          _
        $region32: #{resnet_forward.1} parent=11 // pred_fallthru
          _
        // Predicated region
        $region33: #{resnet_forward.1} parent=11 // pred_check
          %p290 = pneg %p171
        $region34: #{resnet_forward.1} parent=11 // pred_check_branch
          %292 = sbr.rel (%p290) target = $region36
        $region35: #{resnet_forward.1} parent=11 // pred_region
          _
        $region36: #{resnet_forward.1} parent=11 // pred_fallthru
          _
        // Predicated region
        $region37: #{resnet_forward.1} parent=11 // pred_check
          %p293 = pneg %p192
        $region38: #{resnet_forward.1} parent=11 // pred_check_branch
          %295 = sbr.rel (%p293) target = $region40
        $region39: #{resnet_forward.1} parent=11 // pred_region
          _
        $region40: #{resnet_forward.1} parent=11 // pred_fallthru
          _
        // Predicated region
        $region41: #{resnet_forward.1} parent=11 // pred_check
          %p296 = pneg %p213
        $region42: #{resnet_forward.1} parent=11 // pred_check_branch
          %298 = sbr.rel (%p296) target = $region44
        $region43: #{resnet_forward.1} parent=11 // pred_region
          _
        $region44: #{resnet_forward.1} parent=11 // pred_fallthru
          _
        // Predicated region
        $region45: #{resnet_forward.1} parent=11 // pred_check
          %p299 = pneg %p234
        $region46: #{resnet_forward.1} parent=11 // pred_check_branch
          %301 = sbr.rel (%p299) target = $region48
        $region47: #{resnet_forward.1} parent=11 // pred_region
          _
        $region48: #{resnet_forward.1} parent=11 // pred_fallthru
          _
      $region12: #{resnet_forward.1} parent=5 // pred_fallthru
        _
      %p302 = scmp.lt.s32.totalorder %s19, 2
      // Predicated region
      $region49: #{resnet_forward.1} parent=5 // pred_check
        %p303 = pneg %p302
      $region50: #{resnet_forward.1} parent=5 // pred_check_branch
        %305 = sbr.rel (%p303) target = $region52
      $region51: #{resnet_forward.1} parent=5 // pred_region
        // Predicated region
        $region53: #{resnet_forward.1} parent=51 // pred_check
          %p306 = pneg %p39
        $region54: #{resnet_forward.1} parent=51 // pred_check_branch
          %308 = sbr.rel (%p306) target = $region56
        $region55: #{resnet_forward.1} parent=51 // pred_region
          %p309 = scmp.lt.s32.totalorder %s19, 1
          %s310 = scalar_select %p309, %s19, 1
          %s311 = smul.addr %s310, 3
          %s312 = smul.addr %s311, 8
          %s313 = scalar_lea.vmem %s0, %s312
        $region56: #{resnet_forward.1} parent=51 // pred_fallthru
          _
      $region52: #{resnet_forward.1} parent=5 // pred_fallthru
        _
      %p314 = scmp.le.s32.totalorder 1, %s19
      %p315 = scmp.lt.s32.totalorder %s19, 3
      %p316 = pnand %p314, %p315
      %p317 = pneg %p316
      // Predicated region
      $region57: #{resnet_forward.1} parent=5 // pred_check
        _
      $region58: #{resnet_forward.1} parent=5 // pred_check_branch
        %319 = sbr.rel (%p316) target = $region60
      $region59: #{resnet_forward.1} parent=5 // pred_region
        %s320 = ssub.s32 %s19, 1
        %p321 = scmp.lt.s32.totalorder %s24, 1
        %s322 = scalar_select %p321, %s24, 1
        %s323 = smul.addr %s322, 3
        %s324 = smul.addr %s323, 8
        %s325 = scalar_lea.vmem %s0, %s324
        %p326 = pneg %p45
        %p327 = pneg %p42
        %p328 = pneg %p66
        %p329 = pneg %p63
        %p330 = pneg %p87
        %p331 = pneg %p84
        %p332 = pneg %p108
        %p333 = pneg %p105
        %p334 = pneg %p129
        %p335 = pneg %p126
        %p336 = pneg %p150
        %p337 = pneg %p147
        %p338 = pneg %p171
        %p339 = pneg %p168
        %p340 = pneg %p192
        %p341 = pneg %p189
        %p342 = pneg %p213
        %p343 = pneg %p210
        %p344 = pneg %p234
        %p345 = pneg %p231
        %p346 = pneg %p260
        %p347 = pneg %p257
        %s348 = sand.u32 %s247, 1
        %s349 = scalar_lea.sflag [#allocation3], %s348
        %s350 = sand.u32 %s247, 1
        %s351 = scalar_lea.vmem [#allocation2], %s350
        %p352 = scmp.lt.s32.totalorder %s24, 1
        %s353 = scalar_select %p352, %s24, 1
        %s354 = smul.addr %s353, 3
        %s355 = smul.addr %s354, 8
        %s356 = scalar_lea.vmem %s0, %s355
        %v358 = vld [vmem:[%s356] sm:$0xff]
        %v359 = vld [vmem:[%s356 + $0x8] sm:$0xff]
        %v360 = vld [vmem:[%s356 + $0x10] sm:$0xf]
        %v361 = vpack.c.bf16 %v359, %v358
        %v362 = vld [vmem:[%s1] sm:$0xff]
        %v363 = vld [vmem:[%s1 + $0x8] sm:$0xff]
        %v364 = vld [vmem:[%s1 + $0x10] sm:$0xff]
        %v365 = vld [vmem:[%s1 + $0x18] sm:$0xff]
        %v366 = vld [vmem:[%s1 + $0x20] sm:$0xff]
        %v367 = vld [vmem:[%s1 + $0x28] sm:$0xff]
        %v368 = vld [vmem:[%s1 + $0x30] sm:$0xff]
        %v369 = vld [vmem:[%s1 + $0x38] sm:$0xff]
        %v370 = vld [vmem:[%s1 + $0x40] sm:$0xff]
        %v371 = vld [vmem:[%s1 + $0x48] sm:$0xff]
        %v372 = vpack.c.bf16 %v360, %v360
        %s373 = scalar_lea.vmem %s1, 80
        %v374 = vld [vmem:[%s373] sm:$0xff]
        %v375 = vld [vmem:[%s373 + $0x8] sm:$0xff]
        %v376 = vld [vmem:[%s373 + $0x10] sm:$0xff]
        %v377 = vld [vmem:[%s373 + $0x18] sm:$0xff]
        %v378 = vld [vmem:[%s373 + $0x20] sm:$0xff]
        %v379 = vld [vmem:[%s373 + $0x28] sm:$0xff]
        %v380 = vld [vmem:[%s373 + $0x30] sm:$0xff]
        %v381 = vld [vmem:[%s373 + $0x38] sm:$0xff]
        %v382 = vld [vmem:[%s373 + $0x40] sm:$0xff]
        %v383 = vld [vmem:[%s373 + $0x48] sm:$0xff]
        %vm384 = vsmask.f32 7424
        %v386 = vshrl.u32 %v361, 16
        %v388 = vshll.u32 %v361, 16
        %v390 = vrot.slane %v388, 1
        %v391 = vor.u32 %v386, %v390
        %v393 = vshll.u32 %v372, 16
        %v395 = vrot.slane %v393, 1
        %v396 = vsel %vm384, %v391, %v395
        %v407 = vunpack.c.l.b16 %v374
        %v408 = vunpack.c.h.b16 %v374
        %v409 = vunpack.c.l.b16 %v375
        %v410 = vunpack.c.h.b16 %v375
        %v411 = vunpack.c.l.b16 %v376
        %v412 = vunpack.c.h.b16 %v376
        %v413 = vunpack.c.l.b16 %v377
        %v414 = vunpack.c.h.b16 %v377
        %v415 = vunpack.c.l.b16 %v378
        %v416 = vunpack.c.h.b16 %v378
        %v417 = vunpack.c.l.b16 %v379
        %v418 = vunpack.c.h.b16 %v379
        %v419 = vunpack.c.l.b16 %v380
        %v420 = vunpack.c.h.b16 %v380
        %v421 = vunpack.c.l.b16 %v381
        %v422 = vunpack.c.h.b16 %v381
        %v423 = vunpack.c.l.b16 %v382
        %v424 = vunpack.c.h.b16 %v382
        %v425 = vunpack.c.l.b16 %v383
        %v426 = vunpack.c.h.b16 %v383
        %v427 = vpack.c.b16 %v409, %v407
        %v428 = vpack.c.b16 %v410, %v408
        %v429 = vpack.c.b16 %v413, %v411
        %v430 = vpack.c.b16 %v414, %v412
        %v431 = vpack.c.b16 %v417, %v415
        %v432 = vpack.c.b16 %v418, %v416
        %v433 = vpack.c.b16 %v421, %v419
        %v434 = vpack.c.b16 %v422, %v420
        %v435 = vpack.c.b16 %v425, %v423
        %v436 = vpack.c.b16 %v426, %v424
        %vm447 = vcmask 654336
        %v449 = vsel %vm447, %v396, 0
        %451 = vmatpush.bf16.msra.mxu0 0
        %452 = vmatpush.bf16.msra.mxu0 0
        %453 = vmatpush.bf16.msra.mxu0 0
        %454 = vmatpush.bf16.msra.mxu0 %v435
        %455 = vmatpush.bf16.msra.mxu0 %v433
        %456 = vmatpush.bf16.msra.mxu0 %v431
        %457 = vmatpush.bf16.msra.mxu0 %v429
        %458 = vmatpush.bf16.msra.mxu0 %v427
        %459 = vmatmul.bf16.gmra.mxu0 %v449
        %v460 = vpop.f32.mrf.mxu0
        %v461 = vadd.f32 0.0, %v460
        %v462 = vpop.f32.mrf.mxu0
        %v463 = vadd.f32 0.0, %v462
        %464 = vdwg.mxu0
        %465 = vmatpush.bf16.msra.mxu0 0
        %466 = vmatpush.bf16.msra.mxu0 0
        %467 = vmatpush.bf16.msra.mxu0 0
        %468 = vmatpush.bf16.msra.mxu0 %v436
        %469 = vmatpush.bf16.msra.mxu0 %v434
        %470 = vmatpush.bf16.msra.mxu0 %v432
        %471 = vmatpush.bf16.msra.mxu0 %v430
        %472 = vmatpush.bf16.msra.mxu0 %v428
        %473 = vmatmul.bf16.gmra.mxu0 %v449
        %v474 = vpop.f32.mrf.mxu0
        %v475 = vadd.f32 0.0, %v474
        %v476 = vpop.f32.mrf.mxu0
        %v477 = vadd.f32 0.0, %v476
        %478 = vdwg.mxu0
        %v489 = vunpack.c.l.b16 %v362
        %v490 = vunpack.c.h.b16 %v362
        %v491 = vunpack.c.l.b16 %v363
        %v492 = vunpack.c.h.b16 %v363
        %v493 = vunpack.c.l.b16 %v364
        %v494 = vunpack.c.h.b16 %v364
        %v495 = vunpack.c.l.b16 %v365
        %v496 = vunpack.c.h.b16 %v365
        %v497 = vunpack.c.l.b16 %v366
        %v498 = vunpack.c.h.b16 %v366
        %v499 = vunpack.c.l.b16 %v367
        %v500 = vunpack.c.h.b16 %v367
        %v501 = vunpack.c.l.b16 %v368
        %v502 = vunpack.c.h.b16 %v368
        %v503 = vunpack.c.l.b16 %v369
        %v504 = vunpack.c.h.b16 %v369
        %v505 = vunpack.c.l.b16 %v370
        %v506 = vunpack.c.h.b16 %v370
        %v507 = vunpack.c.l.b16 %v371
        %v508 = vunpack.c.h.b16 %v371
        %v509 = vpack.c.b16 %v491, %v489
        %v510 = vpack.c.b16 %v492, %v490
        %v511 = vpack.c.b16 %v495, %v493
        %v512 = vpack.c.b16 %v496, %v494
        %v513 = vpack.c.b16 %v499, %v497
        %v514 = vpack.c.b16 %v500, %v498
        %v515 = vpack.c.b16 %v503, %v501
        %v516 = vpack.c.b16 %v504, %v502
        %v517 = vpack.c.b16 %v507, %v505
        %v518 = vpack.c.b16 %v508, %v506
        %v529 = vsel %vm447, %v361, 0
        %531 = vmatpush.bf16.msra.mxu0 0
        %532 = vmatpush.bf16.msra.mxu0 0
        %533 = vmatpush.bf16.msra.mxu0 0
        %534 = vmatpush.bf16.msra.mxu0 %v517
        %535 = vmatpush.bf16.msra.mxu0 %v515
        %536 = vmatpush.bf16.msra.mxu0 %v513
        %537 = vmatpush.bf16.msra.mxu0 %v511
        %538 = vmatpush.bf16.msra.mxu0 %v509
        %539 = vmatmul.bf16.gmra.mxu0 %v529
        %v540 = vpop.f32.mrf.mxu0
        %v541 = vadd.f32 %v461, %v540
        %v542 = vpop.f32.mrf.mxu0
        %v543 = vadd.f32 %v463, %v542
        %544 = vdwg.mxu0
        %545 = vmatpush.bf16.msra.mxu0 0
        %546 = vmatpush.bf16.msra.mxu0 0
        %547 = vmatpush.bf16.msra.mxu0 0
        %548 = vmatpush.bf16.msra.mxu0 %v518
        %549 = vmatpush.bf16.msra.mxu0 %v516
        %550 = vmatpush.bf16.msra.mxu0 %v514
        %551 = vmatpush.bf16.msra.mxu0 %v512
        %552 = vmatpush.bf16.msra.mxu0 %v510
        %553 = vmatmul.bf16.gmra.mxu0 %v529
        %v554 = vpop.f32.mrf.mxu0
        %v555 = vadd.f32 %v475, %v554
        %v556 = vpop.f32.mrf.mxu0
        %v557 = vadd.f32 %v477, %v556
        %558 = vdwg.mxu0
        %s559 = scalar_lea.vmem %s1, 160
        %v560 = vld [vmem:[%s559] sm:$0xff]
        %v561 = vld [vmem:[%s559 + $0x8] sm:$0xff]
        %v562 = vld [vmem:[%s559 + $0x10] sm:$0xff]
        %v563 = vld [vmem:[%s559 + $0x18] sm:$0xff]
        %v564 = vld [vmem:[%s559 + $0x20] sm:$0xff]
        %v565 = vld [vmem:[%s559 + $0x28] sm:$0xff]
        %v566 = vld [vmem:[%s559 + $0x30] sm:$0xff]
        %v567 = vld [vmem:[%s559 + $0x38] sm:$0xff]
        %v568 = vld [vmem:[%s559 + $0x40] sm:$0xff]
        %v569 = vld [vmem:[%s559 + $0x48] sm:$0xff]
        %vm572 = vcmask 1046528
        %v573 = vrot.slane %v361, 1
        %v574 = vrot.slane %v372, 1
        %v575 = vsel %vm572, %v573, %v574
        %v586 = vunpack.c.l.b16 %v560
        %v587 = vunpack.c.h.b16 %v560
        %v588 = vunpack.c.l.b16 %v561
        %v589 = vunpack.c.h.b16 %v561
        %v590 = vunpack.c.l.b16 %v562
        %v591 = vunpack.c.h.b16 %v562
        %v592 = vunpack.c.l.b16 %v563
        %v593 = vunpack.c.h.b16 %v563
        %v594 = vunpack.c.l.b16 %v564
        %v595 = vunpack.c.h.b16 %v564
        %v596 = vunpack.c.l.b16 %v565
        %v597 = vunpack.c.h.b16 %v565
        %v598 = vunpack.c.l.b16 %v566
        %v599 = vunpack.c.h.b16 %v566
        %v600 = vunpack.c.l.b16 %v567
        %v601 = vunpack.c.h.b16 %v567
        %v602 = vunpack.c.l.b16 %v568
        %v603 = vunpack.c.h.b16 %v568
        %v604 = vunpack.c.l.b16 %v569
        %v605 = vunpack.c.h.b16 %v569
        %v606 = vpack.c.b16 %v588, %v586
        %v607 = vpack.c.b16 %v589, %v587
        %v608 = vpack.c.b16 %v592, %v590
        %v609 = vpack.c.b16 %v593, %v591
        %v610 = vpack.c.b16 %v596, %v594
        %v611 = vpack.c.b16 %v597, %v595
        %v612 = vpack.c.b16 %v600, %v598
        %v613 = vpack.c.b16 %v601, %v599
        %v614 = vpack.c.b16 %v604, %v602
        %v615 = vpack.c.b16 %v605, %v603
        %v627 = vsel %vm447, %v575, 0
        %629 = vmatpush.bf16.msra.mxu0 0
        %630 = vmatpush.bf16.msra.mxu0 0
        %631 = vmatpush.bf16.msra.mxu0 0
        %632 = vmatpush.bf16.msra.mxu0 %v614
        %633 = vmatpush.bf16.msra.mxu0 %v612
        %634 = vmatpush.bf16.msra.mxu0 %v610
        %635 = vmatpush.bf16.msra.mxu0 %v608
        %636 = vmatpush.bf16.msra.mxu0 %v606
        %637 = vmatmul.bf16.gmra.mxu0 %v627
        %v638 = vpop.f32.mrf.mxu0
        %v639 = vadd.f32 0.0, %v638
        %v640 = vpop.f32.mrf.mxu0
        %v641 = vadd.f32 0.0, %v640
        %642 = vdwg.mxu0
        %643 = vmatpush.bf16.msra.mxu0 0
        %644 = vmatpush.bf16.msra.mxu0 0
        %645 = vmatpush.bf16.msra.mxu0 0
        %646 = vmatpush.bf16.msra.mxu0 %v615
        %647 = vmatpush.bf16.msra.mxu0 %v613
        %648 = vmatpush.bf16.msra.mxu0 %v611
        %649 = vmatpush.bf16.msra.mxu0 %v609
        %650 = vmatpush.bf16.msra.mxu0 %v607
        %651 = vmatmul.bf16.gmra.mxu0 %v627
        %v652 = vpop.f32.mrf.mxu0
        %v653 = vadd.f32 0.0, %v652
        %v654 = vpop.f32.mrf.mxu0
        %v655 = vadd.f32 0.0, %v654
        %656 = vdwg.mxu0
        %v657 = vadd.f32 %v541, %v639
        %v658 = vadd.f32 %v555, %v653
        %v659 = vadd.f32 %v543, %v641
        %v660 = vadd.f32 %v557, %v655
        %s661 = scalar_lea.vmem %s1, 240
        %v662 = vld [vmem:[%s661] sm:$0xff]
        %v663 = vld [vmem:[%s661 + $0x8] sm:$0xff]
        %v664 = vld [vmem:[%s661 + $0x10] sm:$0xff]
        %v665 = vld [vmem:[%s661 + $0x18] sm:$0xff]
        %v666 = vld [vmem:[%s661 + $0x20] sm:$0xff]
        %v667 = vld [vmem:[%s661 + $0x28] sm:$0xff]
        %v668 = vld [vmem:[%s661 + $0x30] sm:$0xff]
        %v669 = vld [vmem:[%s661 + $0x38] sm:$0xff]
        %v670 = vld [vmem:[%s661 + $0x40] sm:$0xff]
        %v671 = vld [vmem:[%s661 + $0x48] sm:$0xff]
        %vm672 = vsmask.f32 6400
        %v673 = vrot.slane %v386, 1
        %v674 = vrot.slane %v388, 2
        %v675 = vor.u32 %v673, %v674
        %v676 = vshrl.u32 %v372, 16
        %v678 = vrot.slane %v676, 1
        %v679 = vrot.slane %v393, 2
        %v680 = vor.u32 %v678, %v679
        %v681 = vsel %vm672, %v675, %v680
        %v692 = vunpack.c.l.b16 %v662
        %v693 = vunpack.c.h.b16 %v662
        %v694 = vunpack.c.l.b16 %v663
        %v695 = vunpack.c.h.b16 %v663
        %v696 = vunpack.c.l.b16 %v664
        %v697 = vunpack.c.h.b16 %v664
        %v698 = vunpack.c.l.b16 %v665
        %v699 = vunpack.c.h.b16 %v665
        %v700 = vunpack.c.l.b16 %v666
        %v701 = vunpack.c.h.b16 %v666
        %v702 = vunpack.c.l.b16 %v667
        %v703 = vunpack.c.h.b16 %v667
        %v704 = vunpack.c.l.b16 %v668
        %v705 = vunpack.c.h.b16 %v668
        %v706 = vunpack.c.l.b16 %v669
        %v707 = vunpack.c.h.b16 %v669
        %v708 = vunpack.c.l.b16 %v670
        %v709 = vunpack.c.h.b16 %v670
        %v710 = vunpack.c.l.b16 %v671
        %v711 = vunpack.c.h.b16 %v671
        %v712 = vpack.c.b16 %v694, %v692
        %v713 = vpack.c.b16 %v695, %v693
        %v714 = vpack.c.b16 %v698, %v696
        %v715 = vpack.c.b16 %v699, %v697
        %v716 = vpack.c.b16 %v702, %v700
        %v717 = vpack.c.b16 %v703, %v701
        %v718 = vpack.c.b16 %v706, %v704
        %v719 = vpack.c.b16 %v707, %v705
        %v720 = vpack.c.b16 %v710, %v708
        %v721 = vpack.c.b16 %v711, %v709
        %v733 = vsel %vm447, %v681, 0
        %735 = vmatpush.bf16.msra.mxu0 0
        %736 = vmatpush.bf16.msra.mxu0 0
        %737 = vmatpush.bf16.msra.mxu0 0
        %738 = vmatpush.bf16.msra.mxu0 %v720
        %739 = vmatpush.bf16.msra.mxu0 %v718
        %740 = vmatpush.bf16.msra.mxu0 %v716
        %741 = vmatpush.bf16.msra.mxu0 %v714
        %742 = vmatpush.bf16.msra.mxu0 %v712
        %743 = vmatmul.bf16.gmra.mxu0 %v733
        %v744 = vpop.f32.mrf.mxu0
        %v745 = vadd.f32 0.0, %v744
        %v746 = vpop.f32.mrf.mxu0
        %v747 = vadd.f32 0.0, %v746
        %748 = vdwg.mxu0
        %749 = vmatpush.bf16.msra.mxu0 0
        %750 = vmatpush.bf16.msra.mxu0 0
        %751 = vmatpush.bf16.msra.mxu0 0
        %752 = vmatpush.bf16.msra.mxu0 %v721
        %753 = vmatpush.bf16.msra.mxu0 %v719
        %754 = vmatpush.bf16.msra.mxu0 %v717
        %755 = vmatpush.bf16.msra.mxu0 %v715
        %756 = vmatpush.bf16.msra.mxu0 %v713
        %757 = vmatmul.bf16.gmra.mxu0 %v733
        %v758 = vpop.f32.mrf.mxu0
        %v759 = vadd.f32 0.0, %v758
        %v760 = vpop.f32.mrf.mxu0
        %v761 = vadd.f32 0.0, %v760
        %762 = vdwg.mxu0
        %v763 = vadd.f32 %v657, %v745
        %v764 = vadd.f32 %v658, %v759
        %v765 = vadd.f32 %v659, %v747
        %v766 = vadd.f32 %v660, %v761
        %s767 = scalar_lea.vmem %s1, 320
        %v768 = vld [vmem:[%s767] sm:$0xff]
        %v769 = vld [vmem:[%s767 + $0x8] sm:$0xff]
        %v770 = vld [vmem:[%s767 + $0x10] sm:$0xff]
        %v771 = vld [vmem:[%s767 + $0x18] sm:$0xff]
        %v772 = vld [vmem:[%s767 + $0x20] sm:$0xff]
        %v773 = vld [vmem:[%s767 + $0x28] sm:$0xff]
        %v774 = vld [vmem:[%s767 + $0x30] sm:$0xff]
        %v775 = vld [vmem:[%s767 + $0x38] sm:$0xff]
        %v776 = vld [vmem:[%s767 + $0x40] sm:$0xff]
        %v777 = vld [vmem:[%s767 + $0x48] sm:$0xff]
        %vm778 = vcmask 1045504
        %v779 = vrot.slane %v361, 2
        %v780 = vrot.slane %v372, 2
        %v781 = vsel %vm778, %v779, %v780
        %v792 = vunpack.c.l.b16 %v768
        %v793 = vunpack.c.h.b16 %v768
        %v794 = vunpack.c.l.b16 %v769
        %v795 = vunpack.c.h.b16 %v769
        %v796 = vunpack.c.l.b16 %v770
        %v797 = vunpack.c.h.b16 %v770
        %v798 = vunpack.c.l.b16 %v771
        %v799 = vunpack.c.h.b16 %v771
        %v800 = vunpack.c.l.b16 %v772
        %v801 = vunpack.c.h.b16 %v772
        %v802 = vunpack.c.l.b16 %v773
        %v803 = vunpack.c.h.b16 %v773
        %v804 = vunpack.c.l.b16 %v774
        %v805 = vunpack.c.h.b16 %v774
        %v806 = vunpack.c.l.b16 %v775
        %v807 = vunpack.c.h.b16 %v775
        %v808 = vunpack.c.l.b16 %v776
        %v809 = vunpack.c.h.b16 %v776
        %v810 = vunpack.c.l.b16 %v777
        %v811 = vunpack.c.h.b16 %v777
        %v812 = vpack.c.b16 %v794, %v792
        %v813 = vpack.c.b16 %v795, %v793
        %v814 = vpack.c.b16 %v798, %v796
        %v815 = vpack.c.b16 %v799, %v797
        %v816 = vpack.c.b16 %v802, %v800
        %v817 = vpack.c.b16 %v803, %v801
        %v818 = vpack.c.b16 %v806, %v804
        %v819 = vpack.c.b16 %v807, %v805
        %v820 = vpack.c.b16 %v810, %v808
        %v821 = vpack.c.b16 %v811, %v809
        %v833 = vsel %vm447, %v781, 0
        %835 = vmatpush.bf16.msra.mxu0 0
        %836 = vmatpush.bf16.msra.mxu0 0
        %837 = vmatpush.bf16.msra.mxu0 0
        %838 = vmatpush.bf16.msra.mxu0 %v820
        %839 = vmatpush.bf16.msra.mxu0 %v818
        %840 = vmatpush.bf16.msra.mxu0 %v816
        %841 = vmatpush.bf16.msra.mxu0 %v814
        %842 = vmatpush.bf16.msra.mxu0 %v812
        %843 = vmatmul.bf16.gmra.mxu0 %v833
        %v844 = vpop.f32.mrf.mxu0
        %v845 = vadd.f32 0.0, %v844
        %v846 = vpop.f32.mrf.mxu0
        %v847 = vadd.f32 0.0, %v846
        %848 = vdwg.mxu0
        %849 = vmatpush.bf16.msra.mxu0 0
        %850 = vmatpush.bf16.msra.mxu0 0
        %851 = vmatpush.bf16.msra.mxu0 0
        %852 = vmatpush.bf16.msra.mxu0 %v821
        %853 = vmatpush.bf16.msra.mxu0 %v819
        %854 = vmatpush.bf16.msra.mxu0 %v817
        %855 = vmatpush.bf16.msra.mxu0 %v815
        %856 = vmatpush.bf16.msra.mxu0 %v813
        %857 = vmatmul.bf16.gmra.mxu0 %v833
        %v858 = vpop.f32.mrf.mxu0
        %v859 = vadd.f32 0.0, %v858
        %v860 = vpop.f32.mrf.mxu0
        %v861 = vadd.f32 0.0, %v860
        %862 = vdwg.mxu0
        %v863 = vadd.f32 %v763, %v845
        %v864 = vadd.f32 %v764, %v859
        %v865 = vadd.f32 %v765, %v847
        %v866 = vadd.f32 %v766, %v861
        %v867 = vld [vmem:[%s2] sm:$0x3]
        %v869 = vperm.slane %v867, 0
        %v870 = vperm.slane %v867, 1
        %v873 = vadd.f32 %v863, %v869
        %v874 = vadd.f32 %v864, %v870
        %v875 = vadd.f32 %v865, %v869
        %v876 = vadd.f32 %v866, %v870
        %881 = vrot.lane.b32.xlu0 %v873, 10
        %v882 = vpop.permute.xlu0 %881
        %883 = vrot.lane.b32.xlu0 %v874, 10
        %v884 = vpop.permute.xlu0 %883
        %885 = vrot.lane.b32.xlu0 %v875, 10
        %v886 = vpop.permute.xlu0 %885
        %887 = vrot.lane.b32.xlu0 %v876, 10
        %v888 = vpop.permute.xlu0 %887
        %vm889 = vcmask 80896
        %v890 = vsel %vm889, %v882, %v884
        %v891 = vsel %vm889, %v886, %v888
        %v896 = vsel %vm889, -inf, %v882
        %v897 = vsel %vm889, -inf, %v886
        %vm898 = vcmask 343040
        %v899 = vsel %vm898, %v890, -inf
        %v900 = vsel %vm898, %v891, -inf
        %vm905 = vcmask 1040384
        %v906 = vrot.slane %v896, 7
        %v907 = vrot.slane %v899, 7
        %v908 = vrot.slane %v897, 7
        %v909 = vsel %vm905, %v906, %v908
        %v910 = vrot.slane %v900, 7
        %v911 = vsel %vm905, %v907, %v910
        %v918 = vsel %vm905, -inf, %v906
        %v919 = vsel %vm905, -inf, %v907
        %v920 = vsel %vm905, %v908, -inf
        %v921 = vsel %vm905, %v910, -inf
        %926 = vrot.lane.b32.xlu0 %v918, 118
        %v927 = vpop.permute.xlu0 %926
        %928 = vrot.lane.b32.xlu0 %v919, 118
        %v929 = vpop.permute.xlu0 %928
        %930 = vrot.lane.b32.xlu0 %v909, 118
        %v931 = vpop.permute.xlu0 %930
        %932 = vrot.lane.b32.xlu0 %v911, 118
        %v933 = vpop.permute.xlu0 %932
        %934 = vrot.lane.b32.xlu0 %v920, 118
        %v935 = vpop.permute.xlu0 %934
        %936 = vrot.lane.b32.xlu0 %v921, 118
        %v937 = vpop.permute.xlu0 %936
        %vm938 = vcmask 965632
        %v939 = vsel %vm938, %v927, %v929
        %v940 = vsel %vm938, %v931, %v933
        %v941 = vsel %vm938, %v935, %v937
        %v948 = vmax.f32 %v918, %v939
        %v949 = vmax.f32 %v919, %v929
        %v950 = vmax.f32 %v909, %v940
        %v951 = vmax.f32 %v911, %v933
        %v952 = vmax.f32 %v920, %v941
        %v953 = vmax.f32 %v921, %v937
        %vm960 = vcmask 1046528
        %v961 = vrot.slane %v948, 1
        %v962 = vrot.slane %v950, 1
        %v963 = vsel %vm960, %v961, %v962
        %v964 = vrot.slane %v949, 1
        %v965 = vrot.slane %v951, 1
        %v966 = vsel %vm960, %v964, %v965
        %v967 = vrot.slane %v952, 1
        %v968 = vsel %vm960, %v962, %v967
        %v969 = vrot.slane %v953, 1
        %v970 = vsel %vm960, %v965, %v969
        %v977 = vmax.f32 %v948, %v963
        %v978 = vmax.f32 %v949, %v966
        %v979 = vmax.f32 %v950, %v968
        %v980 = vmax.f32 %v951, %v970
        %v981 = vmax.f32 %v952, %v967
        %v982 = vmax.f32 %v953, %v969
        %v983 = vmax.f32 %v977, 0.0
        %v984 = vmax.f32 %v978, 0.0
        %v985 = vmax.f32 %v979, 0.0
        %v986 = vmax.f32 %v980, 0.0
        %v987 = vmax.f32 %v981, 0.0
        %v988 = vmax.f32 %v982, 0.0
        %v989 = vpack.c.bf16 %v985, %v983
        %v990 = vpack.c.bf16 %v986, %v984
        %v991 = vld [vmem:[%s3] sm:$0xff]
        %v992 = vld [vmem:[%s3 + $0x8] sm:$0xf]
        %v993 = vld [vmem:[%s3 + $0xc] sm:$0xff]
        %v994 = vld [vmem:[%s3 + $0x14] sm:$0xf]
        %v995 = vld [vmem:[%s3 + $0x18] sm:$0xff]
        %v996 = vld [vmem:[%s3 + $0x20] sm:$0xf]
        %v997 = vld [vmem:[%s3 + $0x24] sm:$0xff]
        %v998 = vld [vmem:[%s3 + $0x2c] sm:$0xf]
        %v999 = vld [vmem:[%s3 + $0x30] sm:$0xff]
        %v1000 = vld [vmem:[%s3 + $0x38] sm:$0xf]
        %v1001 = vld [vmem:[%s3 + $0x3c] sm:$0xff]
        %v1002 = vld [vmem:[%s3 + $0x44] sm:$0xf]
        %v1003 = vld [vmem:[%s3 + $0x48] sm:$0xff]
        %v1004 = vld [vmem:[%s3 + $0x50] sm:$0xf]
        %v1005 = vld [vmem:[%s3 + $0x54] sm:$0xff]
        %v1006 = vld [vmem:[%s3 + $0x5c] sm:$0xf]
        %v1007 = vld [vmem:[%s3 + $0x60] sm:$0xff]
        %v1008 = vld [vmem:[%s3 + $0x68] sm:$0xf]
        %v1009 = vld [vmem:[%s3 + $0x6c] sm:$0xff]
        %v1010 = vld [vmem:[%s3 + $0x74] sm:$0xf]
        %v1011 = vld [vmem:[%s3 + $0x78] sm:$0xff]
        %v1012 = vld [vmem:[%s3 + $0x80] sm:$0xf]
        %v1013 = vld [vmem:[%s3 + $0x84] sm:$0xff]
        %v1014 = vld [vmem:[%s3 + $0x8c] sm:$0xf]
        %v1015 = vld [vmem:[%s3 + $0x90] sm:$0xff]
        %v1016 = vld [vmem:[%s3 + $0x98] sm:$0xf]
        %v1017 = vld [vmem:[%s3 + $0x9c] sm:$0xff]
        %v1018 = vld [vmem:[%s3 + $0xa4] sm:$0xf]
        %v1019 = vld [vmem:[%s3 + $0xa8] sm:$0xff]
        %v1020 = vld [vmem:[%s3 + $0xb0] sm:$0xf]
        %v1021 = vld [vmem:[%s3 + $0xb4] sm:$0xff]
        %v1022 = vld [vmem:[%s3 + $0xbc] sm:$0xf]
        %v1023 = vld [vmem:[%s3 + $0xc0] sm:$0xff]
        %v1024 = vld [vmem:[%s3 + $0xc8] sm:$0xf]
        %v1025 = vld [vmem:[%s3 + $0xcc] sm:$0xff]
        %v1026 = vld [vmem:[%s3 + $0xd4] sm:$0xf]
        %v1027 = vld [vmem:[%s3 + $0xd8] sm:$0xff]
        %v1028 = vld [vmem:[%s3 + $0xe0] sm:$0xf]
        %v1029 = vld [vmem:[%s3 + $0xe4] sm:$0xff]
        %v1030 = vld [vmem:[%s3 + $0xec] sm:$0xf]
        %v1031 = vld [vmem:[%s3 + $0xf0] sm:$0xff]
        %v1032 = vld [vmem:[%s3 + $0xf8] sm:$0xf]
        %v1033 = vld [vmem:[%s3 + $0xfc] sm:$0x11]
        %v1034 = vld [vmem:[%s3 + $0x104] sm:$0x1]
        %v1035 = vpack.c.bf16 %v987, %v987
        %v1036 = vpack.c.bf16 %v988, %v988
        %s1037 = scalar_lea.vmem %s3, 264
        %v1038 = vld [vmem:[%s1037] sm:$0xff]
        %v1039 = vld [vmem:[%s1037 + $0x8] sm:$0xf]
        %v1040 = vld [vmem:[%s1037 + $0xc] sm:$0xff]
        %v1041 = vld [vmem:[%s1037 + $0x14] sm:$0xf]
        %v1042 = vld [vmem:[%s1037 + $0x18] sm:$0xff]
        %v1043 = vld [vmem:[%s1037 + $0x20] sm:$0xf]
        %v1044 = vld [vmem:[%s1037 + $0x24] sm:$0xff]
        %v1045 = vld [vmem:[%s1037 + $0x2c] sm:$0xf]
        %v1046 = vld [vmem:[%s1037 + $0x30] sm:$0xff]
        %v1047 = vld [vmem:[%s1037 + $0x38] sm:$0xf]
        %v1048 = vld [vmem:[%s1037 + $0x3c] sm:$0xff]
        %v1049 = vld [vmem:[%s1037 + $0x44] sm:$0xf]
        %v1050 = vld [vmem:[%s1037 + $0x48] sm:$0xff]
        %v1051 = vld [vmem:[%s1037 + $0x50] sm:$0xf]
        %v1052 = vld [vmem:[%s1037 + $0x54] sm:$0xff]
        %v1053 = vld [vmem:[%s1037 + $0x5c] sm:$0xf]
        %v1054 = vld [vmem:[%s1037 + $0x60] sm:$0xff]
        %v1055 = vld [vmem:[%s1037 + $0x68] sm:$0xf]
        %v1056 = vld [vmem:[%s1037 + $0x6c] sm:$0xff]
        %v1057 = vld [vmem:[%s1037 + $0x74] sm:$0xf]
        %v1058 = vld [vmem:[%s1037 + $0x78] sm:$0xff]
        %v1059 = vld [vmem:[%s1037 + $0x80] sm:$0xf]
        %v1060 = vld [vmem:[%s1037 + $0x84] sm:$0xff]
        %v1061 = vld [vmem:[%s1037 + $0x8c] sm:$0xf]
        %v1062 = vld [vmem:[%s1037 + $0x90] sm:$0xff]
        %v1063 = vld [vmem:[%s1037 + $0x98] sm:$0xf]
        %v1064 = vld [vmem:[%s1037 + $0x9c] sm:$0xff]
        %v1065 = vld [vmem:[%s1037 + $0xa4] sm:$0xf]
        %v1066 = vld [vmem:[%s1037 + $0xa8] sm:$0xff]
        %v1067 = vld [vmem:[%s1037 + $0xb0] sm:$0xf]
        %v1068 = vld [vmem:[%s1037 + $0xb4] sm:$0xff]
        %v1069 = vld [vmem:[%s1037 + $0xbc] sm:$0xf]
        %v1070 = vld [vmem:[%s1037 + $0xc0] sm:$0xff]
        %v1071 = vld [vmem:[%s1037 + $0xc8] sm:$0xf]
        %v1072 = vld [vmem:[%s1037 + $0xcc] sm:$0xff]
        %v1073 = vld [vmem:[%s1037 + $0xd4] sm:$0xf]
        %v1074 = vld [vmem:[%s1037 + $0xd8] sm:$0xff]
        %v1075 = vld [vmem:[%s1037 + $0xe0] sm:$0xf]
        %v1076 = vld [vmem:[%s1037 + $0xe4] sm:$0xff]
        %v1077 = vld [vmem:[%s1037 + $0xec] sm:$0xf]
        %v1078 = vld [vmem:[%s1037 + $0xf0] sm:$0xff]
        %v1079 = vld [vmem:[%s1037 + $0xf8] sm:$0xf]
        %v1080 = vld [vmem:[%s1037 + $0xfc] sm:$0x11]
        %v1081 = vld [vmem:[%s1037 + $0x104] sm:$0x1]
        %v1083 = vshrl.u32 %v989, 16
        %v1085 = vshll.u32 %v989, 16
        %v1087 = vrot.slane %v1085, 1
        %v1088 = vor.u32 %v1083, %v1087
        %v1090 = vshll.u32 %v1035, 16
        %v1092 = vrot.slane %v1090, 1
        %v1093 = vsel %vm384, %v1088, %v1092
        %v1095 = vshrl.u32 %v990, 16
        %v1097 = vshll.u32 %v990, 16
        %v1099 = vrot.slane %v1097, 1
        %v1100 = vor.u32 %v1095, %v1099
        %v1102 = vshll.u32 %v1036, 16
        %v1104 = vrot.slane %v1102, 1
        %v1105 = vsel %vm384, %v1100, %v1104
        %v1151 = vunpack.c.l.b16 %v1038
        %v1152 = vunpack.c.h.b16 %v1038
        %v1153 = vunpack.c.l.b16 %v1039
        %v1154 = vunpack.c.l.b16 %v1040
        %v1155 = vunpack.c.h.b16 %v1040
        %v1156 = vunpack.c.l.b16 %v1041
        %v1157 = vunpack.c.l.b16 %v1042
        %v1158 = vunpack.c.h.b16 %v1042
        %v1159 = vunpack.c.l.b16 %v1043
        %v1160 = vunpack.c.l.b16 %v1044
        %v1161 = vunpack.c.h.b16 %v1044
        %v1162 = vunpack.c.l.b16 %v1045
        %v1163 = vunpack.c.l.b16 %v1046
        %v1164 = vunpack.c.h.b16 %v1046
        %v1165 = vunpack.c.l.b16 %v1047
        %v1166 = vunpack.c.l.b16 %v1048
        %v1167 = vunpack.c.h.b16 %v1048
        %v1168 = vunpack.c.l.b16 %v1049
        %v1169 = vunpack.c.l.b16 %v1050
        %v1170 = vunpack.c.h.b16 %v1050
        %v1171 = vunpack.c.l.b16 %v1051
        %v1172 = vunpack.c.l.b16 %v1052
        %v1173 = vunpack.c.h.b16 %v1052
        %v1174 = vunpack.c.l.b16 %v1053
        %v1175 = vunpack.c.l.b16 %v1054
        %v1176 = vunpack.c.h.b16 %v1054
        %v1177 = vunpack.c.l.b16 %v1055
        %v1178 = vunpack.c.l.b16 %v1056
        %v1179 = vunpack.c.h.b16 %v1056
        %v1180 = vunpack.c.l.b16 %v1057
        %v1181 = vunpack.c.l.b16 %v1058
        %v1182 = vunpack.c.h.b16 %v1058
        %v1183 = vunpack.c.l.b16 %v1059
        %v1184 = vunpack.c.l.b16 %v1060
        %v1185 = vunpack.c.h.b16 %v1060
        %v1186 = vunpack.c.l.b16 %v1061
        %v1187 = vunpack.c.l.b16 %v1062
        %v1188 = vunpack.c.h.b16 %v1062
        %v1189 = vunpack.c.l.b16 %v1063
        %v1190 = vunpack.c.l.b16 %v1064
        %v1191 = vunpack.c.h.b16 %v1064
        %v1192 = vunpack.c.l.b16 %v1065
        %v1193 = vunpack.c.l.b16 %v1066
        %v1194 = vunpack.c.h.b16 %v1066
        %v1195 = vunpack.c.l.b16 %v1067
        %v1196 = vunpack.c.l.b16 %v1068
        %v1197 = vunpack.c.h.b16 %v1068
        %v1198 = vunpack.c.l.b16 %v1069
        %v1199 = vunpack.c.l.b16 %v1070
        %v1200 = vunpack.c.h.b16 %v1070
        %v1201 = vunpack.c.l.b16 %v1071
        %v1202 = vunpack.c.l.b16 %v1072
        %v1203 = vunpack.c.h.b16 %v1072
        %v1204 = vunpack.c.l.b16 %v1073
        %v1205 = vunpack.c.l.b16 %v1074
        %v1206 = vunpack.c.h.b16 %v1074
        %v1207 = vunpack.c.l.b16 %v1075
        %v1208 = vunpack.c.l.b16 %v1076
        %v1209 = vunpack.c.h.b16 %v1076
        %v1210 = vunpack.c.l.b16 %v1077
        %v1211 = vunpack.c.l.b16 %v1078
        %v1212 = vunpack.c.h.b16 %v1078
        %v1213 = vunpack.c.l.b16 %v1079
        %v1214 = vunpack.c.l.b16 %v1080
        %v1215 = vunpack.c.h.b16 %v1080
        %v1216 = vunpack.c.l.b16 %v1081
        %v1217 = vpack.c.b16 %v1154, %v1151
        %v1218 = vpack.c.b16 %v1155, %v1152
        %v1219 = vpack.c.b16 %v1156, %v1153
        %v1220 = vpack.c.b16 %v1160, %v1157
        %v1221 = vpack.c.b16 %v1161, %v1158
        %v1222 = vpack.c.b16 %v1162, %v1159
        %v1223 = vpack.c.b16 %v1166, %v1163
        %v1224 = vpack.c.b16 %v1167, %v1164
        %v1225 = vpack.c.b16 %v1168, %v1165
        %v1226 = vpack.c.b16 %v1172, %v1169
        %v1227 = vpack.c.b16 %v1173, %v1170
        %v1228 = vpack.c.b16 %v1174, %v1171
        %v1229 = vpack.c.b16 %v1178, %v1175
        %v1230 = vpack.c.b16 %v1179, %v1176
        %v1231 = vpack.c.b16 %v1180, %v1177
        %v1232 = vpack.c.b16 %v1184, %v1181
        %v1233 = vpack.c.b16 %v1185, %v1182
        %v1234 = vpack.c.b16 %v1186, %v1183
        %v1235 = vpack.c.b16 %v1190, %v1187
        %v1236 = vpack.c.b16 %v1191, %v1188
        %v1237 = vpack.c.b16 %v1192, %v1189
        %v1238 = vpack.c.b16 %v1196, %v1193
        %v1239 = vpack.c.b16 %v1197, %v1194
        %v1240 = vpack.c.b16 %v1198, %v1195
        %v1241 = vpack.c.b16 %v1202, %v1199
        %v1242 = vpack.c.b16 %v1203, %v1200
        %v1243 = vpack.c.b16 %v1204, %v1201
        %v1244 = vpack.c.b16 %v1208, %v1205
        %v1245 = vpack.c.b16 %v1209, %v1206
        %v1246 = vpack.c.b16 %v1210, %v1207
        %v1247 = vpack.c.b16 %v1214, %v1211
        %v1248 = vpack.c.b16 %v1215, %v1212
        %v1249 = vpack.c.b16 %v1216, %v1213
        %v1281 = vsel %vm898, %v1105, 0
        %vm1283 = vcmask 1044480
        %v1285 = vsel %vm1283, %v1247, 0
        %v1288 = vsel %vm1283, %v1248, 0
        %v1291 = vsel %vm1283, %v1249, 0
        %1293 = vmatpush.bf16.msra.mxu0 %v1238
        %1294 = vmatpush.bf16.msra.mxu0 %v1235
        %1295 = vmatpush.bf16.msra.mxu0 %v1232
        %1296 = vmatpush.bf16.msra.mxu0 %v1229
        %1297 = vmatpush.bf16.msra.mxu0 %v1226
        %1298 = vmatpush.bf16.msra.mxu0 %v1223
        %1299 = vmatpush.bf16.msra.mxu0 %v1220
        %1300 = vmatpush.bf16.msra.mxu0 %v1217
        %1301 = vmatmul.bf16.gmra.mxu0 %v1093
        %v1302 = vpop.f32.mrf.mxu0
        %v1303 = vadd.f32 0.0, %v1302
        %v1304 = vpop.f32.mrf.mxu0
        %v1305 = vadd.f32 0.0, %v1304
        %1306 = vdwg.mxu0
        %1307 = vmatpush.bf16.msra.mxu0 0
        %1308 = vmatpush.bf16.msra.mxu0 0
        %1309 = vmatpush.bf16.msra.mxu0 0
        %1310 = vmatpush.bf16.msra.mxu0 0
        %1311 = vmatpush.bf16.msra.mxu0 0
        %1312 = vmatpush.bf16.msra.mxu0 %v1285
        %1313 = vmatpush.bf16.msra.mxu0 %v1244
        %1314 = vmatpush.bf16.msra.mxu0 %v1241
        %1315 = vmatmul.bf16.gmra.mxu0 %v1281
        %v1316 = vpop.f32.mrf.mxu0
        %v1317 = vadd.f32 %v1303, %v1316
        %v1318 = vpop.f32.mrf.mxu0
        %v1319 = vadd.f32 %v1305, %v1318
        %1320 = vdwg.mxu0
        %1321 = vmatpush.bf16.msra.mxu0 %v1239
        %1322 = vmatpush.bf16.msra.mxu0 %v1236
        %1323 = vmatpush.bf16.msra.mxu0 %v1233
        %1324 = vmatpush.bf16.msra.mxu0 %v1230
        %1325 = vmatpush.bf16.msra.mxu0 %v1227
        %1326 = vmatpush.bf16.msra.mxu0 %v1224
        %1327 = vmatpush.bf16.msra.mxu0 %v1221
        %1328 = vmatpush.bf16.msra.mxu0 %v1218
        %1329 = vmatmul.bf16.gmra.mxu0 %v1093
        %v1330 = vpop.f32.mrf.mxu0
        %v1331 = vadd.f32 0.0, %v1330
        %v1332 = vpop.f32.mrf.mxu0
        %v1333 = vadd.f32 0.0, %v1332
        %1334 = vdwg.mxu0
        %1335 = vmatpush.bf16.msra.mxu0 0
        %1336 = vmatpush.bf16.msra.mxu0 0
        %1337 = vmatpush.bf16.msra.mxu0 0
        %1338 = vmatpush.bf16.msra.mxu0 0
        %1339 = vmatpush.bf16.msra.mxu0 0
        %1340 = vmatpush.bf16.msra.mxu0 %v1288
        %1341 = vmatpush.bf16.msra.mxu0 %v1245
        %1342 = vmatpush.bf16.msra.mxu0 %v1242
        %1343 = vmatmul.bf16.gmra.mxu0 %v1281
        %v1344 = vpop.f32.mrf.mxu0
        %v1345 = vadd.f32 %v1331, %v1344
        %v1346 = vpop.f32.mrf.mxu0
        %v1347 = vadd.f32 %v1333, %v1346
        %1348 = vdwg.mxu0
        %1349 = vmatpush.bf16.msra.mxu0 %v1240
        %1350 = vmatpush.bf16.msra.mxu0 %v1237
        %1351 = vmatpush.bf16.msra.mxu0 %v1234
        %1352 = vmatpush.bf16.msra.mxu0 %v1231
        %1353 = vmatpush.bf16.msra.mxu0 %v1228
        %1354 = vmatpush.bf16.msra.mxu0 %v1225
        %1355 = vmatpush.bf16.msra.mxu0 %v1222
        %1356 = vmatpush.bf16.msra.mxu0 %v1219
        %1357 = vmatmul.bf16.gmra.mxu0 %v1093
        %v1358 = vpop.f32.mrf.mxu0
        %v1359 = vadd.f32 0.0, %v1358
        %v1360 = vpop.f32.mrf.mxu0
        %v1361 = vadd.f32 0.0, %v1360
        %1362 = vdwg.mxu0
        %1363 = vmatpush.bf16.msra.mxu0 0
        %1364 = vmatpush.bf16.msra.mxu0 0
        %1365 = vmatpush.bf16.msra.mxu0 0
        %1366 = vmatpush.bf16.msra.mxu0 0
        %1367 = vmatpush.bf16.msra.mxu0 0
        %1368 = vmatpush.bf16.msra.mxu0 %v1291
        %1369 = vmatpush.bf16.msra.mxu0 %v1246
        %1370 = vmatpush.bf16.msra.mxu0 %v1243
        %1371 = vmatmul.bf16.gmra.mxu0 %v1281
        %v1372 = vpop.f32.mrf.mxu0
        %v1373 = vadd.f32 %v1359, %v1372
        %v1374 = vpop.f32.mrf.mxu0
        %v1375 = vadd.f32 %v1361, %v1374
        %1376 = vdwg.mxu0
        %v1421 = vunpack.c.l.b16 %v991
        %v1422 = vunpack.c.h.b16 %v991
        %v1423 = vunpack.c.l.b16 %v992
        %v1424 = vunpack.c.l.b16 %v993
        %v1425 = vunpack.c.h.b16 %v993
        %v1426 = vunpack.c.l.b16 %v994
        %v1427 = vunpack.c.l.b16 %v995
        %v1428 = vunpack.c.h.b16 %v995
        %v1429 = vunpack.c.l.b16 %v996
        %v1430 = vunpack.c.l.b16 %v997
        %v1431 = vunpack.c.h.b16 %v997
        %v1432 = vunpack.c.l.b16 %v998
        %v1433 = vunpack.c.l.b16 %v999
        %v1434 = vunpack.c.h.b16 %v999
        %v1435 = vunpack.c.l.b16 %v1000
        %v1436 = vunpack.c.l.b16 %v1001
        %v1437 = vunpack.c.h.b16 %v1001
        %v1438 = vunpack.c.l.b16 %v1002
        %v1439 = vunpack.c.l.b16 %v1003
        %v1440 = vunpack.c.h.b16 %v1003
        %v1441 = vunpack.c.l.b16 %v1004
        %v1442 = vunpack.c.l.b16 %v1005
        %v1443 = vunpack.c.h.b16 %v1005
        %v1444 = vunpack.c.l.b16 %v1006
        %v1445 = vunpack.c.l.b16 %v1007
        %v1446 = vunpack.c.h.b16 %v1007
        %v1447 = vunpack.c.l.b16 %v1008
        %v1448 = vunpack.c.l.b16 %v1009
        %v1449 = vunpack.c.h.b16 %v1009
        %v1450 = vunpack.c.l.b16 %v1010
        %v1451 = vunpack.c.l.b16 %v1011
        %v1452 = vunpack.c.h.b16 %v1011
        %v1453 = vunpack.c.l.b16 %v1012
        %v1454 = vunpack.c.l.b16 %v1013
        %v1455 = vunpack.c.h.b16 %v1013
        %v1456 = vunpack.c.l.b16 %v1014
        %v1457 = vunpack.c.l.b16 %v1015
        %v1458 = vunpack.c.h.b16 %v1015
        %v1459 = vunpack.c.l.b16 %v1016
        %v1460 = vunpack.c.l.b16 %v1017
        %v1461 = vunpack.c.h.b16 %v1017
        %v1462 = vunpack.c.l.b16 %v1018
        %v1463 = vunpack.c.l.b16 %v1019
        %v1464 = vunpack.c.h.b16 %v1019
        %v1465 = vunpack.c.l.b16 %v1020
        %v1466 = vunpack.c.l.b16 %v1021
        %v1467 = vunpack.c.h.b16 %v1021
        %v1468 = vunpack.c.l.b16 %v1022
        %v1469 = vunpack.c.l.b16 %v1023
        %v1470 = vunpack.c.h.b16 %v1023
        %v1471 = vunpack.c.l.b16 %v1024
        %v1472 = vunpack.c.l.b16 %v1025
        %v1473 = vunpack.c.h.b16 %v1025
        %v1474 = vunpack.c.l.b16 %v1026
        %v1475 = vunpack.c.l.b16 %v1027
        %v1476 = vunpack.c.h.b16 %v1027
        %v1477 = vunpack.c.l.b16 %v1028
        %v1478 = vunpack.c.l.b16 %v1029
        %v1479 = vunpack.c.h.b16 %v1029
        %v1480 = vunpack.c.l.b16 %v1030
        %v1481 = vunpack.c.l.b16 %v1031
        %v1482 = vunpack.c.h.b16 %v1031
        %v1483 = vunpack.c.l.b16 %v1032
        %v1484 = vunpack.c.l.b16 %v1033
        %v1485 = vunpack.c.h.b16 %v1033
        %v1486 = vunpack.c.l.b16 %v1034
        %v1487 = vpack.c.b16 %v1424, %v1421
        %v1488 = vpack.c.b16 %v1425, %v1422
        %v1489 = vpack.c.b16 %v1426, %v1423
        %v1490 = vpack.c.b16 %v1430, %v1427
        %v1491 = vpack.c.b16 %v1431, %v1428
        %v1492 = vpack.c.b16 %v1432, %v1429
        %v1493 = vpack.c.b16 %v1436, %v1433
        %v1494 = vpack.c.b16 %v1437, %v1434
        %v1495 = vpack.c.b16 %v1438, %v1435
        %v1496 = vpack.c.b16 %v1442, %v1439
        %v1497 = vpack.c.b16 %v1443, %v1440
        %v1498 = vpack.c.b16 %v1444, %v1441
        %v1499 = vpack.c.b16 %v1448, %v1445
        %v1500 = vpack.c.b16 %v1449, %v1446
        %v1501 = vpack.c.b16 %v1450, %v1447
        %v1502 = vpack.c.b16 %v1454, %v1451
        %v1503 = vpack.c.b16 %v1455, %v1452
        %v1504 = vpack.c.b16 %v1456, %v1453
        %v1505 = vpack.c.b16 %v1460, %v1457
        %v1506 = vpack.c.b16 %v1461, %v1458
        %v1507 = vpack.c.b16 %v1462, %v1459
        %v1508 = vpack.c.b16 %v1466, %v1463
        %v1509 = vpack.c.b16 %v1467, %v1464
        %v1510 = vpack.c.b16 %v1468, %v1465
        %v1511 = vpack.c.b16 %v1472, %v1469
        %v1512 = vpack.c.b16 %v1473, %v1470
        %v1513 = vpack.c.b16 %v1474, %v1471
        %v1514 = vpack.c.b16 %v1478, %v1475
        %v1515 = vpack.c.b16 %v1479, %v1476
        %v1516 = vpack.c.b16 %v1480, %v1477
        %v1517 = vpack.c.b16 %v1484, %v1481
        %v1518 = vpack.c.b16 %v1485, %v1482
        %v1519 = vpack.c.b16 %v1486, %v1483
        %v1550 = vsel %vm898, %v990, 0
        %v1553 = vsel %vm1283, %v1517, 0
        %v1556 = vsel %vm1283, %v1518, 0
        %v1559 = vsel %vm1283, %v1519, 0
        %1561 = vmatpush.bf16.msra.mxu0 %v1508
        %1562 = vmatpush.bf16.msra.mxu0 %v1505
        %1563 = vmatpush.bf16.msra.mxu0 %v1502
        %1564 = vmatpush.bf16.msra.mxu0 %v1499
        %1565 = vmatpush.bf16.msra.mxu0 %v1496
        %1566 = vmatpush.bf16.msra.mxu0 %v1493
        %1567 = vmatpush.bf16.msra.mxu0 %v1490
        %1568 = vmatpush.bf16.msra.mxu0 %v1487
        %1569 = vmatmul.bf16.gmra.mxu0 %v989
        %v1570 = vpop.f32.mrf.mxu0
        %v1571 = vadd.f32 %v1317, %v1570
        %v1572 = vpop.f32.mrf.mxu0
        %v1573 = vadd.f32 %v1319, %v1572
        %1574 = vdwg.mxu0
        %1575 = vmatpush.bf16.msra.mxu0 0
        %1576 = vmatpush.bf16.msra.mxu0 0
        %1577 = vmatpush.bf16.msra.mxu0 0
        %1578 = vmatpush.bf16.msra.mxu0 0
        %1579 = vmatpush.bf16.msra.mxu0 0
        %1580 = vmatpush.bf16.msra.mxu0 %v1553
        %1581 = vmatpush.bf16.msra.mxu0 %v1514
        %1582 = vmatpush.bf16.msra.mxu0 %v1511
        %1583 = vmatmul.bf16.gmra.mxu0 %v1550
        %v1584 = vpop.f32.mrf.mxu0
        %v1585 = vadd.f32 %v1571, %v1584
        %v1586 = vpop.f32.mrf.mxu0
        %v1587 = vadd.f32 %v1573, %v1586
        %1588 = vdwg.mxu0
        %1589 = vmatpush.bf16.msra.mxu0 %v1509
        %1590 = vmatpush.bf16.msra.mxu0 %v1506
        %1591 = vmatpush.bf16.msra.mxu0 %v1503
        %1592 = vmatpush.bf16.msra.mxu0 %v1500
        %1593 = vmatpush.bf16.msra.mxu0 %v1497
        %1594 = vmatpush.bf16.msra.mxu0 %v1494
        %1595 = vmatpush.bf16.msra.mxu0 %v1491
        %1596 = vmatpush.bf16.msra.mxu0 %v1488
        %1597 = vmatmul.bf16.gmra.mxu0 %v989
        %v1598 = vpop.f32.mrf.mxu0
        %v1599 = vadd.f32 %v1345, %v1598
        %v1600 = vpop.f32.mrf.mxu0
        %v1601 = vadd.f32 %v1347, %v1600
        %1602 = vdwg.mxu0
        %1603 = vmatpush.bf16.msra.mxu0 0
        %1604 = vmatpush.bf16.msra.mxu0 0
        %1605 = vmatpush.bf16.msra.mxu0 0
        %1606 = vmatpush.bf16.msra.mxu0 0
        %1607 = vmatpush.bf16.msra.mxu0 0
        %1608 = vmatpush.bf16.msra.mxu0 %v1556
        %1609 = vmatpush.bf16.msra.mxu0 %v1515
        %1610 = vmatpush.bf16.msra.mxu0 %v1512
        %1611 = vmatmul.bf16.gmra.mxu0 %v1550
        %v1612 = vpop.f32.mrf.mxu0
        %v1613 = vadd.f32 %v1599, %v1612
        %v1614 = vpop.f32.mrf.mxu0
        %v1615 = vadd.f32 %v1601, %v1614
        %1616 = vdwg.mxu0
        %1617 = vmatpush.bf16.msra.mxu0 %v1510
        %1618 = vmatpush.bf16.msra.mxu0 %v1507
        %1619 = vmatpush.bf16.msra.mxu0 %v1504
        %1620 = vmatpush.bf16.msra.mxu0 %v1501
        %1621 = vmatpush.bf16.msra.mxu0 %v1498
        %1622 = vmatpush.bf16.msra.mxu0 %v1495
        %1623 = vmatpush.bf16.msra.mxu0 %v1492
        %1624 = vmatpush.bf16.msra.mxu0 %v1489
        %1625 = vmatmul.bf16.gmra.mxu0 %v989
        %v1626 = vpop.f32.mrf.mxu0
        %v1627 = vadd.f32 %v1373, %v1626
        %v1628 = vpop.f32.mrf.mxu0
        %v1629 = vadd.f32 %v1375, %v1628
        %1630 = vdwg.mxu0
        %1631 = vmatpush.bf16.msra.mxu0 0
        %1632 = vmatpush.bf16.msra.mxu0 0
        %1633 = vmatpush.bf16.msra.mxu0 0
        %1634 = vmatpush.bf16.msra.mxu0 0
        %1635 = vmatpush.bf16.msra.mxu0 0
        %1636 = vmatpush.bf16.msra.mxu0 %v1559
        %1637 = vmatpush.bf16.msra.mxu0 %v1516
        %1638 = vmatpush.bf16.msra.mxu0 %v1513
        %1639 = vmatmul.bf16.gmra.mxu0 %v1550
        %v1640 = vpop.f32.mrf.mxu0
        %v1641 = vadd.f32 %v1627, %v1640
        %v1642 = vpop.f32.mrf.mxu0
        %v1643 = vadd.f32 %v1629, %v1642
        %1644 = vdwg.mxu0
        %v1645 = vld [vmem:[%s4] sm:$0x7]
        %v1647 = vperm.slane %v1645, 0
        %v1648 = vperm.slane %v1645, 1
        %v1649 = vperm.slane %v1645, 2
        %v1653 = vadd.f32 %v1585, %v1647
        %v1654 = vadd.f32 %v1613, %v1648
        %v1655 = vadd.f32 %v1641, %v1649
        %v1656 = vadd.f32 %v1587, %v1647
        %v1657 = vadd.f32 %v1615, %v1648
        %v1658 = vadd.f32 %v1643, %v1649
        %v1659 = vld [vmem:[%s5] sm:$0xff]
        %v1660 = vld [vmem:[%s5 + $0x8] sm:$0xf]
        %v1661 = vld [vmem:[%s5 + $0xc] sm:$0xff]
        %v1662 = vld [vmem:[%s5 + $0x14] sm:$0xf]
        %v1663 = vld [vmem:[%s5 + $0x18] sm:$0xff]
        %v1664 = vld [vmem:[%s5 + $0x20] sm:$0xf]
        %v1665 = vld [vmem:[%s5 + $0x24] sm:$0xff]
        %v1666 = vld [vmem:[%s5 + $0x2c] sm:$0xf]
        %v1667 = vld [vmem:[%s5 + $0x30] sm:$0xff]
        %v1668 = vld [vmem:[%s5 + $0x38] sm:$0xf]
        %v1669 = vld [vmem:[%s5 + $0x3c] sm:$0xff]
        %v1670 = vld [vmem:[%s5 + $0x44] sm:$0xf]
        %v1671 = vld [vmem:[%s5 + $0x48] sm:$0xff]
        %v1672 = vld [vmem:[%s5 + $0x50] sm:$0xf]
        %v1673 = vld [vmem:[%s5 + $0x54] sm:$0xff]
        %v1674 = vld [vmem:[%s5 + $0x5c] sm:$0xf]
        %v1675 = vld [vmem:[%s5 + $0x60] sm:$0xff]
        %v1676 = vld [vmem:[%s5 + $0x68] sm:$0xf]
        %v1677 = vld [vmem:[%s5 + $0x6c] sm:$0xff]
        %v1678 = vld [vmem:[%s5 + $0x74] sm:$0xf]
        %v1679 = vld [vmem:[%s5 + $0x78] sm:$0xff]
        %v1680 = vld [vmem:[%s5 + $0x80] sm:$0xf]
        %v1681 = vld [vmem:[%s5 + $0x84] sm:$0xff]
        %v1682 = vld [vmem:[%s5 + $0x8c] sm:$0xf]
        %v1683 = vld [vmem:[%s5 + $0x90] sm:$0xff]
        %v1684 = vld [vmem:[%s5 + $0x98] sm:$0xf]
        %v1685 = vld [vmem:[%s5 + $0x9c] sm:$0xff]
        %v1686 = vld [vmem:[%s5 + $0xa4] sm:$0xf]
        %v1687 = vld [vmem:[%s5 + $0xa8] sm:$0xff]
        %v1688 = vld [vmem:[%s5 + $0xb0] sm:$0xf]
        %v1689 = vld [vmem:[%s5 + $0xb4] sm:$0xff]
        %v1690 = vld [vmem:[%s5 + $0xbc] sm:$0xf]
        %v1691 = vld [vmem:[%s5 + $0xc0] sm:$0xff]
        %v1692 = vld [vmem:[%s5 + $0xc8] sm:$0xf]
        %v1693 = vld [vmem:[%s5 + $0xcc] sm:$0xff]
        %v1694 = vld [vmem:[%s5 + $0xd4] sm:$0xf]
        %v1695 = vld [vmem:[%s5 + $0xd8] sm:$0xff]
        %v1696 = vld [vmem:[%s5 + $0xe0] sm:$0xf]
        %v1697 = vld [vmem:[%s5 + $0xe4] sm:$0xff]
        %v1698 = vld [vmem:[%s5 + $0xec] sm:$0xf]
        %v1699 = vld [vmem:[%s5 + $0xf0] sm:$0xff]
        %v1700 = vld [vmem:[%s5 + $0xf8] sm:$0xf]
        %v1701 = vld [vmem:[%s5 + $0xfc] sm:$0x11]
        %v1702 = vld [vmem:[%s5 + $0x104] sm:$0x1]
        %v1747 = vunpack.c.l.b16 %v1659
        %v1748 = vunpack.c.h.b16 %v1659
        %v1749 = vunpack.c.l.b16 %v1660
        %v1750 = vunpack.c.l.b16 %v1661
        %v1751 = vunpack.c.h.b16 %v1661
        %v1752 = vunpack.c.l.b16 %v1662
        %v1753 = vunpack.c.l.b16 %v1663
        %v1754 = vunpack.c.h.b16 %v1663
        %v1755 = vunpack.c.l.b16 %v1664
        %v1756 = vunpack.c.l.b16 %v1665
        %v1757 = vunpack.c.h.b16 %v1665
        %v1758 = vunpack.c.l.b16 %v1666
        %v1759 = vunpack.c.l.b16 %v1667
        %v1760 = vunpack.c.h.b16 %v1667
        %v1761 = vunpack.c.l.b16 %v1668
        %v1762 = vunpack.c.l.b16 %v1669
        %v1763 = vunpack.c.h.b16 %v1669
        %v1764 = vunpack.c.l.b16 %v1670
        %v1765 = vunpack.c.l.b16 %v1671
        %v1766 = vunpack.c.h.b16 %v1671
        %v1767 = vunpack.c.l.b16 %v1672
        %v1768 = vunpack.c.l.b16 %v1673
        %v1769 = vunpack.c.h.b16 %v1673
        %v1770 = vunpack.c.l.b16 %v1674
        %v1771 = vunpack.c.l.b16 %v1675
        %v1772 = vunpack.c.h.b16 %v1675
        %v1773 = vunpack.c.l.b16 %v1676
        %v1774 = vunpack.c.l.b16 %v1677
        %v1775 = vunpack.c.h.b16 %v1677
        %v1776 = vunpack.c.l.b16 %v1678
        %v1777 = vunpack.c.l.b16 %v1679
        %v1778 = vunpack.c.h.b16 %v1679
        %v1779 = vunpack.c.l.b16 %v1680
        %v1780 = vunpack.c.l.b16 %v1681
        %v1781 = vunpack.c.h.b16 %v1681
        %v1782 = vunpack.c.l.b16 %v1682
        %v1783 = vunpack.c.l.b16 %v1683
        %v1784 = vunpack.c.h.b16 %v1683
        %v1785 = vunpack.c.l.b16 %v1684
        %v1786 = vunpack.c.l.b16 %v1685
        %v1787 = vunpack.c.h.b16 %v1685
        %v1788 = vunpack.c.l.b16 %v1686
        %v1789 = vunpack.c.l.b16 %v1687
        %v1790 = vunpack.c.h.b16 %v1687
        %v1791 = vunpack.c.l.b16 %v1688
        %v1792 = vunpack.c.l.b16 %v1689
        %v1793 = vunpack.c.h.b16 %v1689
        %v1794 = vunpack.c.l.b16 %v1690
        %v1795 = vunpack.c.l.b16 %v1691
        %v1796 = vunpack.c.h.b16 %v1691
        %v1797 = vunpack.c.l.b16 %v1692
        %v1798 = vunpack.c.l.b16 %v1693
        %v1799 = vunpack.c.h.b16 %v1693
        %v1800 = vunpack.c.l.b16 %v1694
        %v1801 = vunpack.c.l.b16 %v1695
        %v1802 = vunpack.c.h.b16 %v1695
        %v1803 = vunpack.c.l.b16 %v1696
        %v1804 = vunpack.c.l.b16 %v1697
        %v1805 = vunpack.c.h.b16 %v1697
        %v1806 = vunpack.c.l.b16 %v1698
        %v1807 = vunpack.c.l.b16 %v1699
        %v1808 = vunpack.c.h.b16 %v1699
        %v1809 = vunpack.c.l.b16 %v1700
        %v1810 = vunpack.c.l.b16 %v1701
        %v1811 = vunpack.c.h.b16 %v1701
        %v1812 = vunpack.c.l.b16 %v1702
        %v1813 = vpack.c.b16 %v1750, %v1747
        %v1814 = vpack.c.b16 %v1751, %v1748
        %v1815 = vpack.c.b16 %v1752, %v1749
        %v1816 = vpack.c.b16 %v1756, %v1753
        %v1817 = vpack.c.b16 %v1757, %v1754
        %v1818 = vpack.c.b16 %v1758, %v1755
        %v1819 = vpack.c.b16 %v1762, %v1759
        %v1820 = vpack.c.b16 %v1763, %v1760
        %v1821 = vpack.c.b16 %v1764, %v1761
        %v1822 = vpack.c.b16 %v1768, %v1765
        %v1823 = vpack.c.b16 %v1769, %v1766
        %v1824 = vpack.c.b16 %v1770, %v1767
        %v1825 = vpack.c.b16 %v1774, %v1771
        %v1826 = vpack.c.b16 %v1775, %v1772
        %v1827 = vpack.c.b16 %v1776, %v1773
        %v1828 = vpack.c.b16 %v1780, %v1777
        %v1829 = vpack.c.b16 %v1781, %v1778
        %v1830 = vpack.c.b16 %v1782, %v1779
        %v1831 = vpack.c.b16 %v1786, %v1783
        %v1832 = vpack.c.b16 %v1787, %v1784
        %v1833 = vpack.c.b16 %v1788, %v1785
        %v1834 = vpack.c.b16 %v1792, %v1789
        %v1835 = vpack.c.b16 %v1793, %v1790
        %v1836 = vpack.c.b16 %v1794, %v1791
        %v1837 = vpack.c.b16 %v1798, %v1795
        %v1838 = vpack.c.b16 %v1799, %v1796
        %v1839 = vpack.c.b16 %v1800, %v1797
        %v1840 = vpack.c.b16 %v1804, %v1801
        %v1841 = vpack.c.b16 %v1805, %v1802
        %v1842 = vpack.c.b16 %v1806, %v1803
        %v1843 = vpack.c.b16 %v1810, %v1807
        %v1844 = vpack.c.b16 %v1811, %v1808
        %v1845 = vpack.c.b16 %v1812, %v1809
        %v1876 = vsel %vm898, %v1036, 0
        %v1879 = vsel %vm1283, %v1843, 0
        %v1882 = vsel %vm1283, %v1844, 0
        %v1885 = vsel %vm1283, %v1845, 0
        %1887 = vmatpush.bf16.msra.mxu0 %v1834
        %1888 = vmatpush.bf16.msra.mxu0 %v1831
        %1889 = vmatpush.bf16.msra.mxu0 %v1828
        %1890 = vmatpush.bf16.msra.mxu0 %v1825
        %1891 = vmatpush.bf16.msra.mxu0 %v1822
        %1892 = vmatpush.bf16.msra.mxu0 %v1819
        %1893 = vmatpush.bf16.msra.mxu0 %v1816
        %1894 = vmatpush.bf16.msra.mxu0 %v1813
        %1895 = vmatmul.bf16.gmra.mxu0 %v989
        %v1896 = vpop.f32.mrf.mxu0
        %v1897 = vadd.f32 0.0, %v1896
        %v1898 = vpop.f32.mrf.mxu0
        %v1899 = vadd.f32 0.0, %v1898
        %1900 = vmatmul.bf16.gmra.mxu0 %v1035
        %v1901 = vpop.f32.mrf.mxu0
        %v1902 = vadd.f32 0.0, %v1901
        %v1903 = vpop.f32.mrf.mxu0
        %1904 = vdwg.mxu0
        %1905 = vmatpush.bf16.msra.mxu0 0
        %1906 = vmatpush.bf16.msra.mxu0 0
        %1907 = vmatpush.bf16.msra.mxu0 0
        %1908 = vmatpush.bf16.msra.mxu0 0
        %1909 = vmatpush.bf16.msra.mxu0 0
        %1910 = vmatpush.bf16.msra.mxu0 %v1879
        %1911 = vmatpush.bf16.msra.mxu0 %v1840
        %1912 = vmatpush.bf16.msra.mxu0 %v1837
        %1913 = vmatmul.bf16.gmra.mxu0 %v1550
        %v1914 = vpop.f32.mrf.mxu0
        %v1915 = vadd.f32 %v1897, %v1914
        %v1916 = vpop.f32.mrf.mxu0
        %v1917 = vadd.f32 %v1899, %v1916
        %1918 = vmatmul.bf16.gmra.mxu0 %v1876
        %v1919 = vpop.f32.mrf.mxu0
        %v1920 = vadd.f32 %v1902, %v1919
        %v1921 = vpop.f32.mrf.mxu0
        %1922 = vdwg.mxu0
        %1923 = vmatpush.bf16.msra.mxu0 %v1835
        %1924 = vmatpush.bf16.msra.mxu0 %v1832
        %1925 = vmatpush.bf16.msra.mxu0 %v1829
        %1926 = vmatpush.bf16.msra.mxu0 %v1826
        %1927 = vmatpush.bf16.msra.mxu0 %v1823
        %1928 = vmatpush.bf16.msra.mxu0 %v1820
        %1929 = vmatpush.bf16.msra.mxu0 %v1817
        %1930 = vmatpush.bf16.msra.mxu0 %v1814
        %1931 = vmatmul.bf16.gmra.mxu0 %v989
        %v1932 = vpop.f32.mrf.mxu0
        %v1933 = vadd.f32 0.0, %v1932
        %v1934 = vpop.f32.mrf.mxu0
        %v1935 = vadd.f32 0.0, %v1934
        %1936 = vmatmul.bf16.gmra.mxu0 %v1035
        %v1937 = vpop.f32.mrf.mxu0
        %v1938 = vadd.f32 0.0, %v1937
        %v1939 = vpop.f32.mrf.mxu0
        %1940 = vdwg.mxu0
        %1941 = vmatpush.bf16.msra.mxu0 0
        %1942 = vmatpush.bf16.msra.mxu0 0
        %1943 = vmatpush.bf16.msra.mxu0 0
        %1944 = vmatpush.bf16.msra.mxu0 0
        %1945 = vmatpush.bf16.msra.mxu0 0
        %1946 = vmatpush.bf16.msra.mxu0 %v1882
        %1947 = vmatpush.bf16.msra.mxu0 %v1841
        %1948 = vmatpush.bf16.msra.mxu0 %v1838
        %1949 = vmatmul.bf16.gmra.mxu0 %v1550
        %v1950 = vpop.f32.mrf.mxu0
        %v1951 = vadd.f32 %v1933, %v1950
        %v1952 = vpop.f32.mrf.mxu0
        %v1953 = vadd.f32 %v1935, %v1952
        %1954 = vmatmul.bf16.gmra.mxu0 %v1876
        %v1955 = vpop.f32.mrf.mxu0
        %v1956 = vadd.f32 %v1938, %v1955
        %v1957 = vpop.f32.mrf.mxu0
        %1958 = vdwg.mxu0
        %1959 = vmatpush.bf16.msra.mxu0 %v1836
        %1960 = vmatpush.bf16.msra.mxu0 %v1833
        %1961 = vmatpush.bf16.msra.mxu0 %v1830
        %1962 = vmatpush.bf16.msra.mxu0 %v1827
        %1963 = vmatpush.bf16.msra.mxu0 %v1824
        %1964 = vmatpush.bf16.msra.mxu0 %v1821
        %1965 = vmatpush.bf16.msra.mxu0 %v1818
        %1966 = vmatpush.bf16.msra.mxu0 %v1815
        %1967 = vmatmul.bf16.gmra.mxu0 %v989
        %v1968 = vpop.f32.mrf.mxu0
        %v1969 = vadd.f32 0.0, %v1968
        %v1970 = vpop.f32.mrf.mxu0
        %v1971 = vadd.f32 0.0, %v1970
        %1972 = vmatmul.bf16.gmra.mxu0 %v1035
        %v1973 = vpop.f32.mrf.mxu0
        %v1974 = vadd.f32 0.0, %v1973
        %v1975 = vpop.f32.mrf.mxu0
        %1976 = vdwg.mxu0
        %1977 = vmatpush.bf16.msra.mxu0 0
        %1978 = vmatpush.bf16.msra.mxu0 0
        %1979 = vmatpush.bf16.msra.mxu0 0
        %1980 = vmatpush.bf16.msra.mxu0 0
        %1981 = vmatpush.bf16.msra.mxu0 0
        %1982 = vmatpush.bf16.msra.mxu0 %v1885
        %1983 = vmatpush.bf16.msra.mxu0 %v1842
        %1984 = vmatpush.bf16.msra.mxu0 %v1839
        %1985 = vmatmul.bf16.gmra.mxu0 %v1550
        %v1986 = vpop.f32.mrf.mxu0
        %v1987 = vadd.f32 %v1969, %v1986
        %v1988 = vpop.f32.mrf.mxu0
        %v1989 = vadd.f32 %v1971, %v1988
        %1990 = vmatmul.bf16.gmra.mxu0 %v1876
        %v1991 = vpop.f32.mrf.mxu0
        %v1992 = vadd.f32 %v1974, %v1991
        %v1993 = vpop.f32.mrf.mxu0
        %1994 = vdwg.mxu0
        %2001 = vrot.lane.b32.xlu0 %v1653, 20
        %v2002 = vpop.permute.xlu0 %2001
        %2003 = vrot.lane.b32.xlu0 %v1654, 20
        %v2004 = vpop.permute.xlu0 %2003
        %2005 = vrot.lane.b32.xlu0 %v1655, 20
        %v2006 = vpop.permute.xlu0 %2005
        %2007 = vrot.lane.b32.xlu0 %v1656, 20
        %v2008 = vpop.permute.xlu0 %2007
        %2009 = vrot.lane.b32.xlu0 %v1657, 20
        %v2010 = vpop.permute.xlu0 %2009
        %2011 = vrot.lane.b32.xlu0 %v1658, 20
        %v2012 = vpop.permute.xlu0 %2011
        %vm2013 = vcmask 162816
        %v2014 = vsel %vm2013, %v2002, %v2004
        %v2015 = vsel %vm2013, %v2004, %v2006
        %v2016 = vsel %vm2013, %v2008, %v2010
        %v2017 = vsel %vm2013, %v2010, %v2012
        %v2022 = vsel %vm2013, -inf, %v2002
        %v2023 = vsel %vm2013, -inf, %v2008
        %vm2024 = vcmask 687104
        %v2025 = vsel %vm2024, %v2015, -inf
        %v2026 = vsel %vm2024, %v2017, -inf
        %v2031 = vrot.slane %v2022, 7
        %v2032 = vrot.slane %v2014, 7
        %v2033 = vrot.slane %v2025, 7
        %v2034 = vrot.slane %v2023, 7
        %v2035 = vsel %vm905, %v2031, %v2034
        %v2036 = vrot.slane %v2016, 7
        %v2037 = vsel %vm905, %v2032, %v2036
        %v2038 = vrot.slane %v2026, 7
        %v2039 = vsel %vm905, %v2033, %v2038
        %v2049 = vsel %vm905, -inf, %v2031
        %v2050 = vsel %vm905, -inf, %v2032
        %v2051 = vsel %vm905, -inf, %v2033
        %v2052 = vsel %vm905, %v2034, -inf
        %v2053 = vsel %vm905, %v2036, -inf
        %v2054 = vsel %vm905, %v2038, -inf
        %2061 = vrot.lane.b32.xlu0 %v2049, 108
        %v2062 = vpop.permute.xlu0 %2061
        %2063 = vrot.lane.b32.xlu0 %v2050, 108
        %v2064 = vpop.permute.xlu0 %2063
        %2065 = vrot.lane.b32.xlu0 %v2051, 108
        %v2066 = vpop.permute.xlu0 %2065
        %2067 = vrot.lane.b32.xlu0 %v2035, 108
        %v2068 = vpop.permute.xlu0 %2067
        %2069 = vrot.lane.b32.xlu0 %v2037, 108
        %v2070 = vpop.permute.xlu0 %2069
        %2071 = vrot.lane.b32.xlu0 %v2039, 108
        %v2072 = vpop.permute.xlu0 %2071
        %2073 = vrot.lane.b32.xlu0 %v2052, 108
        %v2074 = vpop.permute.xlu0 %2073
        %2075 = vrot.lane.b32.xlu0 %v2053, 108
        %v2076 = vpop.permute.xlu0 %2075
        %2077 = vrot.lane.b32.xlu0 %v2054, 108
        %v2078 = vpop.permute.xlu0 %2077
        %vm2079 = vcmask 883712
        %v2080 = vsel %vm2079, %v2062, %v2064
        %v2081 = vsel %vm2079, %v2064, %v2066
        %v2082 = vsel %vm2079, %v2068, %v2070
        %v2083 = vsel %vm2079, %v2070, %v2072
        %v2084 = vsel %vm2079, %v2074, %v2076
        %v2085 = vsel %vm2079, %v2076, %v2078
        %v2095 = vmax.f32 %v2049, %v2080
        %v2096 = vmax.f32 %v2050, %v2081
        %v2097 = vmax.f32 %v2051, %v2066
        %v2098 = vmax.f32 %v2035, %v2082
        %v2099 = vmax.f32 %v2037, %v2083
        %v2100 = vmax.f32 %v2039, %v2072
        %v2101 = vmax.f32 %v2052, %v2084
        %v2102 = vmax.f32 %v2053, %v2085
        %v2103 = vmax.f32 %v2054, %v2078
        %v2113 = vrot.slane %v2095, 1
        %v2114 = vrot.slane %v2098, 1
        %v2115 = vsel %vm960, %v2113, %v2114
        %v2116 = vrot.slane %v2096, 1
        %v2117 = vrot.slane %v2099, 1
        %v2118 = vsel %vm960, %v2116, %v2117
        %v2119 = vrot.slane %v2097, 1
        %v2120 = vrot.slane %v2100, 1
        %v2121 = vsel %vm960, %v2119, %v2120
        %v2122 = vrot.slane %v2101, 1
        %v2123 = vsel %vm960, %v2114, %v2122
        %v2124 = vrot.slane %v2102, 1
        %v2125 = vsel %vm960, %v2117, %v2124
        %v2126 = vrot.slane %v2103, 1
        %v2127 = vsel %vm960, %v2120, %v2126
        %v2137 = vmax.f32 %v2095, %v2115
        %v2138 = vmax.f32 %v2096, %v2118
        %v2139 = vmax.f32 %v2097, %v2121
        %v2140 = vmax.f32 %v2098, %v2123
        %v2141 = vmax.f32 %v2099, %v2125
        %v2142 = vmax.f32 %v2100, %v2127
        %v2143 = vmax.f32 %v2101, %v2122
        %v2144 = vmax.f32 %v2102, %v2124
        %v2145 = vmax.f32 %v2103, %v2126
        %v2146 = vadd.f32 %v2137, %v1915
        %v2147 = vadd.f32 %v2138, %v1951
        %v2148 = vadd.f32 %v2139, %v1987
        %v2149 = vadd.f32 %v2140, %v1917
        %v2150 = vadd.f32 %v2141, %v1953
        %v2151 = vadd.f32 %v2142, %v1989
        %v2152 = vadd.f32 %v2143, %v1920
        %v2153 = vadd.f32 %v2144, %v1956
        %v2154 = vadd.f32 %v2145, %v1992
        %v2164 = vrot.slane %v2146, 1
        %v2165 = vrot.slane %v2149, 1
        %v2166 = vsel %vm960, %v2164, %v2165
        %v2167 = vrot.slane %v2147, 1
        %v2168 = vrot.slane %v2150, 1
        %v2169 = vsel %vm960, %v2167, %v2168
        %v2170 = vrot.slane %v2148, 1
        %v2171 = vrot.slane %v2151, 1
        %v2172 = vsel %vm960, %v2170, %v2171
        %v2173 = vrot.slane %v2152, 1
        %v2174 = vsel %vm960, %v2165, %v2173
        %v2175 = vrot.slane %v2153, 1
        %v2176 = vsel %vm960, %v2168, %v2175
        %v2177 = vrot.slane %v2154, 1
        %v2178 = vsel %vm960, %v2171, %v2177
        %v2185 = vmax.f32 %v2146, %v2166
        %v2186 = vmax.f32 %v2147, %v2169
        %v2187 = vmax.f32 %v2148, %v2172
        %v2188 = vmax.f32 %v2149, %v2174
        %v2189 = vmax.f32 %v2150, %v2176
        %v2190 = vmax.f32 %v2151, %v2178
        %2197 = vrot.lane.b32.xlu0 %v2185, 108
        %v2198 = vpop.permute.xlu0 %2197
        %2199 = vrot.lane.b32.xlu0 %v2186, 108
        %v2200 = vpop.permute.xlu0 %2199
        %2201 = vrot.lane.b32.xlu0 %v2187, 108
        %v2202 = vpop.permute.xlu0 %2201
        %2203 = vrot.lane.b32.xlu0 %v2188, 108
        %v2204 = vpop.permute.xlu0 %2203
        %2205 = vrot.lane.b32.xlu0 %v2189, 108
        %v2206 = vpop.permute.xlu0 %2205
        %2207 = vrot.lane.b32.xlu0 %v2190, 108
        %v2208 = vpop.permute.xlu0 %2207
        %v2209 = vsel %vm2079, %v2198, %v2200
        %v2210 = vsel %vm2079, %v2200, %v2202
        %v2211 = vsel %vm2079, %v2204, %v2206
        %v2212 = vsel %vm2079, %v2206, %v2208
        %v2219 = vmax.f32 %v2185, %v2209
        %v2220 = vmax.f32 %v2186, %v2210
        %v2221 = vmax.f32 %v2187, %v2202
        %v2222 = vmax.f32 %v2188, %v2211
        %v2223 = vmax.f32 %v2189, %v2212
        %v2224 = vmax.f32 %v2190, %v2208
        %v2225 = vmax.f32 %v2219, 0.0
        %v2226 = vmax.f32 %v2220, 0.0
        %v2227 = vmax.f32 %v2221, 0.0
        %v2228 = vmax.f32 %v2222, 0.0
        %v2229 = vmax.f32 %v2223, 0.0
        %v2230 = vmax.f32 %v2224, 0.0
        %v2234 = vrot.slane %v2225, 2
        %v2235 = vrot.slane %v2226, 2
        %v2236 = vrot.slane %v2227, 2
        %2237 = vrot.lane.b32.xlu0 %v2234, 64
        %v2238 = vpop.permute.xlu0 %2237
        %2239 = vrot.lane.b32.xlu0 %v2235, 64
        %v2240 = vpop.permute.xlu0 %2239
        %2241 = vrot.lane.b32.xlu0 %v2236, 64
        %v2242 = vpop.permute.xlu0 %2241
        %vm2243 = vcmask 523264
        %v2244 = vsel %vm2243, %v2238, %v2240
        %v2245 = vsel %vm2243, %v2240, %v2242
        %v2249 = vrot.slane %v2225, 4
        %v2250 = vrot.slane %v2226, 4
        %v2251 = vrot.slane %v2227, 4
        %v2255 = vrot.slane %v2225, 6
        %v2256 = vrot.slane %v2226, 6
        %v2257 = vrot.slane %v2227, 6
        %2258 = vrot.lane.b32.xlu0 %v2255, 64
        %v2259 = vpop.permute.xlu0 %2258
        %2260 = vrot.lane.b32.xlu0 %v2256, 64
        %v2261 = vpop.permute.xlu0 %2260
        %2262 = vrot.lane.b32.xlu0 %v2257, 64
        %v2263 = vpop.permute.xlu0 %2262
        %v2264 = vsel %vm2243, %v2259, %v2261
        %v2265 = vsel %vm2243, %v2261, %v2263
        %v2272 = vrot.slane %v2228, 2
        %v2273 = vrot.slane %v2229, 2
        %v2274 = vrot.slane %v2230, 2
        %2275 = vrot.lane.b32.xlu0 %v2272, 64
        %v2276 = vpop.permute.xlu0 %2275
        %2277 = vrot.lane.b32.xlu0 %v2273, 64
        %v2278 = vpop.permute.xlu0 %2277
        %2279 = vrot.lane.b32.xlu0 %v2274, 64
        %v2280 = vpop.permute.xlu0 %2279
        %v2281 = vsel %vm2243, %v2276, %v2278
        %v2282 = vsel %vm2243, %v2278, %v2280
        %v2286 = vrot.slane %v2228, 4
        %v2287 = vrot.slane %v2229, 4
        %v2288 = vrot.slane %v2230, 4
        %v2292 = vrot.slane %v2228, 6
        %v2293 = vrot.slane %v2229, 6
        %v2294 = vrot.slane %v2230, 6
        %2295 = vrot.lane.b32.xlu0 %v2292, 64
        %v2296 = vpop.permute.xlu0 %2295
        %2297 = vrot.lane.b32.xlu0 %v2293, 64
        %v2298 = vpop.permute.xlu0 %2297
        %2299 = vrot.lane.b32.xlu0 %v2294, 64
        %v2300 = vpop.permute.xlu0 %2299
        %v2301 = vsel %vm2243, %v2296, %v2298
        %v2302 = vsel %vm2243, %v2298, %v2300
        %v2306 = vsel %vm2243, %v2227, %v2238
        %v2307 = vsel %vm2243, %v2251, %v2259
        %v2308 = vsel %vm2243, %v2230, %v2276
        %v2309 = vsel %vm2243, %v2288, %v2296
        %v2310 = vpack.c.bf16 %v2225, %v2225
        %v2311 = vpack.c.bf16 %v2226, %v2226
        %v2312 = vpack.c.bf16 %v2306, %v2306
        %v2313 = vpack.c.bf16 %v2244, %v2244
        %v2314 = vpack.c.bf16 %v2245, %v2245
        %v2315 = vpack.c.bf16 %v2249, %v2249
        %v2316 = vpack.c.bf16 %v2250, %v2250
        %v2317 = vpack.c.bf16 %v2307, %v2307
        %v2318 = vpack.c.bf16 %v2264, %v2264
        %v2319 = vpack.c.bf16 %v2265, %v2265
        %v2320 = vpack.c.bf16 %v2228, %v2228
        %v2321 = vpack.c.bf16 %v2229, %v2229
        %v2322 = vpack.c.bf16 %v2308, %v2308
        %v2323 = vpack.c.bf16 %v2281, %v2281
        %v2324 = vpack.c.bf16 %v2282, %v2282
        %v2325 = vpack.c.bf16 %v2286, %v2286
        %v2326 = vpack.c.bf16 %v2287, %v2287
        %v2327 = vpack.c.bf16 %v2309, %v2309
        %v2328 = vpack.c.bf16 %v2301, %v2301
        %v2329 = vpack.c.bf16 %v2302, %v2302
        %v2330 = vld [vmem:[%s6] sm:$0xf]
        %v2331 = vld [vmem:[%s6 + $0x4] sm:$0xf]
        %v2332 = vld [vmem:[%s6 + $0x8] sm:$0xf]
        %v2333 = vld [vmem:[%s6 + $0xc] sm:$0xf]
        %v2334 = vld [vmem:[%s6 + $0x10] sm:$0xf]
        %v2335 = vld [vmem:[%s6 + $0x14] sm:$0xf]
        %v2336 = vld [vmem:[%s6 + $0x18] sm:$0xf]
        %v2337 = vld [vmem:[%s6 + $0x1c] sm:$0xf]
        %v2338 = vld [vmem:[%s6 + $0x20] sm:$0xf]
        %v2339 = vld [vmem:[%s6 + $0x24] sm:$0xf]
        %v2340 = vld [vmem:[%s6 + $0x28] sm:$0xf]
        %v2341 = vld [vmem:[%s6 + $0x2c] sm:$0xf]
        %v2342 = vld [vmem:[%s6 + $0x30] sm:$0xf]
        %v2343 = vld [vmem:[%s6 + $0x34] sm:$0xf]
        %v2344 = vld [vmem:[%s6 + $0x38] sm:$0xf]
        %v2345 = vld [vmem:[%s6 + $0x3c] sm:$0xf]
        %v2346 = vld [vmem:[%s6 + $0x40] sm:$0xf]
        %v2347 = vld [vmem:[%s6 + $0x44] sm:$0xf]
        %v2348 = vld [vmem:[%s6 + $0x48] sm:$0xf]
        %v2349 = vld [vmem:[%s6 + $0x4c] sm:$0xf]
        %v2350 = vld [vmem:[%s6 + $0x50] sm:$0xf]
        %v2351 = vld [vmem:[%s6 + $0x54] sm:$0xf]
        %v2352 = vld [vmem:[%s6 + $0x58] sm:$0xf]
        %v2353 = vld [vmem:[%s6 + $0x5c] sm:$0xf]
        %v2354 = vld [vmem:[%s6 + $0x60] sm:$0xf]
        %v2355 = vld [vmem:[%s6 + $0x64] sm:$0xf]
        %v2356 = vld [vmem:[%s6 + $0x68] sm:$0xf]
        %v2357 = vld [vmem:[%s6 + $0x6c] sm:$0xf]
        %v2358 = vld [vmem:[%s6 + $0x70] sm:$0xf]
        %v2359 = vld [vmem:[%s6 + $0x74] sm:$0xf]
        %v2360 = vld [vmem:[%s6 + $0x78] sm:$0xf]
        %v2361 = vld [vmem:[%s6 + $0x7c] sm:$0xf]
        %v2362 = vld [vmem:[%s6 + $0x80] sm:$0xf]
        %v2363 = vld [vmem:[%s6 + $0x84] sm:$0xf]
        %v2364 = vld [vmem:[%s6 + $0x88] sm:$0xf]
        %v2365 = vld [vmem:[%s6 + $0x8c] sm:$0xf]
        %v2366 = vld [vmem:[%s6 + $0x90] sm:$0xf]
        %v2367 = vld [vmem:[%s6 + $0x94] sm:$0xf]
        %v2368 = vld [vmem:[%s6 + $0x98] sm:$0xf]
        %v2369 = vld [vmem:[%s6 + $0x9c] sm:$0xf]
        %v2370 = vld [vmem:[%s6 + $0xa0] sm:$0xf]
        %v2371 = vld [vmem:[%s6 + $0xa4] sm:$0xf]
        %v2372 = vld [vmem:[%s6 + $0xa8] sm:$0xf]
        %v2373 = vld [vmem:[%s6 + $0xac] sm:$0xf]
        %v2374 = vld [vmem:[%s6 + $0xb0] sm:$0xf]
        %v2375 = vld [vmem:[%s6 + $0xb4] sm:$0xf]
        %v2376 = vld [vmem:[%s6 + $0xb8] sm:$0xf]
        %v2377 = vld [vmem:[%s6 + $0xbc] sm:$0xf]
        %v2378 = vld [vmem:[%s6 + $0xc0] sm:$0xf]
        %v2379 = vld [vmem:[%s6 + $0xc4] sm:$0xf]
        %v2380 = vld [vmem:[%s6 + $0xc8] sm:$0xf]
        %v2381 = vld [vmem:[%s6 + $0xcc] sm:$0xf]
        %v2382 = vld [vmem:[%s6 + $0xd0] sm:$0xf]
        %v2383 = vld [vmem:[%s6 + $0xd4] sm:$0xf]
        %v2384 = vld [vmem:[%s6 + $0xd8] sm:$0xf]
        %v2385 = vld [vmem:[%s6 + $0xdc] sm:$0xf]
        %v2386 = vld [vmem:[%s6 + $0xe0] sm:$0xf]
        %v2387 = vld [vmem:[%s6 + $0xe4] sm:$0xf]
        %v2388 = vld [vmem:[%s6 + $0xe8] sm:$0xf]
        %v2389 = vld [vmem:[%s6 + $0xec] sm:$0xf]
        %v2390 = vld [vmem:[%s6 + $0xf0] sm:$0xf]
        %v2391 = vld [vmem:[%s6 + $0xf4] sm:$0xf]
        %v2392 = vld [vmem:[%s6 + $0xf8] sm:$0xf]
        %v2393 = vld [vmem:[%s6 + $0xfc] sm:$0xf]
        %v2394 = vld [vmem:[%s6 + $0x100] sm:$0xf]
        %v2395 = vld [vmem:[%s6 + $0x104] sm:$0xf]
        %v2396 = vld [vmem:[%s6 + $0x108] sm:$0xf]
        %v2397 = vld [vmem:[%s6 + $0x10c] sm:$0xf]
        %v2398 = vld [vmem:[%s6 + $0x110] sm:$0xf]
        %v2399 = vld [vmem:[%s6 + $0x114] sm:$0xf]
        %v2400 = vld [vmem:[%s6 + $0x118] sm:$0xf]
        %v2401 = vld [vmem:[%s6 + $0x11c] sm:$0xf]
        %v2402 = vld [vmem:[%s6 + $0x120] sm:$0xf]
        %v2403 = vld [vmem:[%s6 + $0x124] sm:$0xf]
        %v2404 = vld [vmem:[%s6 + $0x128] sm:$0xf]
        %v2405 = vld [vmem:[%s6 + $0x12c] sm:$0xf]
        %v2406 = vld [vmem:[%s6 + $0x130] sm:$0xf]
        %v2407 = vld [vmem:[%s6 + $0x134] sm:$0xf]
        %v2408 = vld [vmem:[%s6 + $0x138] sm:$0xf]
        %v2409 = vld [vmem:[%s6 + $0x13c] sm:$0xf]
        %v2410 = vld [vmem:[%s6 + $0x140] sm:$0xf]
        %v2411 = vld [vmem:[%s6 + $0x144] sm:$0xf]
        %v2412 = vld [vmem:[%s6 + $0x148] sm:$0xf]
        %v2413 = vld [vmem:[%s6 + $0x14c] sm:$0xf]
        %v2414 = vld [vmem:[%s6 + $0x150] sm:$0xf]
        %v2415 = vld [vmem:[%s6 + $0x154] sm:$0xf]
        %v2416 = vld [vmem:[%s6 + $0x158] sm:$0xf]
        %v2417 = vld [vmem:[%s6 + $0x15c] sm:$0xf]
        %v2418 = vld [vmem:[%s6 + $0x160] sm:$0xf]
        %v2419 = vld [vmem:[%s6 + $0x164] sm:$0xf]
        %v2420 = vld [vmem:[%s6 + $0x168] sm:$0xf]
        %v2421 = vld [vmem:[%s6 + $0x16c] sm:$0xf]
        %v2422 = vld [vmem:[%s6 + $0x170] sm:$0xf]
        %v2423 = vld [vmem:[%s6 + $0x174] sm:$0xf]
        %v2424 = vld [vmem:[%s6 + $0x178] sm:$0xf]
        %v2425 = vld [vmem:[%s6 + $0x17c] sm:$0xf]
        %v2426 = vld [vmem:[%s6 + $0x180] sm:$0xf]
        %v2427 = vld [vmem:[%s6 + $0x184] sm:$0xf]
        %v2428 = vld [vmem:[%s6 + $0x188] sm:$0xf]
        %v2429 = vld [vmem:[%s6 + $0x18c] sm:$0xf]
        %v2430 = vld [vmem:[%s6 + $0x190] sm:$0xf]
        %v2431 = vld [vmem:[%s6 + $0x194] sm:$0xf]
        %v2432 = vld [vmem:[%s6 + $0x198] sm:$0xf]
        %v2433 = vld [vmem:[%s6 + $0x19c] sm:$0xf]
        %v2434 = vld [vmem:[%s6 + $0x1a0] sm:$0xf]
        %v2435 = vld [vmem:[%s6 + $0x1a4] sm:$0xf]
        %v2436 = vld [vmem:[%s6 + $0x1a8] sm:$0xf]
        %v2437 = vld [vmem:[%s6 + $0x1ac] sm:$0xf]
        %v2438 = vld [vmem:[%s6 + $0x1b0] sm:$0xf]
        %v2439 = vld [vmem:[%s6 + $0x1b4] sm:$0xf]
        %v2440 = vld [vmem:[%s6 + $0x1b8] sm:$0xf]
        %v2441 = vld [vmem:[%s6 + $0x1bc] sm:$0xf]
        %v2442 = vld [vmem:[%s6 + $0x1c0] sm:$0xf]
        %v2443 = vld [vmem:[%s6 + $0x1c4] sm:$0xf]
        %v2444 = vld [vmem:[%s6 + $0x1c8] sm:$0xf]
        %v2445 = vld [vmem:[%s6 + $0x1cc] sm:$0xf]
        %v2446 = vld [vmem:[%s6 + $0x1d0] sm:$0xf]
        %v2447 = vld [vmem:[%s6 + $0x1d4] sm:$0xf]
        %v2448 = vld [vmem:[%s6 + $0x1d8] sm:$0xf]
        %v2449 = vld [vmem:[%s6 + $0x1dc] sm:$0xf]
        %v2450 = vld [vmem:[%s6 + $0x1e0] sm:$0xf]
        %v2451 = vld [vmem:[%s6 + $0x1e4] sm:$0xf]
        %v2452 = vld [vmem:[%s6 + $0x1e8] sm:$0xf]
        %v2453 = vld [vmem:[%s6 + $0x1ec] sm:$0xf]
        %v2454 = vld [vmem:[%s6 + $0x1f0] sm:$0xf]
        %v2455 = vld [vmem:[%s6 + $0x1f4] sm:$0xf]
        %v2456 = vld [vmem:[%s6 + $0x1f8] sm:$0xf]
        %v2457 = vld [vmem:[%s6 + $0x1fc] sm:$0xf]
        %v2458 = vld [vmem:[%s6 + $0x200] sm:$0xf]
        %v2459 = vld [vmem:[%s6 + $0x204] sm:$0xf]
        %v2460 = vld [vmem:[%s6 + $0x208] sm:$0xf]
        %v2461 = vld [vmem:[%s6 + $0x20c] sm:$0xf]
        %v2462 = vld [vmem:[%s6 + $0x210] sm:$0xf]
        %v2463 = vld [vmem:[%s6 + $0x214] sm:$0xf]
        %v2464 = vld [vmem:[%s6 + $0x218] sm:$0xf]
        %v2465 = vld [vmem:[%s6 + $0x21c] sm:$0xf]
        %v2466 = vld [vmem:[%s6 + $0x220] sm:$0xf]
        %v2467 = vld [vmem:[%s6 + $0x224] sm:$0xf]
        %v2468 = vld [vmem:[%s6 + $0x228] sm:$0xf]
        %v2469 = vld [vmem:[%s6 + $0x22c] sm:$0xf]
        %v2470 = vld [vmem:[%s6 + $0x230] sm:$0xf]
        %v2471 = vld [vmem:[%s6 + $0x234] sm:$0xf]
        %v2472 = vld [vmem:[%s6 + $0x238] sm:$0xf]
        %v2473 = vld [vmem:[%s6 + $0x23c] sm:$0xf]
        %v2474 = vld [vmem:[%s6 + $0x240] sm:$0xf]
        %v2475 = vld [vmem:[%s6 + $0x244] sm:$0xf]
        %v2476 = vld [vmem:[%s6 + $0x248] sm:$0xf]
        %v2477 = vld [vmem:[%s6 + $0x24c] sm:$0xf]
        %v2478 = vld [vmem:[%s6 + $0x250] sm:$0xf]
        %v2479 = vld [vmem:[%s6 + $0x254] sm:$0xf]
        %v2480 = vld [vmem:[%s6 + $0x258] sm:$0xf]
        %v2481 = vld [vmem:[%s6 + $0x25c] sm:$0xf]
        %v2482 = vld [vmem:[%s6 + $0x260] sm:$0xf]
        %v2483 = vld [vmem:[%s6 + $0x264] sm:$0xf]
        %v2484 = vld [vmem:[%s6 + $0x268] sm:$0xf]
        %v2485 = vld [vmem:[%s6 + $0x26c] sm:$0xf]
        %v2486 = vld [vmem:[%s6 + $0x270] sm:$0xf]
        %v2487 = vld [vmem:[%s6 + $0x274] sm:$0xf]
        %v2488 = vld [vmem:[%s6 + $0x278] sm:$0xf]
        %v2489 = vld [vmem:[%s6 + $0x27c] sm:$0xf]
        %v2490 = vld [vmem:[%s6 + $0x280] sm:$0xf]
        %v2491 = vld [vmem:[%s6 + $0x284] sm:$0xf]
        %v2492 = vld [vmem:[%s6 + $0x288] sm:$0xf]
        %v2493 = vld [vmem:[%s6 + $0x28c] sm:$0xf]
        %v2494 = vld [vmem:[%s6 + $0x290] sm:$0xf]
        %v2495 = vld [vmem:[%s6 + $0x294] sm:$0xf]
        %v2496 = vld [vmem:[%s6 + $0x298] sm:$0xf]
        %v2497 = vld [vmem:[%s6 + $0x29c] sm:$0xf]
        %v2498 = vld [vmem:[%s6 + $0x2a0] sm:$0xf]
        %v2499 = vld [vmem:[%s6 + $0x2a4] sm:$0xf]
        %v2500 = vld [vmem:[%s6 + $0x2a8] sm:$0xf]
        %v2501 = vld [vmem:[%s6 + $0x2ac] sm:$0xf]
        %v2502 = vld [vmem:[%s6 + $0x2b0] sm:$0xf]
        %v2503 = vld [vmem:[%s6 + $0x2b4] sm:$0xf]
        %v2504 = vld [vmem:[%s6 + $0x2b8] sm:$0xf]
        %v2505 = vld [vmem:[%s6 + $0x2bc] sm:$0xf]
        %v2506 = vld [vmem:[%s6 + $0x2c0] sm:$0xf]
        %v2507 = vld [vmem:[%s6 + $0x2c4] sm:$0xf]
        %v2508 = vld [vmem:[%s6 + $0x2c8] sm:$0xf]
        %v2509 = vld [vmem:[%s6 + $0x2cc] sm:$0xf]
        %v2510 = vld [vmem:[%s6 + $0x2d0] sm:$0xf]
        %v2511 = vld [vmem:[%s6 + $0x2d4] sm:$0xf]
        %v2512 = vld [vmem:[%s6 + $0x2d8] sm:$0xf]
        %v2513 = vld [vmem:[%s6 + $0x2dc] sm:$0xf]
        %v2514 = vld [vmem:[%s6 + $0x2e0] sm:$0xf]
        %v2515 = vld [vmem:[%s6 + $0x2e4] sm:$0xf]
        %v2516 = vld [vmem:[%s6 + $0x2e8] sm:$0xf]
        %v2517 = vld [vmem:[%s6 + $0x2ec] sm:$0xf]
        %v2518 = vld [vmem:[%s6 + $0x2f0] sm:$0xf]
        %v2519 = vld [vmem:[%s6 + $0x2f4] sm:$0xf]
        %v2520 = vld [vmem:[%s6 + $0x2f8] sm:$0xf]
        %v2521 = vld [vmem:[%s6 + $0x2fc] sm:$0xf]
        %v2522 = vld [vmem:[%s6 + $0x300] sm:$0xf]
        %v2523 = vld [vmem:[%s6 + $0x304] sm:$0xf]
        %v2524 = vld [vmem:[%s6 + $0x308] sm:$0xf]
        %v2525 = vld [vmem:[%s6 + $0x30c] sm:$0xf]
        %v2526 = vld [vmem:[%s6 + $0x310] sm:$0xf]
        %v2527 = vld [vmem:[%s6 + $0x314] sm:$0xf]
        %v2528 = vld [vmem:[%s6 + $0x318] sm:$0xf]
        %v2529 = vld [vmem:[%s6 + $0x31c] sm:$0xf]
        %v2530 = vld [vmem:[%s6 + $0x320] sm:$0xf]
        %v2531 = vld [vmem:[%s6 + $0x324] sm:$0xf]
        %v2532 = vld [vmem:[%s6 + $0x328] sm:$0xf]
        %v2533 = vld [vmem:[%s6 + $0x32c] sm:$0xf]
        %v2534 = vld [vmem:[%s6 + $0x330] sm:$0xf]
        %v2535 = vld [vmem:[%s6 + $0x334] sm:$0xf]
        %v2536 = vld [vmem:[%s6 + $0x338] sm:$0xf]
        %v2537 = vld [vmem:[%s6 + $0x33c] sm:$0xf]
        %v2538 = vld [vmem:[%s6 + $0x340] sm:$0xf]
        %v2539 = vld [vmem:[%s6 + $0x344] sm:$0xf]
        %v2540 = vld [vmem:[%s6 + $0x348] sm:$0xf]
        %v2541 = vld [vmem:[%s6 + $0x34c] sm:$0xf]
        %v2542 = vld [vmem:[%s6 + $0x350] sm:$0xf]
        %v2543 = vld [vmem:[%s6 + $0x354] sm:$0xf]
        %v2544 = vld [vmem:[%s6 + $0x358] sm:$0xf]
        %v2545 = vld [vmem:[%s6 + $0x35c] sm:$0xf]
        %v2546 = vld [vmem:[%s6 + $0x360] sm:$0xf]
        %v2547 = vld [vmem:[%s6 + $0x364] sm:$0xf]
        %v2548 = vld [vmem:[%s6 + $0x368] sm:$0xf]
        %v2549 = vld [vmem:[%s6 + $0x36c] sm:$0xf]
        %v2550 = vld [vmem:[%s6 + $0x370] sm:$0xf]
        %v2551 = vld [vmem:[%s6 + $0x374] sm:$0xf]
        %v2552 = vld [vmem:[%s6 + $0x378] sm:$0xf]
        %v2553 = vld [vmem:[%s6 + $0x37c] sm:$0xf]
        %v2554 = vld [vmem:[%s6 + $0x380] sm:$0xf]
        %v2555 = vld [vmem:[%s6 + $0x384] sm:$0xf]
        %v2556 = vld [vmem:[%s6 + $0x388] sm:$0xf]
        %v2557 = vld [vmem:[%s6 + $0x38c] sm:$0xf]
        %v2558 = vld [vmem:[%s6 + $0x390] sm:$0xf]
        %v2559 = vld [vmem:[%s6 + $0x394] sm:$0xf]
        %v2560 = vld [vmem:[%s6 + $0x398] sm:$0xf]
        %v2561 = vld [vmem:[%s6 + $0x39c] sm:$0xf]
        %v2562 = vld [vmem:[%s6 + $0x3a0] sm:$0xf]
        %v2563 = vld [vmem:[%s6 + $0x3a4] sm:$0xf]
        %v2564 = vld [vmem:[%s6 + $0x3a8] sm:$0xf]
        %v2565 = vld [vmem:[%s6 + $0x3ac] sm:$0xf]
        %v2566 = vld [vmem:[%s6 + $0x3b0] sm:$0xf]
        %v2567 = vld [vmem:[%s6 + $0x3b4] sm:$0xf]
        %v2568 = vld [vmem:[%s6 + $0x3b8] sm:$0xf]
        %v2569 = vld [vmem:[%s6 + $0x3bc] sm:$0xf]
        %v2570 = vld [vmem:[%s6 + $0x3c0] sm:$0xf]
        %v2571 = vld [vmem:[%s6 + $0x3c4] sm:$0xf]
        %v2572 = vld [vmem:[%s6 + $0x3c8] sm:$0xf]
        %v2573 = vld [vmem:[%s6 + $0x3cc] sm:$0xf]
        %v2574 = vld [vmem:[%s6 + $0x3d0] sm:$0xf]
        %v2575 = vld [vmem:[%s6 + $0x3d4] sm:$0xf]
        %v2576 = vld [vmem:[%s6 + $0x3d8] sm:$0xf]
        %v2577 = vld [vmem:[%s6 + $0x3dc] sm:$0xf]
        %v2578 = vld [vmem:[%s6 + $0x3e0] sm:$0xf]
        %v2579 = vld [vmem:[%s6 + $0x3e4] sm:$0xf]
        %v2580 = vld [vmem:[%s6 + $0x3e8] sm:$0xf]
        %v2581 = vld [vmem:[%s6 + $0x3ec] sm:$0xf]
        %v2582 = vld [vmem:[%s6 + $0x3f0] sm:$0xf]
        %v2583 = vld [vmem:[%s6 + $0x3f4] sm:$0xf]
        %v2584 = vld [vmem:[%s6 + $0x3f8] sm:$0xf]
        %v2585 = vld [vmem:[%s6 + $0x3fc] sm:$0xf]
        %v2586 = vld [vmem:[%s6 + $0x400] sm:$0xf]
        %v2587 = vld [vmem:[%s6 + $0x404] sm:$0xf]
        %v2588 = vld [vmem:[%s6 + $0x408] sm:$0xf]
        %v2589 = vld [vmem:[%s6 + $0x40c] sm:$0xf]
        %v2590 = vld [vmem:[%s6 + $0x410] sm:$0xf]
        %v2591 = vld [vmem:[%s6 + $0x414] sm:$0xf]
        %v2592 = vld [vmem:[%s6 + $0x418] sm:$0xf]
        %v2593 = vld [vmem:[%s6 + $0x41c] sm:$0xf]
        %v2594 = vld [vmem:[%s6 + $0x420] sm:$0xf]
        %v2595 = vld [vmem:[%s6 + $0x424] sm:$0xf]
        %v2596 = vld [vmem:[%s6 + $0x428] sm:$0xf]
        %v2597 = vld [vmem:[%s6 + $0x42c] sm:$0xf]
        %v2598 = vld [vmem:[%s6 + $0x430] sm:$0xf]
        %v2599 = vld [vmem:[%s6 + $0x434] sm:$0xf]
        %v2600 = vld [vmem:[%s6 + $0x438] sm:$0xf]
        %v2601 = vld [vmem:[%s6 + $0x43c] sm:$0xf]
        %v2602 = vld [vmem:[%s6 + $0x440] sm:$0xf]
        %v2603 = vld [vmem:[%s6 + $0x444] sm:$0xf]
        %v2604 = vld [vmem:[%s6 + $0x448] sm:$0xf]
        %v2605 = vld [vmem:[%s6 + $0x44c] sm:$0xf]
        %v2606 = vld [vmem:[%s6 + $0x450] sm:$0xf]
        %v2607 = vld [vmem:[%s6 + $0x454] sm:$0xf]
        %v2608 = vld [vmem:[%s6 + $0x458] sm:$0xf]
        %v2609 = vld [vmem:[%s6 + $0x45c] sm:$0xf]
        %v2610 = vld [vmem:[%s6 + $0x460] sm:$0xf]
        %v2611 = vld [vmem:[%s6 + $0x464] sm:$0xf]
        %v2612 = vld [vmem:[%s6 + $0x468] sm:$0xf]
        %v2613 = vld [vmem:[%s6 + $0x46c] sm:$0xf]
        %v2614 = vld [vmem:[%s6 + $0x470] sm:$0xf]
        %v2615 = vld [vmem:[%s6 + $0x474] sm:$0xf]
        %v2616 = vld [vmem:[%s6 + $0x478] sm:$0xf]
        %v2617 = vld [vmem:[%s6 + $0x47c] sm:$0xf]
        %v2618 = vld [vmem:[%s6 + $0x480] sm:$0xf]
        %v2619 = vld [vmem:[%s6 + $0x484] sm:$0xf]
        %v2620 = vld [vmem:[%s6 + $0x488] sm:$0xf]
        %v2621 = vld [vmem:[%s6 + $0x48c] sm:$0xf]
        %v2622 = vld [vmem:[%s6 + $0x490] sm:$0xf]
        %v2623 = vld [vmem:[%s6 + $0x494] sm:$0xf]
        %v2624 = vld [vmem:[%s6 + $0x498] sm:$0xf]
        %v2625 = vld [vmem:[%s6 + $0x49c] sm:$0xf]
        %v2626 = vld [vmem:[%s6 + $0x4a0] sm:$0xf]
        %v2627 = vld [vmem:[%s6 + $0x4a4] sm:$0xf]
        %v2628 = vld [vmem:[%s6 + $0x4a8] sm:$0xf]
        %v2629 = vld [vmem:[%s6 + $0x4ac] sm:$0xf]
        %v2630 = vld [vmem:[%s6 + $0x4b0] sm:$0xf]
        %v2631 = vld [vmem:[%s6 + $0x4b4] sm:$0xf]
        %v2632 = vld [vmem:[%s6 + $0x4b8] sm:$0xf]
        %v2633 = vld [vmem:[%s6 + $0x4bc] sm:$0xf]
        %v2634 = vld [vmem:[%s6 + $0x4c0] sm:$0xf]
        %v2635 = vld [vmem:[%s6 + $0x4c4] sm:$0xf]
        %v2636 = vld [vmem:[%s6 + $0x4c8] sm:$0xf]
        %v2637 = vld [vmem:[%s6 + $0x4cc] sm:$0xf]
        %v2638 = vld [vmem:[%s6 + $0x4d0] sm:$0xf]
        %v2639 = vld [vmem:[%s6 + $0x4d4] sm:$0xf]
        %v2640 = vld [vmem:[%s6 + $0x4d8] sm:$0xf]
        %v2641 = vld [vmem:[%s6 + $0x4dc] sm:$0xf]
        %v2642 = vld [vmem:[%s6 + $0x4e0] sm:$0xf]
        %v2643 = vld [vmem:[%s6 + $0x4e4] sm:$0xf]
        %v2644 = vld [vmem:[%s6 + $0x4e8] sm:$0xf]
        %v2645 = vld [vmem:[%s6 + $0x4ec] sm:$0xf]
        %v2646 = vld [vmem:[%s6 + $0x4f0] sm:$0xf]
        %v2647 = vld [vmem:[%s6 + $0x4f4] sm:$0xf]
        %v2648 = vld [vmem:[%s6 + $0x4f8] sm:$0xf]
        %v2649 = vld [vmem:[%s6 + $0x4fc] sm:$0xf]
        %v2650 = vld [vmem:[%s7] sm:$0x1]
        %v2971 = vunpack.c.l.b16 %v2330
        %v2972 = vunpack.c.l.b16 %v2331
        %v2973 = vunpack.c.l.b16 %v2332
        %v2974 = vunpack.c.l.b16 %v2333
        %v2975 = vunpack.c.l.b16 %v2334
        %v2976 = vunpack.c.l.b16 %v2335
        %v2977 = vunpack.c.l.b16 %v2336
        %v2978 = vunpack.c.l.b16 %v2337
        %v2979 = vunpack.c.l.b16 %v2338
        %v2980 = vunpack.c.l.b16 %v2339
        %v2981 = vunpack.c.l.b16 %v2340
        %v2982 = vunpack.c.l.b16 %v2341
        %v2983 = vunpack.c.l.b16 %v2342
        %v2984 = vunpack.c.l.b16 %v2343
        %v2985 = vunpack.c.l.b16 %v2344
        %v2986 = vunpack.c.l.b16 %v2345
        %v2987 = vunpack.c.l.b16 %v2346
        %v2988 = vunpack.c.l.b16 %v2347
        %v2989 = vunpack.c.l.b16 %v2348
        %v2990 = vunpack.c.l.b16 %v2349
        %v2991 = vunpack.c.l.b16 %v2350
        %v2992 = vunpack.c.l.b16 %v2351
        %v2993 = vunpack.c.l.b16 %v2352
        %v2994 = vunpack.c.l.b16 %v2353
        %v2995 = vunpack.c.l.b16 %v2354
        %v2996 = vunpack.c.l.b16 %v2355
        %v2997 = vunpack.c.l.b16 %v2356
        %v2998 = vunpack.c.l.b16 %v2357
        %v2999 = vunpack.c.l.b16 %v2358
        %v3000 = vunpack.c.l.b16 %v2359
        %v3001 = vunpack.c.l.b16 %v2360
        %v3002 = vunpack.c.l.b16 %v2361
        %v3003 = vunpack.c.l.b16 %v2362
        %v3004 = vunpack.c.l.b16 %v2363
        %v3005 = vunpack.c.l.b16 %v2364
        %v3006 = vunpack.c.l.b16 %v2365
        %v3007 = vunpack.c.l.b16 %v2366
        %v3008 = vunpack.c.l.b16 %v2367
        %v3009 = vunpack.c.l.b16 %v2368
        %v3010 = vunpack.c.l.b16 %v2369
        %v3011 = vunpack.c.l.b16 %v2370
        %v3012 = vunpack.c.l.b16 %v2371
        %v3013 = vunpack.c.l.b16 %v2372
        %v3014 = vunpack.c.l.b16 %v2373
        %v3015 = vunpack.c.l.b16 %v2374
        %v3016 = vunpack.c.l.b16 %v2375
        %v3017 = vunpack.c.l.b16 %v2376
        %v3018 = vunpack.c.l.b16 %v2377
        %v3019 = vunpack.c.l.b16 %v2378
        %v3020 = vunpack.c.l.b16 %v2379
        %v3021 = vunpack.c.l.b16 %v2380
        %v3022 = vunpack.c.l.b16 %v2381
        %v3023 = vunpack.c.l.b16 %v2382
        %v3024 = vunpack.c.l.b16 %v2383
        %v3025 = vunpack.c.l.b16 %v2384
        %v3026 = vunpack.c.l.b16 %v2385
        %v3027 = vunpack.c.l.b16 %v2386
        %v3028 = vunpack.c.l.b16 %v2387
        %v3029 = vunpack.c.l.b16 %v2388
        %v3030 = vunpack.c.l.b16 %v2389
        %v3031 = vunpack.c.l.b16 %v2390
        %v3032 = vunpack.c.l.b16 %v2391
        %v3033 = vunpack.c.l.b16 %v2392
        %v3034 = vunpack.c.l.b16 %v2393
        %v3035 = vunpack.c.l.b16 %v2394
        %v3036 = vunpack.c.l.b16 %v2395
        %v3037 = vunpack.c.l.b16 %v2396
        %v3038 = vunpack.c.l.b16 %v2397
        %v3039 = vunpack.c.l.b16 %v2398
        %v3040 = vunpack.c.l.b16 %v2399
        %v3041 = vunpack.c.l.b16 %v2400
        %v3042 = vunpack.c.l.b16 %v2401
        %v3043 = vunpack.c.l.b16 %v2402
        %v3044 = vunpack.c.l.b16 %v2403
        %v3045 = vunpack.c.l.b16 %v2404
        %v3046 = vunpack.c.l.b16 %v2405
        %v3047 = vunpack.c.l.b16 %v2406
        %v3048 = vunpack.c.l.b16 %v2407
        %v3049 = vunpack.c.l.b16 %v2408
        %v3050 = vunpack.c.l.b16 %v2409
        %v3051 = vunpack.c.l.b16 %v2410
        %v3052 = vunpack.c.l.b16 %v2411
        %v3053 = vunpack.c.l.b16 %v2412
        %v3054 = vunpack.c.l.b16 %v2413
        %v3055 = vunpack.c.l.b16 %v2414
        %v3056 = vunpack.c.l.b16 %v2415
        %v3057 = vunpack.c.l.b16 %v2416
        %v3058 = vunpack.c.l.b16 %v2417
        %v3059 = vunpack.c.l.b16 %v2418
        %v3060 = vunpack.c.l.b16 %v2419
        %v3061 = vunpack.c.l.b16 %v2420
        %v3062 = vunpack.c.l.b16 %v2421
        %v3063 = vunpack.c.l.b16 %v2422
        %v3064 = vunpack.c.l.b16 %v2423
        %v3065 = vunpack.c.l.b16 %v2424
        %v3066 = vunpack.c.l.b16 %v2425
        %v3067 = vunpack.c.l.b16 %v2426
        %v3068 = vunpack.c.l.b16 %v2427
        %v3069 = vunpack.c.l.b16 %v2428
        %v3070 = vunpack.c.l.b16 %v2429
        %v3071 = vunpack.c.l.b16 %v2430
        %v3072 = vunpack.c.l.b16 %v2431
        %v3073 = vunpack.c.l.b16 %v2432
        %v3074 = vunpack.c.l.b16 %v2433
        %v3075 = vunpack.c.l.b16 %v2434
        %v3076 = vunpack.c.l.b16 %v2435
        %v3077 = vunpack.c.l.b16 %v2436
        %v3078 = vunpack.c.l.b16 %v2437
        %v3079 = vunpack.c.l.b16 %v2438
        %v3080 = vunpack.c.l.b16 %v2439
        %v3081 = vunpack.c.l.b16 %v2440
        %v3082 = vunpack.c.l.b16 %v2441
        %v3083 = vunpack.c.l.b16 %v2442
        %v3084 = vunpack.c.l.b16 %v2443
        %v3085 = vunpack.c.l.b16 %v2444
        %v3086 = vunpack.c.l.b16 %v2445
        %v3087 = vunpack.c.l.b16 %v2446
        %v3088 = vunpack.c.l.b16 %v2447
        %v3089 = vunpack.c.l.b16 %v2448
        %v3090 = vunpack.c.l.b16 %v2449
        %v3091 = vunpack.c.l.b16 %v2450
        %v3092 = vunpack.c.l.b16 %v2451
        %v3093 = vunpack.c.l.b16 %v2452
        %v3094 = vunpack.c.l.b16 %v2453
        %v3095 = vunpack.c.l.b16 %v2454
        %v3096 = vunpack.c.l.b16 %v2455
        %v3097 = vunpack.c.l.b16 %v2456
        %v3098 = vunpack.c.l.b16 %v2457
        %v3099 = vunpack.c.l.b16 %v2458
        %v3100 = vunpack.c.l.b16 %v2459
        %v3101 = vunpack.c.l.b16 %v2460
        %v3102 = vunpack.c.l.b16 %v2461
        %v3103 = vunpack.c.l.b16 %v2462
        %v3104 = vunpack.c.l.b16 %v2463
        %v3105 = vunpack.c.l.b16 %v2464
        %v3106 = vunpack.c.l.b16 %v2465
        %v3107 = vunpack.c.l.b16 %v2466
        %v3108 = vunpack.c.l.b16 %v2467
        %v3109 = vunpack.c.l.b16 %v2468
        %v3110 = vunpack.c.l.b16 %v2469
        %v3111 = vunpack.c.l.b16 %v2470
        %v3112 = vunpack.c.l.b16 %v2471
        %v3113 = vunpack.c.l.b16 %v2472
        %v3114 = vunpack.c.l.b16 %v2473
        %v3115 = vunpack.c.l.b16 %v2474
        %v3116 = vunpack.c.l.b16 %v2475
        %v3117 = vunpack.c.l.b16 %v2476
        %v3118 = vunpack.c.l.b16 %v2477
        %v3119 = vunpack.c.l.b16 %v2478
        %v3120 = vunpack.c.l.b16 %v2479
        %v3121 = vunpack.c.l.b16 %v2480
        %v3122 = vunpack.c.l.b16 %v2481
        %v3123 = vunpack.c.l.b16 %v2482
        %v3124 = vunpack.c.l.b16 %v2483
        %v3125 = vunpack.c.l.b16 %v2484
        %v3126 = vunpack.c.l.b16 %v2485
        %v3127 = vunpack.c.l.b16 %v2486
        %v3128 = vunpack.c.l.b16 %v2487
        %v3129 = vunpack.c.l.b16 %v2488
        %v3130 = vunpack.c.l.b16 %v2489
        %v3131 = vunpack.c.l.b16 %v2490
        %v3132 = vunpack.c.l.b16 %v2491
        %v3133 = vunpack.c.l.b16 %v2492
        %v3134 = vunpack.c.l.b16 %v2493
        %v3135 = vunpack.c.l.b16 %v2494
        %v3136 = vunpack.c.l.b16 %v2495
        %v3137 = vunpack.c.l.b16 %v2496
        %v3138 = vunpack.c.l.b16 %v2497
        %v3139 = vunpack.c.l.b16 %v2498
        %v3140 = vunpack.c.l.b16 %v2499
        %v3141 = vunpack.c.l.b16 %v2500
        %v3142 = vunpack.c.l.b16 %v2501
        %v3143 = vunpack.c.l.b16 %v2502
        %v3144 = vunpack.c.l.b16 %v2503
        %v3145 = vunpack.c.l.b16 %v2504
        %v3146 = vunpack.c.l.b16 %v2505
        %v3147 = vunpack.c.l.b16 %v2506
        %v3148 = vunpack.c.l.b16 %v2507
        %v3149 = vunpack.c.l.b16 %v2508
        %v3150 = vunpack.c.l.b16 %v2509
        %v3151 = vunpack.c.l.b16 %v2510
        %v3152 = vunpack.c.l.b16 %v2511
        %v3153 = vunpack.c.l.b16 %v2512
        %v3154 = vunpack.c.l.b16 %v2513
        %v3155 = vunpack.c.l.b16 %v2514
        %v3156 = vunpack.c.l.b16 %v2515
        %v3157 = vunpack.c.l.b16 %v2516
        %v3158 = vunpack.c.l.b16 %v2517
        %v3159 = vunpack.c.l.b16 %v2518
        %v3160 = vunpack.c.l.b16 %v2519
        %v3161 = vunpack.c.l.b16 %v2520
        %v3162 = vunpack.c.l.b16 %v2521
        %v3163 = vunpack.c.l.b16 %v2522
        %v3164 = vunpack.c.l.b16 %v2523
        %v3165 = vunpack.c.l.b16 %v2524
        %v3166 = vunpack.c.l.b16 %v2525
        %v3167 = vunpack.c.l.b16 %v2526
        %v3168 = vunpack.c.l.b16 %v2527
        %v3169 = vunpack.c.l.b16 %v2528
        %v3170 = vunpack.c.l.b16 %v2529
        %v3171 = vunpack.c.l.b16 %v2530
        %v3172 = vunpack.c.l.b16 %v2531
        %v3173 = vunpack.c.l.b16 %v2532
        %v3174 = vunpack.c.l.b16 %v2533
        %v3175 = vunpack.c.l.b16 %v2534
        %v3176 = vunpack.c.l.b16 %v2535
        %v3177 = vunpack.c.l.b16 %v2536
        %v3178 = vunpack.c.l.b16 %v2537
        %v3179 = vunpack.c.l.b16 %v2538
        %v3180 = vunpack.c.l.b16 %v2539
        %v3181 = vunpack.c.l.b16 %v2540
        %v3182 = vunpack.c.l.b16 %v2541
        %v3183 = vunpack.c.l.b16 %v2542
        %v3184 = vunpack.c.l.b16 %v2543
        %v3185 = vunpack.c.l.b16 %v2544
        %v3186 = vunpack.c.l.b16 %v2545
        %v3187 = vunpack.c.l.b16 %v2546
        %v3188 = vunpack.c.l.b16 %v2547
        %v3189 = vunpack.c.l.b16 %v2548
        %v3190 = vunpack.c.l.b16 %v2549
        %v3191 = vunpack.c.l.b16 %v2550
        %v3192 = vunpack.c.l.b16 %v2551
        %v3193 = vunpack.c.l.b16 %v2552
        %v3194 = vunpack.c.l.b16 %v2553
        %v3195 = vunpack.c.l.b16 %v2554
        %v3196 = vunpack.c.l.b16 %v2555
        %v3197 = vunpack.c.l.b16 %v2556
        %v3198 = vunpack.c.l.b16 %v2557
        %v3199 = vunpack.c.l.b16 %v2558
        %v3200 = vunpack.c.l.b16 %v2559
        %v3201 = vunpack.c.l.b16 %v2560
        %v3202 = vunpack.c.l.b16 %v2561
        %v3203 = vunpack.c.l.b16 %v2562
        %v3204 = vunpack.c.l.b16 %v2563
        %v3205 = vunpack.c.l.b16 %v2564
        %v3206 = vunpack.c.l.b16 %v2565
        %v3207 = vunpack.c.l.b16 %v2566
        %v3208 = vunpack.c.l.b16 %v2567
        %v3209 = vunpack.c.l.b16 %v2568
        %v3210 = vunpack.c.l.b16 %v2569
        %v3211 = vunpack.c.l.b16 %v2570
        %v3212 = vunpack.c.l.b16 %v2571
        %v3213 = vunpack.c.l.b16 %v2572
        %v3214 = vunpack.c.l.b16 %v2573
        %v3215 = vunpack.c.l.b16 %v2574
        %v3216 = vunpack.c.l.b16 %v2575
        %v3217 = vunpack.c.l.b16 %v2576
        %v3218 = vunpack.c.l.b16 %v2577
        %v3219 = vunpack.c.l.b16 %v2578
        %v3220 = vunpack.c.l.b16 %v2579
        %v3221 = vunpack.c.l.b16 %v2580
        %v3222 = vunpack.c.l.b16 %v2581
        %v3223 = vunpack.c.l.b16 %v2582
        %v3224 = vunpack.c.l.b16 %v2583
        %v3225 = vunpack.c.l.b16 %v2584
        %v3226 = vunpack.c.l.b16 %v2585
        %v3227 = vunpack.c.l.b16 %v2586
        %v3228 = vunpack.c.l.b16 %v2587
        %v3229 = vunpack.c.l.b16 %v2588
        %v3230 = vunpack.c.l.b16 %v2589
        %v3231 = vunpack.c.l.b16 %v2590
        %v3232 = vunpack.c.l.b16 %v2591
        %v3233 = vunpack.c.l.b16 %v2592
        %v3234 = vunpack.c.l.b16 %v2593
        %v3235 = vunpack.c.l.b16 %v2594
        %v3236 = vunpack.c.l.b16 %v2595
        %v3237 = vunpack.c.l.b16 %v2596
        %v3238 = vunpack.c.l.b16 %v2597
        %v3239 = vunpack.c.l.b16 %v2598
        %v3240 = vunpack.c.l.b16 %v2599
        %v3241 = vunpack.c.l.b16 %v2600
        %v3242 = vunpack.c.l.b16 %v2601
        %v3243 = vunpack.c.l.b16 %v2602
        %v3244 = vunpack.c.l.b16 %v2603
        %v3245 = vunpack.c.l.b16 %v2604
        %v3246 = vunpack.c.l.b16 %v2605
        %v3247 = vunpack.c.l.b16 %v2606
        %v3248 = vunpack.c.l.b16 %v2607
        %v3249 = vunpack.c.l.b16 %v2608
        %v3250 = vunpack.c.l.b16 %v2609
        %v3251 = vunpack.c.l.b16 %v2610
        %v3252 = vunpack.c.l.b16 %v2611
        %v3253 = vunpack.c.l.b16 %v2612
        %v3254 = vunpack.c.l.b16 %v2613
        %v3255 = vunpack.c.l.b16 %v2614
        %v3256 = vunpack.c.l.b16 %v2615
        %v3257 = vunpack.c.l.b16 %v2616
        %v3258 = vunpack.c.l.b16 %v2617
        %v3259 = vunpack.c.l.b16 %v2618
        %v3260 = vunpack.c.l.b16 %v2619
        %v3261 = vunpack.c.l.b16 %v2620
        %v3262 = vunpack.c.l.b16 %v2621
        %v3263 = vunpack.c.l.b16 %v2622
        %v3264 = vunpack.c.l.b16 %v2623
        %v3265 = vunpack.c.l.b16 %v2624
        %v3266 = vunpack.c.l.b16 %v2625
        %v3267 = vunpack.c.l.b16 %v2626
        %v3268 = vunpack.c.l.b16 %v2627
        %v3269 = vunpack.c.l.b16 %v2628
        %v3270 = vunpack.c.l.b16 %v2629
        %v3271 = vunpack.c.l.b16 %v2630
        %v3272 = vunpack.c.l.b16 %v2631
        %v3273 = vunpack.c.l.b16 %v2632
        %v3274 = vunpack.c.l.b16 %v2633
        %v3275 = vunpack.c.l.b16 %v2634
        %v3276 = vunpack.c.l.b16 %v2635
        %v3277 = vunpack.c.l.b16 %v2636
        %v3278 = vunpack.c.l.b16 %v2637
        %v3279 = vunpack.c.l.b16 %v2638
        %v3280 = vunpack.c.l.b16 %v2639
        %v3281 = vunpack.c.l.b16 %v2640
        %v3282 = vunpack.c.l.b16 %v2641
        %v3283 = vunpack.c.l.b16 %v2642
        %v3284 = vunpack.c.l.b16 %v2643
        %v3285 = vunpack.c.l.b16 %v2644
        %v3286 = vunpack.c.l.b16 %v2645
        %v3287 = vunpack.c.l.b16 %v2646
        %v3288 = vunpack.c.l.b16 %v2647
        %v3289 = vunpack.c.l.b16 %v2648
        %v3290 = vunpack.c.l.b16 %v2649
        %v3291 = vpack.c.b16 %v2972, %v2971
        %v3292 = vpack.c.b16 %v2974, %v2973
        %v3293 = vpack.c.b16 %v2976, %v2975
        %v3294 = vpack.c.b16 %v2978, %v2977
        %v3295 = vpack.c.b16 %v2980, %v2979
        %v3296 = vpack.c.b16 %v2982, %v2981
        %v3297 = vpack.c.b16 %v2984, %v2983
        %v3298 = vpack.c.b16 %v2986, %v2985
        %v3299 = vpack.c.b16 %v2988, %v2987
        %v3300 = vpack.c.b16 %v2990, %v2989
        %v3301 = vpack.c.b16 %v2992, %v2991
        %v3302 = vpack.c.b16 %v2994, %v2993
        %v3303 = vpack.c.b16 %v2996, %v2995
        %v3304 = vpack.c.b16 %v2998, %v2997
        %v3305 = vpack.c.b16 %v3000, %v2999
        %v3306 = vpack.c.b16 %v3002, %v3001
        %v3307 = vpack.c.b16 %v3004, %v3003
        %v3308 = vpack.c.b16 %v3006, %v3005
        %v3309 = vpack.c.b16 %v3008, %v3007
        %v3310 = vpack.c.b16 %v3010, %v3009
        %v3311 = vpack.c.b16 %v3012, %v3011
        %v3312 = vpack.c.b16 %v3014, %v3013
        %v3313 = vpack.c.b16 %v3016, %v3015
        %v3314 = vpack.c.b16 %v3018, %v3017
        %v3315 = vpack.c.b16 %v3020, %v3019
        %v3316 = vpack.c.b16 %v3022, %v3021
        %v3317 = vpack.c.b16 %v3024, %v3023
        %v3318 = vpack.c.b16 %v3026, %v3025
        %v3319 = vpack.c.b16 %v3028, %v3027
        %v3320 = vpack.c.b16 %v3030, %v3029
        %v3321 = vpack.c.b16 %v3032, %v3031
        %v3322 = vpack.c.b16 %v3034, %v3033
        %v3323 = vpack.c.b16 %v3036, %v3035
        %v3324 = vpack.c.b16 %v3038, %v3037
        %v3325 = vpack.c.b16 %v3040, %v3039
        %v3326 = vpack.c.b16 %v3042, %v3041
        %v3327 = vpack.c.b16 %v3044, %v3043
        %v3328 = vpack.c.b16 %v3046, %v3045
        %v3329 = vpack.c.b16 %v3048, %v3047
        %v3330 = vpack.c.b16 %v3050, %v3049
        %v3331 = vpack.c.b16 %v3052, %v3051
        %v3332 = vpack.c.b16 %v3054, %v3053
        %v3333 = vpack.c.b16 %v3056, %v3055
        %v3334 = vpack.c.b16 %v3058, %v3057
        %v3335 = vpack.c.b16 %v3060, %v3059
        %v3336 = vpack.c.b16 %v3062, %v3061
        %v3337 = vpack.c.b16 %v3064, %v3063
        %v3338 = vpack.c.b16 %v3066, %v3065
        %v3339 = vpack.c.b16 %v3068, %v3067
        %v3340 = vpack.c.b16 %v3070, %v3069
        %v3341 = vpack.c.b16 %v3072, %v3071
        %v3342 = vpack.c.b16 %v3074, %v3073
        %v3343 = vpack.c.b16 %v3076, %v3075
        %v3344 = vpack.c.b16 %v3078, %v3077
        %v3345 = vpack.c.b16 %v3080, %v3079
        %v3346 = vpack.c.b16 %v3082, %v3081
        %v3347 = vpack.c.b16 %v3084, %v3083
        %v3348 = vpack.c.b16 %v3086, %v3085
        %v3349 = vpack.c.b16 %v3088, %v3087
        %v3350 = vpack.c.b16 %v3090, %v3089
        %v3351 = vpack.c.b16 %v3092, %v3091
        %v3352 = vpack.c.b16 %v3094, %v3093
        %v3353 = vpack.c.b16 %v3096, %v3095
        %v3354 = vpack.c.b16 %v3098, %v3097
        %v3355 = vpack.c.b16 %v3100, %v3099
        %v3356 = vpack.c.b16 %v3102, %v3101
        %v3357 = vpack.c.b16 %v3104, %v3103
        %v3358 = vpack.c.b16 %v3106, %v3105
        %v3359 = vpack.c.b16 %v3108, %v3107
        %v3360 = vpack.c.b16 %v3110, %v3109
        %v3361 = vpack.c.b16 %v3112, %v3111
        %v3362 = vpack.c.b16 %v3114, %v3113
        %v3363 = vpack.c.b16 %v3116, %v3115
        %v3364 = vpack.c.b16 %v3118, %v3117
        %v3365 = vpack.c.b16 %v3120, %v3119
        %v3366 = vpack.c.b16 %v3122, %v3121
        %v3367 = vpack.c.b16 %v3124, %v3123
        %v3368 = vpack.c.b16 %v3126, %v3125
        %v3369 = vpack.c.b16 %v3128, %v3127
        %v3370 = vpack.c.b16 %v3130, %v3129
        %v3371 = vpack.c.b16 %v3132, %v3131
        %v3372 = vpack.c.b16 %v3134, %v3133
        %v3373 = vpack.c.b16 %v3136, %v3135
        %v3374 = vpack.c.b16 %v3138, %v3137
        %v3375 = vpack.c.b16 %v3140, %v3139
        %v3376 = vpack.c.b16 %v3142, %v3141
        %v3377 = vpack.c.b16 %v3144, %v3143
        %v3378 = vpack.c.b16 %v3146, %v3145
        %v3379 = vpack.c.b16 %v3148, %v3147
        %v3380 = vpack.c.b16 %v3150, %v3149
        %v3381 = vpack.c.b16 %v3152, %v3151
        %v3382 = vpack.c.b16 %v3154, %v3153
        %v3383 = vpack.c.b16 %v3156, %v3155
        %v3384 = vpack.c.b16 %v3158, %v3157
        %v3385 = vpack.c.b16 %v3160, %v3159
        %v3386 = vpack.c.b16 %v3162, %v3161
        %v3387 = vpack.c.b16 %v3164, %v3163
        %v3388 = vpack.c.b16 %v3166, %v3165
        %v3389 = vpack.c.b16 %v3168, %v3167
        %v3390 = vpack.c.b16 %v3170, %v3169
        %v3391 = vpack.c.b16 %v3172, %v3171
        %v3392 = vpack.c.b16 %v3174, %v3173
        %v3393 = vpack.c.b16 %v3176, %v3175
        %v3394 = vpack.c.b16 %v3178, %v3177
        %v3395 = vpack.c.b16 %v3180, %v3179
        %v3396 = vpack.c.b16 %v3182, %v3181
        %v3397 = vpack.c.b16 %v3184, %v3183
        %v3398 = vpack.c.b16 %v3186, %v3185
        %v3399 = vpack.c.b16 %v3188, %v3187
        %v3400 = vpack.c.b16 %v3190, %v3189
        %v3401 = vpack.c.b16 %v3192, %v3191
        %v3402 = vpack.c.b16 %v3194, %v3193
        %v3403 = vpack.c.b16 %v3196, %v3195
        %v3404 = vpack.c.b16 %v3198, %v3197
        %v3405 = vpack.c.b16 %v3200, %v3199
        %v3406 = vpack.c.b16 %v3202, %v3201
        %v3407 = vpack.c.b16 %v3204, %v3203
        %v3408 = vpack.c.b16 %v3206, %v3205
        %v3409 = vpack.c.b16 %v3208, %v3207
        %v3410 = vpack.c.b16 %v3210, %v3209
        %v3411 = vpack.c.b16 %v3212, %v3211
        %v3412 = vpack.c.b16 %v3214, %v3213
        %v3413 = vpack.c.b16 %v3216, %v3215
        %v3414 = vpack.c.b16 %v3218, %v3217
        %v3415 = vpack.c.b16 %v3220, %v3219
        %v3416 = vpack.c.b16 %v3222, %v3221
        %v3417 = vpack.c.b16 %v3224, %v3223
        %v3418 = vpack.c.b16 %v3226, %v3225
        %v3419 = vpack.c.b16 %v3228, %v3227
        %v3420 = vpack.c.b16 %v3230, %v3229
        %v3421 = vpack.c.b16 %v3232, %v3231
        %v3422 = vpack.c.b16 %v3234, %v3233
        %v3423 = vpack.c.b16 %v3236, %v3235
        %v3424 = vpack.c.b16 %v3238, %v3237
        %v3425 = vpack.c.b16 %v3240, %v3239
        %v3426 = vpack.c.b16 %v3242, %v3241
        %v3427 = vpack.c.b16 %v3244, %v3243
        %v3428 = vpack.c.b16 %v3246, %v3245
        %v3429 = vpack.c.b16 %v3248, %v3247
        %v3430 = vpack.c.b16 %v3250, %v3249
        %v3431 = vpack.c.b16 %v3252, %v3251
        %v3432 = vpack.c.b16 %v3254, %v3253
        %v3433 = vpack.c.b16 %v3256, %v3255
        %v3434 = vpack.c.b16 %v3258, %v3257
        %v3435 = vpack.c.b16 %v3260, %v3259
        %v3436 = vpack.c.b16 %v3262, %v3261
        %v3437 = vpack.c.b16 %v3264, %v3263
        %v3438 = vpack.c.b16 %v3266, %v3265
        %v3439 = vpack.c.b16 %v3268, %v3267
        %v3440 = vpack.c.b16 %v3270, %v3269
        %v3441 = vpack.c.b16 %v3272, %v3271
        %v3442 = vpack.c.b16 %v3274, %v3273
        %v3443 = vpack.c.b16 %v3276, %v3275
        %v3444 = vpack.c.b16 %v3278, %v3277
        %v3445 = vpack.c.b16 %v3280, %v3279
        %v3446 = vpack.c.b16 %v3282, %v3281
        %v3447 = vpack.c.b16 %v3284, %v3283
        %v3448 = vpack.c.b16 %v3286, %v3285
        %v3449 = vpack.c.b16 %v3288, %v3287
        %v3450 = vpack.c.b16 %v3290, %v3289
        %3611 = vmatpush.bf16.msra.mxu0 %v3298
        %3612 = vmatpush.bf16.msra.mxu0 %v3297
        %3613 = vmatpush.bf16.msra.mxu0 %v3296
        %3614 = vmatpush.bf16.msra.mxu0 %v3295
        %3615 = vmatpush.bf16.msra.mxu0 %v3294
        %3616 = vmatpush.bf16.msra.mxu0 %v3293
        %3617 = vmatpush.bf16.msra.mxu0 %v3292
        %3618 = vmatpush.bf16.msra.mxu0 %v3291
        %3619 = vmatmul.bf16.gmra.mxu0 %v2310
        %v3620 = vpop.f32.mrf.mxu0
        %v3621 = vadd.f32 %v2650, %v3620
        %v3622 = vpop.f32.mrf.mxu0
        %3623 = vdwg.mxu0
        %3624 = vmatpush.bf16.msra.mxu0 %v3306
        %3625 = vmatpush.bf16.msra.mxu0 %v3305
        %3626 = vmatpush.bf16.msra.mxu0 %v3304
        %3627 = vmatpush.bf16.msra.mxu0 %v3303
        %3628 = vmatpush.bf16.msra.mxu0 %v3302
        %3629 = vmatpush.bf16.msra.mxu0 %v3301
        %3630 = vmatpush.bf16.msra.mxu0 %v3300
        %3631 = vmatpush.bf16.msra.mxu0 %v3299
        %3632 = vmatmul.bf16.gmra.mxu0 %v2311
        %v3633 = vpop.f32.mrf.mxu0
        %v3634 = vadd.f32 %v3621, %v3633
        %v3635 = vpop.f32.mrf.mxu0
        %3636 = vdwg.mxu0
        %3637 = vmatpush.bf16.msra.mxu0 %v3314
        %3638 = vmatpush.bf16.msra.mxu0 %v3313
        %3639 = vmatpush.bf16.msra.mxu0 %v3312
        %3640 = vmatpush.bf16.msra.mxu0 %v3311
        %3641 = vmatpush.bf16.msra.mxu0 %v3310
        %3642 = vmatpush.bf16.msra.mxu0 %v3309
        %3643 = vmatpush.bf16.msra.mxu0 %v3308
        %3644 = vmatpush.bf16.msra.mxu0 %v3307
        %3645 = vmatmul.bf16.gmra.mxu0 %v2312
        %v3646 = vpop.f32.mrf.mxu0
        %v3647 = vadd.f32 %v3634, %v3646
        %v3648 = vpop.f32.mrf.mxu0
        %3649 = vdwg.mxu0
        %3650 = vmatpush.bf16.msra.mxu0 %v3322
        %3651 = vmatpush.bf16.msra.mxu0 %v3321
        %3652 = vmatpush.bf16.msra.mxu0 %v3320
        %3653 = vmatpush.bf16.msra.mxu0 %v3319
        %3654 = vmatpush.bf16.msra.mxu0 %v3318
        %3655 = vmatpush.bf16.msra.mxu0 %v3317
        %3656 = vmatpush.bf16.msra.mxu0 %v3316
        %3657 = vmatpush.bf16.msra.mxu0 %v3315
        %3658 = vmatmul.bf16.gmra.mxu0 %v2313
        %v3659 = vpop.f32.mrf.mxu0
        %v3660 = vadd.f32 %v3647, %v3659
        %v3661 = vpop.f32.mrf.mxu0
        %3662 = vdwg.mxu0
        %3663 = vmatpush.bf16.msra.mxu0 %v3330
        %3664 = vmatpush.bf16.msra.mxu0 %v3329
        %3665 = vmatpush.bf16.msra.mxu0 %v3328
        %3666 = vmatpush.bf16.msra.mxu0 %v3327
        %3667 = vmatpush.bf16.msra.mxu0 %v3326
        %3668 = vmatpush.bf16.msra.mxu0 %v3325
        %3669 = vmatpush.bf16.msra.mxu0 %v3324
        %3670 = vmatpush.bf16.msra.mxu0 %v3323
        %3671 = vmatmul.bf16.gmra.mxu0 %v2314
        %v3672 = vpop.f32.mrf.mxu0
        %v3673 = vadd.f32 %v3660, %v3672
        %v3674 = vpop.f32.mrf.mxu0
        %3675 = vdwg.mxu0
        %3676 = vmatpush.bf16.msra.mxu0 %v3338
        %3677 = vmatpush.bf16.msra.mxu0 %v3337
        %3678 = vmatpush.bf16.msra.mxu0 %v3336
        %3679 = vmatpush.bf16.msra.mxu0 %v3335
        %3680 = vmatpush.bf16.msra.mxu0 %v3334
        %3681 = vmatpush.bf16.msra.mxu0 %v3333
        %3682 = vmatpush.bf16.msra.mxu0 %v3332
        %3683 = vmatpush.bf16.msra.mxu0 %v3331
        %3684 = vmatmul.bf16.gmra.mxu0 %v2315
        %v3685 = vpop.f32.mrf.mxu0
        %v3686 = vadd.f32 %v3673, %v3685
        %v3687 = vpop.f32.mrf.mxu0
        %3688 = vdwg.mxu0
        %3689 = vmatpush.bf16.msra.mxu0 %v3346
        %3690 = vmatpush.bf16.msra.mxu0 %v3345
        %3691 = vmatpush.bf16.msra.mxu0 %v3344
        %3692 = vmatpush.bf16.msra.mxu0 %v3343
        %3693 = vmatpush.bf16.msra.mxu0 %v3342
        %3694 = vmatpush.bf16.msra.mxu0 %v3341
        %3695 = vmatpush.bf16.msra.mxu0 %v3340
        %3696 = vmatpush.bf16.msra.mxu0 %v3339
        %3697 = vmatmul.bf16.gmra.mxu0 %v2316
        %v3698 = vpop.f32.mrf.mxu0
        %v3699 = vadd.f32 %v3686, %v3698
        %v3700 = vpop.f32.mrf.mxu0
        %3701 = vdwg.mxu0
        %3702 = vmatpush.bf16.msra.mxu0 %v3354
        %3703 = vmatpush.bf16.msra.mxu0 %v3353
        %3704 = vmatpush.bf16.msra.mxu0 %v3352
        %3705 = vmatpush.bf16.msra.mxu0 %v3351
        %3706 = vmatpush.bf16.msra.mxu0 %v3350
        %3707 = vmatpush.bf16.msra.mxu0 %v3349
        %3708 = vmatpush.bf16.msra.mxu0 %v3348
        %3709 = vmatpush.bf16.msra.mxu0 %v3347
        %3710 = vmatmul.bf16.gmra.mxu0 %v2317
        %v3711 = vpop.f32.mrf.mxu0
        %v3712 = vadd.f32 %v3699, %v3711
        %v3713 = vpop.f32.mrf.mxu0
        %3714 = vdwg.mxu0
        %3715 = vmatpush.bf16.msra.mxu0 %v3362
        %3716 = vmatpush.bf16.msra.mxu0 %v3361
        %3717 = vmatpush.bf16.msra.mxu0 %v3360
        %3718 = vmatpush.bf16.msra.mxu0 %v3359
        %3719 = vmatpush.bf16.msra.mxu0 %v3358
        %3720 = vmatpush.bf16.msra.mxu0 %v3357
        %3721 = vmatpush.bf16.msra.mxu0 %v3356
        %3722 = vmatpush.bf16.msra.mxu0 %v3355
        %3723 = vmatmul.bf16.gmra.mxu0 %v2318
        %v3724 = vpop.f32.mrf.mxu0
        %v3725 = vadd.f32 %v3712, %v3724
        %v3726 = vpop.f32.mrf.mxu0
        %3727 = vdwg.mxu0
        %3728 = vmatpush.bf16.msra.mxu0 %v3370
        %3729 = vmatpush.bf16.msra.mxu0 %v3369
        %3730 = vmatpush.bf16.msra.mxu0 %v3368
        %3731 = vmatpush.bf16.msra.mxu0 %v3367
        %3732 = vmatpush.bf16.msra.mxu0 %v3366
        %3733 = vmatpush.bf16.msra.mxu0 %v3365
        %3734 = vmatpush.bf16.msra.mxu0 %v3364
        %3735 = vmatpush.bf16.msra.mxu0 %v3363
        %3736 = vmatmul.bf16.gmra.mxu0 %v2319
        %v3737 = vpop.f32.mrf.mxu0
        %v3738 = vadd.f32 %v3725, %v3737
        %v3739 = vpop.f32.mrf.mxu0
        %3740 = vdwg.mxu0
        %3741 = vmatpush.bf16.msra.mxu0 %v3378
        %3742 = vmatpush.bf16.msra.mxu0 %v3377
        %3743 = vmatpush.bf16.msra.mxu0 %v3376
        %3744 = vmatpush.bf16.msra.mxu0 %v3375
        %3745 = vmatpush.bf16.msra.mxu0 %v3374
        %3746 = vmatpush.bf16.msra.mxu0 %v3373
        %3747 = vmatpush.bf16.msra.mxu0 %v3372
        %3748 = vmatpush.bf16.msra.mxu0 %v3371
        %3749 = vmatmul.bf16.gmra.mxu0 %v2320
        %v3750 = vpop.f32.mrf.mxu0
        %v3751 = vadd.f32 %v3738, %v3750
        %v3752 = vpop.f32.mrf.mxu0
        %3753 = vdwg.mxu0
        %3754 = vmatpush.bf16.msra.mxu0 %v3386
        %3755 = vmatpush.bf16.msra.mxu0 %v3385
        %3756 = vmatpush.bf16.msra.mxu0 %v3384
        %3757 = vmatpush.bf16.msra.mxu0 %v3383
        %3758 = vmatpush.bf16.msra.mxu0 %v3382
        %3759 = vmatpush.bf16.msra.mxu0 %v3381
        %3760 = vmatpush.bf16.msra.mxu0 %v3380
        %3761 = vmatpush.bf16.msra.mxu0 %v3379
        %3762 = vmatmul.bf16.gmra.mxu0 %v2321
        %v3763 = vpop.f32.mrf.mxu0
        %v3764 = vadd.f32 %v3751, %v3763
        %v3765 = vpop.f32.mrf.mxu0
        %3766 = vdwg.mxu0
        %3767 = vmatpush.bf16.msra.mxu0 %v3394
        %3768 = vmatpush.bf16.msra.mxu0 %v3393
        %3769 = vmatpush.bf16.msra.mxu0 %v3392
        %3770 = vmatpush.bf16.msra.mxu0 %v3391
        %3771 = vmatpush.bf16.msra.mxu0 %v3390
        %3772 = vmatpush.bf16.msra.mxu0 %v3389
        %3773 = vmatpush.bf16.msra.mxu0 %v3388
        %3774 = vmatpush.bf16.msra.mxu0 %v3387
        %3775 = vmatmul.bf16.gmra.mxu0 %v2322
        %v3776 = vpop.f32.mrf.mxu0
        %v3777 = vadd.f32 %v3764, %v3776
        %v3778 = vpop.f32.mrf.mxu0
        %3779 = vdwg.mxu0
        %3780 = vmatpush.bf16.msra.mxu0 %v3402
        %3781 = vmatpush.bf16.msra.mxu0 %v3401
        %3782 = vmatpush.bf16.msra.mxu0 %v3400
        %3783 = vmatpush.bf16.msra.mxu0 %v3399
        %3784 = vmatpush.bf16.msra.mxu0 %v3398
        %3785 = vmatpush.bf16.msra.mxu0 %v3397
        %3786 = vmatpush.bf16.msra.mxu0 %v3396
        %3787 = vmatpush.bf16.msra.mxu0 %v3395
        %3788 = vmatmul.bf16.gmra.mxu0 %v2323
        %v3789 = vpop.f32.mrf.mxu0
        %v3790 = vadd.f32 %v3777, %v3789
        %v3791 = vpop.f32.mrf.mxu0
        %3792 = vdwg.mxu0
        %3793 = vmatpush.bf16.msra.mxu0 %v3410
        %3794 = vmatpush.bf16.msra.mxu0 %v3409
        %3795 = vmatpush.bf16.msra.mxu0 %v3408
        %3796 = vmatpush.bf16.msra.mxu0 %v3407
        %3797 = vmatpush.bf16.msra.mxu0 %v3406
        %3798 = vmatpush.bf16.msra.mxu0 %v3405
        %3799 = vmatpush.bf16.msra.mxu0 %v3404
        %3800 = vmatpush.bf16.msra.mxu0 %v3403
        %3801 = vmatmul.bf16.gmra.mxu0 %v2324
        %v3802 = vpop.f32.mrf.mxu0
        %v3803 = vadd.f32 %v3790, %v3802
        %v3804 = vpop.f32.mrf.mxu0
        %3805 = vdwg.mxu0
        %3806 = vmatpush.bf16.msra.mxu0 %v3418
        %3807 = vmatpush.bf16.msra.mxu0 %v3417
        %3808 = vmatpush.bf16.msra.mxu0 %v3416
        %3809 = vmatpush.bf16.msra.mxu0 %v3415
        %3810 = vmatpush.bf16.msra.mxu0 %v3414
        %3811 = vmatpush.bf16.msra.mxu0 %v3413
        %3812 = vmatpush.bf16.msra.mxu0 %v3412
        %3813 = vmatpush.bf16.msra.mxu0 %v3411
        %3814 = vmatmul.bf16.gmra.mxu0 %v2325
        %v3815 = vpop.f32.mrf.mxu0
        %v3816 = vadd.f32 %v3803, %v3815
        %v3817 = vpop.f32.mrf.mxu0
        %3818 = vdwg.mxu0
        %3819 = vmatpush.bf16.msra.mxu0 %v3426
        %3820 = vmatpush.bf16.msra.mxu0 %v3425
        %3821 = vmatpush.bf16.msra.mxu0 %v3424
        %3822 = vmatpush.bf16.msra.mxu0 %v3423
        %3823 = vmatpush.bf16.msra.mxu0 %v3422
        %3824 = vmatpush.bf16.msra.mxu0 %v3421
        %3825 = vmatpush.bf16.msra.mxu0 %v3420
        %3826 = vmatpush.bf16.msra.mxu0 %v3419
        %3827 = vmatmul.bf16.gmra.mxu0 %v2326
        %v3828 = vpop.f32.mrf.mxu0
        %v3829 = vadd.f32 %v3816, %v3828
        %v3830 = vpop.f32.mrf.mxu0
        %3831 = vdwg.mxu0
        %3832 = vmatpush.bf16.msra.mxu0 %v3434
        %3833 = vmatpush.bf16.msra.mxu0 %v3433
        %3834 = vmatpush.bf16.msra.mxu0 %v3432
        %3835 = vmatpush.bf16.msra.mxu0 %v3431
        %3836 = vmatpush.bf16.msra.mxu0 %v3430
        %3837 = vmatpush.bf16.msra.mxu0 %v3429
        %3838 = vmatpush.bf16.msra.mxu0 %v3428
        %3839 = vmatpush.bf16.msra.mxu0 %v3427
        %3840 = vmatmul.bf16.gmra.mxu0 %v2327
        %v3841 = vpop.f32.mrf.mxu0
        %v3842 = vadd.f32 %v3829, %v3841
        %v3843 = vpop.f32.mrf.mxu0
        %3844 = vdwg.mxu0
        %3845 = vmatpush.bf16.msra.mxu0 %v3442
        %3846 = vmatpush.bf16.msra.mxu0 %v3441
        %3847 = vmatpush.bf16.msra.mxu0 %v3440
        %3848 = vmatpush.bf16.msra.mxu0 %v3439
        %3849 = vmatpush.bf16.msra.mxu0 %v3438
        %3850 = vmatpush.bf16.msra.mxu0 %v3437
        %3851 = vmatpush.bf16.msra.mxu0 %v3436
        %3852 = vmatpush.bf16.msra.mxu0 %v3435
        %3853 = vmatmul.bf16.gmra.mxu0 %v2328
        %v3854 = vpop.f32.mrf.mxu0
        %v3855 = vadd.f32 %v3842, %v3854
        %v3856 = vpop.f32.mrf.mxu0
        %3857 = vdwg.mxu0
        %3858 = vmatpush.bf16.msra.mxu0 %v3450
        %3859 = vmatpush.bf16.msra.mxu0 %v3449
        %3860 = vmatpush.bf16.msra.mxu0 %v3448
        %3861 = vmatpush.bf16.msra.mxu0 %v3447
        %3862 = vmatpush.bf16.msra.mxu0 %v3446
        %3863 = vmatpush.bf16.msra.mxu0 %v3445
        %3864 = vmatpush.bf16.msra.mxu0 %v3444
        %3865 = vmatpush.bf16.msra.mxu0 %v3443
        %3866 = vmatmul.bf16.gmra.mxu0 %v2329
        %v3867 = vpop.f32.mrf.mxu0
        %v3868 = vadd.f32 %v3855, %v3867
        %v3869 = vpop.f32.mrf.mxu0
        %3870 = vdwg.mxu0
        %v3871 = vmax.f32 %v3868, 0.0
        %v3872 = vpack.c.bf16 %v3871, %v3871
        %v3873 = vld [vmem:[%s8] sm:$0xf]
        %v3874 = vld [vmem:[%s8 + $0x4] sm:$0xf]
        %v3875 = vld [vmem:[%s8 + $0x8] sm:$0xf]
        %v3876 = vld [vmem:[%s8 + $0xc] sm:$0xf]
        %v3877 = vld [vmem:[%s8 + $0x10] sm:$0xf]
        %v3878 = vld [vmem:[%s8 + $0x14] sm:$0xf]
        %v3879 = vld [vmem:[%s8 + $0x18] sm:$0x1]
        %v3880 = vld [vmem:[%s9] sm:$0x1]
        %v3888 = vunpack.c.l.b16 %v3873
        %v3889 = vunpack.c.l.b16 %v3874
        %v3890 = vunpack.c.l.b16 %v3875
        %v3891 = vunpack.c.l.b16 %v3876
        %v3892 = vunpack.c.l.b16 %v3877
        %v3893 = vunpack.c.l.b16 %v3878
        %v3894 = vunpack.c.l.b16 %v3879
        %v3895 = vpack.c.b16 %v3889, %v3888
        %v3896 = vpack.c.b16 %v3891, %v3890
        %v3897 = vpack.c.b16 %v3893, %v3892
        %v3898 = vpack.c.b16 %v3894, %v3894
        %vm3902 = vcmask 408576
        %v3904 = vsel %vm3902, %v3872, 0
        %v3907 = vsel %vm905, %v3898, 0
        %3909 = vmatpush.bf16.msra.mxu0 0
        %3910 = vmatpush.bf16.msra.mxu0 0
        %3911 = vmatpush.bf16.msra.mxu0 0
        %3912 = vmatpush.bf16.msra.mxu0 0
        %3913 = vmatpush.bf16.msra.mxu0 %v3907
        %3914 = vmatpush.bf16.msra.mxu0 %v3897
        %3915 = vmatpush.bf16.msra.mxu0 %v3896
        %3916 = vmatpush.bf16.msra.mxu0 %v3895
        %3917 = vmatmul.bf16.gmra.mxu0 %v3904
        %v3918 = vpop.f32.mrf.mxu0
        %v3919 = vadd.f32 %v3880, %v3918
        %v3920 = vpop.f32.mrf.mxu0
        %3921 = vdwg.mxu0
        %vm3922 = vcmask 73728
        %v3923 = vsel %vm3922, %v3919, -inf
        %3924 = vmax.xlane.f32.xlu0 %v3923
        %v3925 = vpop.xlane.xlu0 %3924
        %v3926 = vsub.f32 %v3919, %v3925
        %v3927 = vmul.f32 %v3926, 1.442695
        %v3928 = vpow.pop %v3927
        %v3929 = vsel %vm3922, %v3928, 0.0
        %3930 = vadd.xlane.f32.xlu0 %v3929
        %v3931 = vpop.xlane.xlu0 %3930
        %v3932 = vrcp.pop %v3931
        %v3933 = vmul.f32 %v3931, %v3932
        %v3934 = vsub.f32 1.0, %v3933
        %v3935 = vmul.f32 %v3932, %v3934
        %v3936 = vadd.f32 %v3932, %v3935
        %vm3937 = vweird.f32 %v3931
        %vm3938 = vweird.f32 %v3932
        %vm3939 = vmor %vm3937, %vm3938
        %v3940 = vsel %vm3939, %v3932, %v3936
        %v3941 = vand.u32 2147483647, %v3931
        %vm3942 = vcmp.eq.f32.partialorder %v3941, 8.507059e+37
        %v3943 = vand.u32 %v3931, 2147483648
        %v3944 = vor.u32 1.1754944e-38, %v3943
        %v3945 = vsel %vm3942, %v3944, %v3940
        %v3946 = vmul.f32 %v3928, %v3945
        %3947 = vst.msk [vmem:[%s351] sm:$0x1] %vm3922, %v3946
        %s3948 = sand.u32 %s247, 1
        %s3949 = scalar_lea.sflag [#allocation3], %s3948
        %s3950 = sand.u32 %s247, 1
        %s3951 = scalar_lea.vmem [#allocation2], %s3950
        // Predicated region
        $region61: #{resnet_forward.1} parent=59 // pred_check
          %p3952 = pneg %p257
        $region62: #{resnet_forward.1} parent=59 // pred_check_branch
          %3954 = sbr.rel (%p3952) target = $region64
        $region63: #{resnet_forward.1} parent=59 // pred_region
          %3956 = vsyncadd %s3949, 0
          %s3957 = scalar_lea.hbm %s10, %s24
          %s3959 = sshll.u32 %s3951, 4
          %s3960 = int_to_ptr.vmem [resolvable:$true] %s3959
          %s3961 = sshll.u32 %s3957, 4
          %s3962 = int_to_ptr.hbm [resolvable:$true] %s3961
          %3964 = dma.vmem_to_hbm [thread:$0]  %s3960, 16, %s3962, %s3949
        $region64: #{resnet_forward.1} parent=59 // pred_fallthru
          _
      $region60: #{resnet_forward.1} parent=5 // pred_fallthru
        _
      %p3965 = scmp.le.s32.totalorder 2, %s19
      // Predicated region
      $region65: #{resnet_forward.1} parent=5 // pred_check
        %p3966 = pneg %p3965
      $region66: #{resnet_forward.1} parent=5 // pred_check_branch
        %3968 = sbr.rel (%p3966) target = $region68
      $region67: #{resnet_forward.1} parent=5 // pred_region
        %s3969 = ssub.s32 %s19, 2
        // Predicated region
        $region69: #{resnet_forward.1} parent=67 // pred_check
          %p3970 = pneg %p263
        $region70: #{resnet_forward.1} parent=67 // pred_check_branch
          %3972 = sbr.rel (%p3970) target = $region72
        $region71: #{resnet_forward.1} parent=67 // pred_region
          %s3973 = sand.u32 %s248, 1
          %s3974 = scalar_lea.sflag [#allocation3], %s3973
          %s3975 = sand.u32 %s248, 1
          %s3976 = scalar_lea.vmem [#allocation2], %s3975
          %3978 = dma.done %s3974, 16
        $region72: #{resnet_forward.1} parent=67 // pred_fallthru
          _
      $region68: #{resnet_forward.1} parent=5 // pred_fallthru
        _
    $region6: #{resnet_forward.1} parent=1 // loop_footer
      %s23 = sadd.s32 1, %s19
    $region7: #{resnet_forward.1} parent=1 // loop_footer_branch
      %18 = sbr.rel target = $region3
    $region8: #{resnet_forward.1} parent=1 // loop_exit
      _
    %3979 = vsyncpa [#allocation3], 1
    %s3980 = scalar_lea.sflag [#allocation3], 1
    %3981 = vsyncpa %s3980, 1

</llo_original>
